<compile_context>
chip_gen: v7x
topology: tpu7x:2x2x1
jax: 0.10.0
libtpu: 0.0.40
codegen_flags: <defaults>
</compile_context>

<pallas_src>
import functools

import jax
import jax.numpy as jnp
from jax.experimental import pallas as pl
from jax.experimental.pallas import tpu as pltpu


_BN_EPS = 1e-5
# conv layer hyperparams: (kernel, stride, padding)
_CONV_CFG = [(8, 4, 0), (4, 2, 0), (3, 1, 0), (3, 1, 1)]
_LANE = 128


def _round_up(x, m):
    return (x + m - 1) // m * m


# ----------------------------------------------------------------------------
# Generation-aware VMEM budget (v5e/v6e: 128 MiB physical, v7x: 64 MiB).
# ----------------------------------------------------------------------------
@functools.lru_cache(maxsize=None)
def _vmem_limit_bytes():
    cap = None
    try:
        info = pltpu.get_tpu_info()
        cap = getattr(info, "vmem_capacity_bytes", None)
    except Exception:
        cap = None
    if not cap:
        cap = 64 * 1024 * 1024            # conservative default (v7x-sized)
    # Leave ~25% headroom for compiler-internal scratch.
    return max(16 * 1024 * 1024, int(cap) * 3 // 4)


# ----------------------------------------------------------------------------
# Probe: can resident (constant index_map) operands be single-buffered via
# pipeline_mode=pl.Buffered(1)?  Probed once outside jit; graceful fallback.
# ----------------------------------------------------------------------------
_SINGLE_BUF = None


def _single_buffered_weights():
    global _SINGLE_BUF
    if _SINGLE_BUF is not None:
        return _SINGLE_BUF
    try:
        w_spec = pl.BlockSpec((8, 128), lambda i: (0, 0),
                              pipeline_mode=pl.Buffered(1))

        def _k(x_ref, o_ref):
            o_ref[...] = x_ref[...] + 1.0

        f = pl.pallas_call(
            _k,
            out_shape=jax.ShapeDtypeStruct((16, 128), jnp.float32),
            grid=(2,),
            in_specs=[w_spec],
            out_specs=pl.BlockSpec((8, 128), lambda i: (i, 0)))
        jax.jit(f).lower(jnp.zeros((8, 128), jnp.float32)).compile()
        _SINGLE_BUF = True
    except Exception:
        _SINGLE_BUF = False
    return _SINGLE_BUF


def _resident_spec(shape):
    """BlockSpec for a VMEM-resident operand (same block every grid step)."""
    if _single_buffered_weights():
        return pl.BlockSpec(shape, lambda i: (0, 0), pipeline_mode=pl.Buffered(1))
    return pl.BlockSpec(shape, lambda i: (0, 0))


# ----------------------------------------------------------------------------
# Pallas kernel: fused chain of matmuls, bias add and optional ReLU per layer.
#   h <- relu?( h @ W_i + b_i )   for i = 0..n_layers-1, on one M-tile of A.
# ----------------------------------------------------------------------------
def _make_chain_kernel(relu_flags):
    n_layers = len(relu_flags)

    def kernel(*refs):
        a_ref = refs[0]
        o_ref = refs[-1]
        h = a_ref[...]                                     # bf16 M-tile
        for li in range(n_layers):
            w_ref = refs[1 + 2 * li]
            b_ref = refs[2 + 2 * li]
            h = jnp.dot(h, w_ref[...],
                        preferred_element_type=jnp.float32) + b_ref[...]
            if relu_flags[li]:
                h = jnp.maximum(h, 0.0)
            if li + 1 < n_layers:
                # Next dot consumes bf16 anyway; halve the live activation.
                h = h.astype(jnp.bfloat16)
        o_ref[...] = h.astype(o_ref.dtype)

    return kernel


def _choose_tm(M, K, layers, budget, weight_bufs):
    """Largest power-of-two M tile (<=1024) whose per-step footprint — double
    buffered bf16 A tile, resident weights (1x or 2x buffered), widest f32+bf16
    intermediate activation, double buffered out tile — fits the generation
    derived VMEM budget.  If M fits in one tile, split into two even tiles
    (when possible) so the 'parallel' axis can shard across TCs on v7x."""
    n_max = max(w.shape[1] for w, _, _ in layers)
    n_out = layers[-1][0].shape[1]
    resident = weight_bufs * sum(
        w.size * w.dtype.itemsize + b.size * b.dtype.itemsize
        for w, b, _ in layers)
    per_row = 2 * K * 2 + n_max * (4 + 2) + 2 * n_out * 4
    cap = 1024
    while cap > 8 and resident + cap * per_row > budget:
        cap //= 2
    # NOTE: if the resident weights alone exceed the budget we proceed anyway
    # (they must live in VMEM regardless); vmem_limit_bytes has headroom.
    if M <= cap:
        if M >= 32 and M % 16 == 0:
            return max(16, M // 2)      # >=2 grid steps: use both TCs on v7x
        return M                        # full-extent block: always legal
    return cap


def fused_chain(a, layers, *, out_dtype):
    """out = chain of  h -> relu?(h @ W_i + b_i)  applied row-wise to `a`.

    a:      (M, K) bf16 activations.
    layers: list of (W (K_i, N_i) bf16, bias (1, N_i) f32, relu: bool); every
            N_i is a multiple of 128 so stores are lane-dense; weights stay
            resident in VMEM via constant index_maps (single-buffered when
            pipeline_mode=Buffered(1) is available).
    """
    a = a.astype(jnp.bfloat16)
    M, K = a.shape
    assert K == layers[0][0].shape[0], (K, layers[0][0].shape)
    for (w0, _, _), (w1, _, _) in zip(layers[:-1], layers[1:]):
        assert w0.shape[1] == w1.shape[0], (w0.shape, w1.shape)

    weight_bufs = 1 if _single_buffered_weights() else 2
    vmem_limit = _vmem_limit_bytes()
    budget = int(vmem_limit * 4 // 5)
    tm = _choose_tm(M, K, layers, budget, weight_bufs)
    n_out = layers[-1][0].shape[1]

    in_specs = [pl.BlockSpec((tm, K), lambda i: (i, 0))]
    args = [a]
    flops = 0
    bytes_accessed = (a.size * a.dtype.itemsize
                      + M * n_out * jnp.dtype(out_dtype).itemsize)
    for w, b, _ in layers:
        kin, nout = w.shape
        in_specs.append(_resident_spec((kin, nout)))
        in_specs.append(_resident_spec((1, nout)))
        args += [w, b]
        flops += 2 * M * kin * nout
        bytes_accessed += w.size * w.dtype.itemsize + b.size * b.dtype.itemsize

    return pl.pallas_call(
        _make_chain_kernel(tuple(r for _, _, r in layers)),
        out_shape=jax.ShapeDtypeStruct((M, n_out), out_dtype),
        grid=(pl.cdiv(M, tm),),
        in_specs=in_specs,
        out_specs=pl.BlockSpec((tm, n_out), lambda i: (i, 0)),
        compiler_params=pltpu.CompilerParams(
            dimension_semantics=("parallel",),     # M tiles shard across TCs
            vmem_limit_bytes=vmem_limit),
        cost_estimate=pl.CostEstimate(
            flops=flops, transcendentals=0, bytes_accessed=bytes_accessed),
    )(*args)


# ----------------------------------------------------------------------------
# Glue: im2col patch extraction (trace-time slice/stack plumbing, stays in JAX)
# ----------------------------------------------------------------------------
def im2col(x_nhwc, kh, kw, stride, pad):
    if pad > 0:
        x_nhwc = jnp.pad(x_nhwc, ((0, 0), (pad, pad), (pad, pad), (0, 0)))
    N, Hp, Wp, C = x_nhwc.shape
    oh = (Hp - kh) // stride + 1
    ow = (Wp - kw) // stride + 1
    if oh == 1 and ow == 1 and kh == Hp and kw == Wp:
        # Patch covers the whole plane: im2col is just a reshape (no slices).
        return x_nhwc.reshape(N, kh * kw * C), oh, ow
    patches = []
    for i in range(kh):
        for j in range(kw):
            patches.append(
                x_nhwc[:, i:i + stride * oh:stride, j:j + stride * ow:stride, :])
    p = jnp.stack(patches, axis=-2)               # (N, oh, ow, kh*kw, C)
    return p.reshape(N * oh * ow, kh * kw * C), oh, ow


# ----------------------------------------------------------------------------
# Deterministic parameter initialization (matches the nn.Module shapes)
# ----------------------------------------------------------------------------
def init_conv_block(key, oc, ic, k):
    k1, k2, k3, k4, k5, k6 = jax.random.split(key, 6)
    return dict(
        w=jax.random.normal(k1, (oc, ic, k, k), jnp.float32) * 0.05,
        b=jax.random.normal(k2, (oc,), jnp.float32) * 0.05,
        gamma=1.0 + 0.1 * jax.random.normal(k3, (oc,), jnp.float32),
        beta=0.1 * jax.random.normal(k4, (oc,), jnp.float32),
        mean=0.05 * jax.random.normal(k5, (oc,), jnp.float32),
        var=1.0 + 0.1 * jax.random.uniform(k6, (oc,), jnp.float32),
    )


def init_linear(key, out_f, in_f):
    k1, k2 = jax.random.split(key)
    return dict(
        w=jax.random.normal(k1, (out_f, in_f), jnp.float32) * 0.05,
        b=jax.random.normal(k2, (out_f,), jnp.float32) * 0.05,
    )


def init_dqn_params(key, in_channels, conv_out_size, n_actions):
    ks = jax.random.split(key, 7)
    conv = [
        init_conv_block(ks[0], 32, in_channels, 8),
        init_conv_block(ks[1], 64, 32, 4),
        init_conv_block(ks[2], 128, 64, 3),
        init_conv_block(ks[3], 128, 128, 3),
    ]
    fc = [
        init_linear(ks[4], 512, conv_out_size),
        init_linear(ks[5], 256, 512),
        init_linear(ks[6], n_actions, 256),
    ]
    return dict(conv=conv, fc=fc)


# ----------------------------------------------------------------------------
# One-time parameter prep (hoisted OFF the forward path):
#   fold BN / bias / (1/255) into (K, N)-layout bf16 weights, pad N to 128,
#   pad each layer's K rows to the previous layer's padded output width
#   (so lane-padded channels flow through with NO inter-layer slices), and
#   precompute conv4's center tap for the fused 1x1-spatial tail.
# ----------------------------------------------------------------------------
def prepare_params(params, n_actions):
    conv = []
    prev_oc_pad = None
    for idx, (p, (k, s, pad)) in enumerate(zip(params["conv"], _CONV_CFG)):
        oc, ic = p["w"].shape[0], p["w"].shape[1]
        bn_scale = p["gamma"] / jnp.sqrt(p["var"] + _BN_EPS)
        scale = bn_scale * ((1.0 / 255.0) if idx == 0 else 1.0)  # fold x/255
        bias = (p["b"] - p["mean"]) * bn_scale + p["beta"]
        w_hwio = jnp.transpose(p["w"], (2, 3, 1, 0))          # (k, k, ic, oc)
        if idx == 0:
            ic_pad = ic                                       # raw input, no pad
        else:
            assert ic <= prev_oc_pad
            ic_pad = prev_oc_pad                              # padded channels in
        w_hwio = jnp.pad(w_hwio, ((0, 0), (0, 0), (0, ic_pad - ic), (0, 0)))
        oc_pad = _round_up(oc, _LANE)
        w = w_hwio.reshape(k * k * ic_pad, oc) * scale[None, :]
        w = jnp.pad(w, ((0, 0), (0, oc_pad - oc))).astype(jnp.bfloat16)
        b = jnp.pad(bias, (0, oc_pad - oc)).reshape(1, oc_pad).astype(jnp.float32)
        conv.append(dict(w=w, b=b, oc=oc, oc_pad=oc_pad, k=k, s=s, pad=pad))
        prev_oc_pad = oc_pad

    # conv4 reduced to its center tap: exact when conv4's input spatial is 1x1,
    # because padding=1 makes every off-center tap hit zero padding.
    p4, (k4, _, _) = params["conv"][3], _CONV_CFG[3]
    oc4, ic4 = p4["w"].shape[0], p4["w"].shape[1]
    bn4 = p4["gamma"] / jnp.sqrt(p4["var"] + _BN_EPS)
    ic4_pad = conv[2]["oc_pad"]
    oc4_pad = conv[3]["oc_pad"]
    w4c = p4["w"][:, :, k4 // 2, k4 // 2].T * bn4[None, :]       # (ic4, oc4)
    w4c = jnp.pad(w4c, ((0, ic4_pad - ic4), (0, oc4_pad - oc4))).astype(jnp.bfloat16)
    b4c = jnp.pad((p4["b"] - p4["mean"]) * bn4 + p4["beta"],
                  (0, oc4_pad - oc4)).reshape(1, oc4_pad).astype(jnp.float32)

    fc = []
    for li, p in enumerate(params["fc"]):
        out_f, in_f = p["w"].shape
        n_pad = _round_up(out_f, _LANE)
        in_pad = in_f if li == 0 else _round_up(in_f, _LANE)
        w = jnp.pad(p["w"].T, ((0, in_pad - in_f), (0, n_pad - out_f))
                    ).astype(jnp.bfloat16)
        b = jnp.pad(p["b"], (0, n_pad - out_f)).reshape(1, n_pad).astype(jnp.float32)
        fc.append((w, b, li < 2))

    _single_buffered_weights()   # run the Buffered(1) probe outside any jit
    return dict(conv=conv, conv4_center=(w4c, b4c), fc=fc, n_actions=n_actions)


# ----------------------------------------------------------------------------
# Forward pass (Pallas): 3 pallas_calls total for the reference geometry.
# ----------------------------------------------------------------------------
def dqn_forward(x_nchw, prepped):
    batch = x_nchw.shape[0]
    # Keep the input narrow (uint8 -> bf16); /255 is folded into conv1 weights.
    x = jnp.transpose(x_nchw, (0, 2, 3, 1)).astype(jnp.bfloat16)     # NHWC

    # conv1, conv2: im2col + one fused matmul+bias+ReLU each.  Lane-padded
    # channels carried through (next layer's padded weight rows are zero), so
    # no channel slice / relayout between calls.
    for layer in prepped["conv"][:2]:
        A, oh, ow = im2col(x, layer["k"], layer["k"], layer["s"], layer["pad"])
        y = fused_chain(A, [(layer["w"], layer["b"], True)], out_dtype=jnp.bfloat16)
        x = y.reshape(batch, oh, ow, y.shape[-1])

    l3 = prepped["conv"][2]
    A3, oh3, ow3 = im2col(x, l3["k"], l3["k"], l3["s"], l3["pad"])
    w4c, b4c = prepped["conv4_center"]

    if (oh3 == 1 and ow3 == 1
            and prepped["fc"][0][0].shape[0] == w4c.shape[1]):
        # Spatial collapsed to 1x1: fuse conv3, conv4 (center tap), FC1, FC2,
        # FC3 into ONE pallas_call with all tail weights resident in VMEM.
        # (Dropout2d after conv4 and Dropout after FC1 are identity in eval.)
        layers = [(l3["w"], l3["b"], True), (w4c, b4c, True)] + prepped["fc"]
        out = fused_chain(A3, layers, out_dtype=jnp.float32)
    else:
        # General fallback: conv3 / conv4 per-layer, then the fused FC head.
        y3 = fused_chain(A3, [(l3["w"], l3["b"], True)], out_dtype=jnp.bfloat16)
        x = y3.reshape(batch, oh3, ow3, y3.shape[-1])
        l4 = prepped["conv"][3]
        A4, oh4, ow4 = im2col(x, l4["k"], l4["k"], l4["s"], l4["pad"])
        y4 = fused_chain(A4, [(l4["w"], l4["b"], True)], out_dtype=jnp.bfloat16)
        x = y4.reshape(batch, oh4, ow4, y4.shape[-1])[..., :l4["oc"]]
        h = jnp.transpose(x, (0, 3, 1, 2)).reshape(batch, -1)    # NCHW flatten
        out = fused_chain(h, prepped["fc"], out_dtype=jnp.float32)

    return out[:, :prepped["n_actions"]]


# ----------------------------------------------------------------------------
# Pure-JAX f32 reference (for correctness check)
# ----------------------------------------------------------------------------
def dqn_reference(x_nchw, params):
    x = jnp.transpose(x_nchw.astype(jnp.float32) / 255.0, (0, 2, 3, 1))
    for p, (k, s, pad) in zip(params["conv"], _CONV_CFG):
        w = jnp.transpose(p["w"], (2, 3, 1, 0))  # HWIO
        x = jax.lax.conv_general_dilated(
            x, w, (s, s), [(pad, pad), (pad, pad)],
            dimension_numbers=("NHWC", "HWIO", "NHWC"))
        x = x + p["b"]
        x = (x - p["mean"]) * (p["gamma"] / jnp.sqrt(p["var"] + _BN_EPS)) + p["beta"]
        x = jnp.maximum(x, 0.0)
    h = jnp.transpose(x, (0, 3, 1, 2)).reshape(x.shape[0], -1)
    for li, p in enumerate(params["fc"]):
        h = h @ p["w"].T + p["b"]
        if li < 2:
            h = jnp.maximum(h, 0.0)
    return h


if __name__ == "__main__":
    # Smallest spatial size that survives the conv stack:
    # 36x36 -> conv(8,s4)=8x8 -> conv(4,s2)=3x3 -> conv(3,s1)=1x1 -> conv(3,s1,p1)=1x1
    # conv_out_size = 128 * 1 * 1 = 128
    batch, in_ch, H, W = 2, 4, 36, 36
    n_actions = 6
    conv_out_size = 128

    key = jax.random.PRNGKey(0)
    x = jax.random.randint(key, (batch, in_ch, H, W), 0, 256,
                           dtype=jnp.int32).astype(jnp.uint8)
    params = init_dqn_params(jax.random.PRNGKey(1), in_ch, conv_out_size, n_actions)
    prepped = prepare_params(params, n_actions)

    fwd = jax.jit(lambda inp: dqn_forward(inp, prepped))
    out = jax.block_until_ready(fwd(x))
    assert out.shape == (batch, n_actions), out.shape

    ref = jax.block_until_ready(dqn_reference(x, params))
    # bf16 matmuls with f32 accumulation across 7 fused layers: loose tolerance.
    assert jnp.allclose(out, ref, rtol=5e-2, atol=5e-2), (out, ref)

    print("KERNEL_OK")
</pallas_src>

<mosaic_0001>
module attributes {stable_mosaic.version = 11 : i64} {
  func.func @kernel(%arg0: i32, %arg1: memref<64x256xbf16, #tpu.memory_space<vmem>>, %arg2: memref<256x128xbf16, #tpu.memory_space<vmem>>, %arg3: memref<1x128xf32, #tpu.memory_space<vmem>>, %arg4: memref<64x128xbf16, #tpu.memory_space<vmem>>) attributes {dimension_semantics = [#tpu.dimension_semantics<parallel>], iteration_bounds = array<i64: 2>, scalar_prefetch = 0 : i64, scratch_operands = 0 : i64, tpu.core_type = #tpu.core_type<tc>, window_params = [{transform_indices = @transform_0, window_bounds = array<i64: 64, 256>}, {pipeline_mode = #tpu.pipeline_mode<synchronous>, transform_indices = @transform_1, window_bounds = array<i64: 256, 128>}, {pipeline_mode = #tpu.pipeline_mode<synchronous>, transform_indices = @transform_2, window_bounds = array<i64: 1, 128>}, {transform_indices = @transform_3, window_bounds = array<i64: 64, 128>}]} {
    %c0 = arith.constant 0 : index
    %c0_0 = arith.constant 0 : index
    %0 = vector.load %arg1[%c0, %c0_0] : memref<64x256xbf16, #tpu.memory_space<vmem>>, vector<64x256xbf16>
    %c0_1 = arith.constant 0 : index
    %c0_2 = arith.constant 0 : index
    %1 = vector.load %arg2[%c0_1, %c0_2] : memref<256x128xbf16, #tpu.memory_space<vmem>>, vector<256x128xbf16>
    %cst = arith.constant dense<0.000000e+00> : vector<64x128xf32>
    %2 = tpu.matmul %0, %1, %cst {dimension_numbers = #tpu.dot_dimension_numbers<[1], [0], [0], [1], [0, 0, 1, 1], [], []>} : vector<64x256xbf16>, vector<256x128xbf16>, vector<64x128xf32> -> vector<64x128xf32>
    %c0_3 = arith.constant 0 : index
    %c0_4 = arith.constant 0 : index
    %3 = vector.load %arg3[%c0_3, %c0_4] : memref<1x128xf32, #tpu.memory_space<vmem>>, vector<1x128xf32>
    %4 = vector.broadcast %3 : vector<1x128xf32> to vector<64x128xf32>
    %5 = arith.addf %2, %4 : vector<64x128xf32>
    %cst_5 = arith.constant 0.000000e+00 : f32
    %6 = vector.broadcast %cst_5 : f32 to vector<64x128xf32>
    %7 = arith.maximumf %5, %6 : vector<64x128xf32>
    %8 = arith.truncf %7 : vector<64x128xf32> to vector<64x128xbf16>
    %c0_6 = arith.constant 0 : index
    %c0_7 = arith.constant 0 : index
    %9 = vector.load %arg4[%c0_6, %c0_7] : memref<64x128xbf16, #tpu.memory_space<vmem>>, vector<64x128xbf16>
    tpu.vector_store %arg4[%c0_6, %c0_7], %8 {strides = array<i32>} : memref<64x128xbf16, #tpu.memory_space<vmem>>, vector<64x128xbf16>,
    return
  }
  func.func @transform_0(%arg0: i32) -> (i32, i32) {
    %c0_i32 = arith.constant 0 : i32
    %c0_i32_0 = arith.constant 0 : i32
    return %arg0, %c0_i32 : i32, i32
  }
  func.func @transform_1(%arg0: i32) -> (i32, i32) {
    %c0_i32 = arith.constant 0 : i32
    %c0_i32_0 = arith.constant 0 : i32
    %c0_i32_1 = arith.constant 0 : i32
    return %c0_i32, %c0_i32_0 : i32, i32
  }
  func.func @transform_2(%arg0: i32) -> (i32, i32) {
    %c0_i32 = arith.constant 0 : i32
    %c0_i32_0 = arith.constant 0 : i32
    %c0_i32_1 = arith.constant 0 : i32
    return %c0_i32, %c0_i32_0 : i32, i32
  }
  func.func @transform_3(%arg0: i32) -> (i32, i32) {
    %c0_i32 = arith.constant 0 : i32
    %c0_i32_0 = arith.constant 0 : i32
    return %arg0, %c0_i32 : i32, i32
  }
}

module attributes {stable_mosaic.version = 11 : i64} {
  func.func @kernel(%arg0: i32, %arg1: memref<18x2048xbf16, #tpu.memory_space<vmem>>, %arg2: memref<2048x128xbf16, #tpu.memory_space<vmem>>, %arg3: memref<1x128xf32, #tpu.memory_space<vmem>>, %arg4: memref<18x128xbf16, #tpu.memory_space<vmem>>) attributes {dimension_semantics = [#tpu.dimension_semantics<parallel>], iteration_bounds = array<i64: 1>, scalar_prefetch = 0 : i64, scratch_operands = 0 : i64, tpu.core_type = #tpu.core_type<tc>, window_params = [{transform_indices = @transform_0, window_bounds = array<i64: 18, 2048>}, {pipeline_mode = #tpu.pipeline_mode<synchronous>, transform_indices = @transform_1, window_bounds = array<i64: 2048, 128>}, {pipeline_mode = #tpu.pipeline_mode<synchronous>, transform_indices = @transform_2, window_bounds = array<i64: 1, 128>}, {transform_indices = @transform_3, window_bounds = array<i64: 18, 128>}]} {
    %c0 = arith.constant 0 : index
    %c0_0 = arith.constant 0 : index
    %0 = vector.load %arg1[%c0, %c0_0] : memref<18x2048xbf16, #tpu.memory_space<vmem>>, vector<18x2048xbf16>
    %c0_1 = arith.constant 0 : index
    %c0_2 = arith.constant 0 : index
    %1 = vector.load %arg2[%c0_1, %c0_2] : memref<2048x128xbf16, #tpu.memory_space<vmem>>, vector<2048x128xbf16>
    %cst = arith.constant dense<0.000000e+00> : vector<18x128xf32>
    %2 = tpu.matmul %0, %1, %cst {dimension_numbers = #tpu.dot_dimension_numbers<[1], [0], [0], [1], [0, 0, 1, 1], [], []>} : vector<18x2048xbf16>, vector<2048x128xbf16>, vector<18x128xf32> -> vector<18x128xf32>
    %c0_3 = arith.constant 0 : index
    %c0_4 = arith.constant 0 : index
    %3 = vector.load %arg3[%c0_3, %c0_4] : memref<1x128xf32, #tpu.memory_space<vmem>>, vector<1x128xf32>
    %4 = vector.broadcast %3 : vector<1x128xf32> to vector<18x128xf32>
    %5 = arith.addf %2, %4 : vector<18x128xf32>
    %cst_5 = arith.constant 0.000000e+00 : f32
    %6 = vector.broadcast %cst_5 : f32 to vector<18x128xf32>
    %7 = arith.maximumf %5, %6 : vector<18x128xf32>
    %8 = arith.truncf %7 : vector<18x128xf32> to vector<18x128xbf16>
    %c0_6 = arith.constant 0 : index
    %c0_7 = arith.constant 0 : index
    %9 = vector.load %arg4[%c0_6, %c0_7] : memref<18x128xbf16, #tpu.memory_space<vmem>>, vector<18x128xbf16>
    tpu.vector_store %arg4[%c0_6, %c0_7], %8 {strides = array<i32>} : memref<18x128xbf16, #tpu.memory_space<vmem>>, vector<18x128xbf16>,
    return
  }
  func.func @transform_0(%arg0: i32) -> (i32, i32) {
    %c0_i32 = arith.constant 0 : i32
    %c0_i32_0 = arith.constant 0 : i32
    return %arg0, %c0_i32 : i32, i32
  }
  func.func @transform_1(%arg0: i32) -> (i32, i32) {
    %c0_i32 = arith.constant 0 : i32
    %c0_i32_0 = arith.constant 0 : i32
    %c0_i32_1 = arith.constant 0 : i32
    return %c0_i32, %c0_i32_0 : i32, i32
  }
  func.func @transform_2(%arg0: i32) -> (i32, i32) {
    %c0_i32 = arith.constant 0 : i32
    %c0_i32_0 = arith.constant 0 : i32
    %c0_i32_1 = arith.constant 0 : i32
    return %c0_i32, %c0_i32_0 : i32, i32
  }
  func.func @transform_3(%arg0: i32) -> (i32, i32) {
    %c0_i32 = arith.constant 0 : i32
    %c0_i32_0 = arith.constant 0 : i32
    return %arg0, %c0_i32 : i32, i32
  }
}

module attributes {stable_mosaic.version = 11 : i64} {
  func.func @kernel(%arg0: i32, %arg1: memref<2x1152xbf16, #tpu.memory_space<vmem>>, %arg2: memref<1152x128xbf16, #tpu.memory_space<vmem>>, %arg3: memref<1x128xf32, #tpu.memory_space<vmem>>, %arg4: memref<128x128xbf16, #tpu.memory_space<vmem>>, %arg5: memref<1x128xf32, #tpu.memory_space<vmem>>, %arg6: memref<128x512xbf16, #tpu.memory_space<vmem>>, %arg7: memref<1x512xf32, #tpu.memory_space<vmem>>, %arg8: memref<512x256xbf16, #tpu.memory_space<vmem>>, %arg9: memref<1x256xf32, #tpu.memory_space<vmem>>, %arg10: memref<256x128xbf16, #tpu.memory_space<vmem>>, %arg11: memref<1x128xf32, #tpu.memory_space<vmem>>, %arg12: memref<2x128xf32, #tpu.memory_space<vmem>>) attributes {dimension_semantics = [#tpu.dimension_semantics<parallel>], iteration_bounds = array<i64: 1>, scalar_prefetch = 0 : i64, scratch_operands = 0 : i64, tpu.core_type = #tpu.core_type<tc>, window_params = [{transform_indices = @transform_0, window_bounds = array<i64: 2, 1152>}, {pipeline_mode = #tpu.pipeline_mode<synchronous>, transform_indices = @transform_1, window_bounds = array<i64: 1152, 128>}, {pipeline_mode = #tpu.pipeline_mode<synchronous>, transform_indices = @transform_2, window_bounds = array<i64: 1, 128>}, {pipeline_mode = #tpu.pipeline_mode<synchronous>, transform_indices = @transform_3, window_bounds = array<i64: 128, 128>}, {pipeline_mode = #tpu.pipeline_mode<synchronous>, transform_indices = @transform_4, window_bounds = array<i64: 1, 128>}, {pipeline_mode = #tpu.pipeline_mode<synchronous>, transform_indices = @transform_5, window_bounds = array<i64: 128, 512>}, {pipeline_mode = #tpu.pipeline_mode<synchronous>, transform_indices = @transform_6, window_bounds = array<i64: 1, 512>}, {pipeline_mode = #tpu.pipeline_mode<synchronous>, transform_indices = @transform_7, window_bounds = array<i64: 512, 256>}, {pipeline_mode = #tpu.pipeline_mode<synchronous>, transform_indices = @transform_8, window_bounds = array<i64: 1, 256>}, {pipeline_mode = #tpu.pipeline_mode<synchronous>, transform_indices = @transform_9, window_bounds = array<i64: 256, 128>}, {pipeline_mode = #tpu.pipeline_mode<synchronous>, transform_indices = @transform_10, window_bounds = array<i64: 1, 128>}, {transform_indices = @transform_11, window_bounds = array<i64: 2, 128>}]} {
    %c0 = arith.constant 0 : index
    %c0_0 = arith.constant 0 : index
    %0 = vector.load %arg1[%c0, %c0_0] : memref<2x1152xbf16, #tpu.memory_space<vmem>>, vector<2x1152xbf16>
    %c0_1 = arith.constant 0 : index
    %c0_2 = arith.constant 0 : index
    %1 = vector.load %arg2[%c0_1, %c0_2] : memref<1152x128xbf16, #tpu.memory_space<vmem>>, vector<1152x128xbf16>
    %cst = arith.constant dense<0.000000e+00> : vector<2x128xf32>
    %2 = tpu.matmul %0, %1, %cst {dimension_numbers = #tpu.dot_dimension_numbers<[1], [0], [0], [1], [0, 0, 1, 1], [], []>} : vector<2x1152xbf16>, vector<1152x128xbf16>, vector<2x128xf32> -> vector<2x128xf32>
    %c0_3 = arith.constant 0 : index
    %c0_4 = arith.constant 0 : index
    %3 = vector.load %arg3[%c0_3, %c0_4] : memref<1x128xf32, #tpu.memory_space<vmem>>, vector<1x128xf32>
    %4 = vector.broadcast %3 : vector<1x128xf32> to vector<2x128xf32>
    %5 = arith.addf %2, %4 : vector<2x128xf32>
    %cst_5 = arith.constant 0.000000e+00 : f32
    %6 = vector.broadcast %cst_5 : f32 to vector<2x128xf32>
    %7 = arith.maximumf %5, %6 : vector<2x128xf32>
    %8 = arith.truncf %7 : vector<2x128xf32> to vector<2x128xbf16>
    %c0_6 = arith.constant 0 : index
    %c0_7 = arith.constant 0 : index
    %9 = vector.load %arg4[%c0_6, %c0_7] : memref<128x128xbf16, #tpu.memory_space<vmem>>, vector<128x128xbf16>
    %cst_8 = arith.constant dense<0.000000e+00> : vector<2x128xf32>
    %10 = tpu.matmul %8, %9, %cst_8 {dimension_numbers = #tpu.dot_dimension_numbers<[1], [0], [0], [1], [0, 0, 1, 1], [], []>} : vector<2x128xbf16>, vector<128x128xbf16>, vector<2x128xf32> -> vector<2x128xf32>
    %c0_9 = arith.constant 0 : index
    %c0_10 = arith.constant 0 : index
    %11 = vector.load %arg5[%c0_9, %c0_10] : memref<1x128xf32, #tpu.memory_space<vmem>>, vector<1x128xf32>
    %12 = vector.broadcast %11 : vector<1x128xf32> to vector<2x128xf32>
    %13 = arith.addf %10, %12 : vector<2x128xf32>
    %cst_11 = arith.constant 0.000000e+00 : f32
    %14 = vector.broadcast %cst_11 : f32 to vector<2x128xf32>
    %15 = arith.maximumf %13, %14 : vector<2x128xf32>
    %16 = arith.truncf %15 : vector<2x128xf32> to vector<2x128xbf16>
    %c0_12 = arith.constant 0 : index
    %c0_13 = arith.constant 0 : index
    %17 = vector.load %arg6[%c0_12, %c0_13] : memref<128x512xbf16, #tpu.memory_space<vmem>>, vector<128x512xbf16>
    %cst_14 = arith.constant dense<0.000000e+00> : vector<2x512xf32>
    %18 = tpu.matmul %16, %17, %cst_14 {dimension_numbers = #tpu.dot_dimension_numbers<[1], [0], [0], [1], [0, 0, 1, 1], [], []>} : vector<2x128xbf16>, vector<128x512xbf16>, vector<2x512xf32> -> vector<2x512xf32>
    %c0_15 = arith.constant 0 : index
    %c0_16 = arith.constant 0 : index
    %19 = vector.load %arg7[%c0_15, %c0_16] : memref<1x512xf32, #tpu.memory_space<vmem>>, vector<1x512xf32>
    %20 = vector.broadcast %19 : vector<1x512xf32> to vector<2x512xf32>
    %21 = arith.addf %18, %20 : vector<2x512xf32>
    %cst_17 = arith.constant 0.000000e+00 : f32
    %22 = vector.broadcast %cst_17 : f32 to vector<2x512xf32>
    %23 = arith.maximumf %21, %22 : vector<2x512xf32>
    %24 = arith.truncf %23 : vector<2x512xf32> to vector<2x512xbf16>
    %c0_18 = arith.constant 0 : index
    %c0_19 = arith.constant 0 : index
    %25 = vector.load %arg8[%c0_18, %c0_19] : memref<512x256xbf16, #tpu.memory_space<vmem>>, vector<512x256xbf16>
    %cst_20 = arith.constant dense<0.000000e+00> : vector<2x256xf32>
    %26 = tpu.matmul %24, %25, %cst_20 {dimension_numbers = #tpu.dot_dimension_numbers<[1], [0], [0], [1], [0, 0, 1, 1], [], []>} : vector<2x512xbf16>, vector<512x256xbf16>, vector<2x256xf32> -> vector<2x256xf32>
    %c0_21 = arith.constant 0 : index
    %c0_22 = arith.constant 0 : index
    %27 = vector.load %arg9[%c0_21, %c0_22] : memref<1x256xf32, #tpu.memory_space<vmem>>, vector<1x256xf32>
    %28 = vector.broadcast %27 : vector<1x256xf32> to vector<2x256xf32>
    %29 = arith.addf %26, %28 : vector<2x256xf32>
    %cst_23 = arith.constant 0.000000e+00 : f32
    %30 = vector.broadcast %cst_23 : f32 to vector<2x256xf32>
    %31 = arith.maximumf %29, %30 : vector<2x256xf32>
    %32 = arith.truncf %31 : vector<2x256xf32> to vector<2x256xbf16>
    %c0_24 = arith.constant 0 : index
    %c0_25 = arith.constant 0 : index
    %33 = vector.load %arg10[%c0_24, %c0_25] : memref<256x128xbf16, #tpu.memory_space<vmem>>, vector<256x128xbf16>
    %cst_26 = arith.constant dense<0.000000e+00> : vector<2x128xf32>
    %34 = tpu.matmul %32, %33, %cst_26 {dimension_numbers = #tpu.dot_dimension_numbers<[1], [0], [0], [1], [0, 0, 1, 1], [], []>} : vector<2x256xbf16>, vector<256x128xbf16>, vector<2x128xf32> -> vector<2x128xf32>
    %c0_27 = arith.constant 0 : index
    %c0_28 = arith.constant 0 : index
    %35 = vector.load %arg11[%c0_27, %c0_28] : memref<1x128xf32, #tpu.memory_space<vmem>>, vector<1x128xf32>
    %36 = vector.broadcast %35 : vector<1x128xf32> to vector<2x128xf32>
    %37 = arith.addf %34, %36 : vector<2x128xf32>
    %c0_29 = arith.constant 0 : index
    %c0_30 = arith.constant 0 : index
    %38 = vector.load %arg12[%c0_29, %c0_30] : memref<2x128xf32, #tpu.memory_space<vmem>>, vector<2x128xf32>
    tpu.vector_store %arg12[%c0_29, %c0_30], %37 {strides = array<i32>} : memref<2x128xf32, #tpu.memory_space<vmem>>, vector<2x128xf32>,
    return
  }
  func.func @transform_0(%arg0: i32) -> (i32, i32) {
    %c0_i32 = arith.constant 0 : i32
    %c0_i32_0 = arith.constant 0 : i32
    return %arg0, %c0_i32 : i32, i32
  }
  func.func @transform_1(%arg0: i32) -> (i32, i32) {
    %c0_i32 = arith.constant 0 : i32
    %c0_i32_0 = arith.constant 0 : i32
    %c0_i32_1 = arith.constant 0 : i32
    return %c0_i32, %c0_i32_0 : i32, i32
  }
  func.func @transform_2(%arg0: i32) -> (i32, i32) {
    %c0_i32 = arith.constant 0 : i32
    %c0_i32_0 = arith.constant 0 : i32
    %c0_i32_1 = arith.constant 0 : i32
    return %c0_i32, %c0_i32_0 : i32, i32
  }
  func.func @transform_3(%arg0: i32) -> (i32, i32) {
    %c0_i32 = arith.constant 0 : i32
    %c0_i32_0 = arith.constant 0 : i32
    %c0_i32_1 = arith.constant 0 : i32
    return %c0_i32, %c0_i32_0 : i32, i32
  }
  func.func @transform_4(%arg0: i32) -> (i32, i32) {
    %c0_i32 = arith.constant 0 : i32
    %c0_i32_0 = arith.constant 0 : i32
    %c0_i32_1 = arith.constant 0 : i32
    return %c0_i32, %c0_i32_0 : i32, i32
  }
  func.func @transform_5(%arg0: i32) -> (i32, i32) {
    %c0_i32 = arith.constant 0 : i32
    %c0_i32_0 = arith.constant 0 : i32
    %c0_i32_1 = arith.constant 0 : i32
    return %c0_i32, %c0_i32_0 : i32, i32
  }
  func.func @transform_6(%arg0: i32) -> (i32, i32) {
    %c0_i32 = arith.constant 0 : i32
    %c0_i32_0 = arith.constant 0 : i32
    %c0_i32_1 = arith.constant 0 : i32
    return %c0_i32, %c0_i32_0 : i32, i32
  }
  func.func @transform_7(%arg0: i32) -> (i32, i32) {
    %c0_i32 = arith.constant 0 : i32
    %c0_i32_0 = arith.constant 0 : i32
    %c0_i32_1 = arith.constant 0 : i32
    return %c0_i32, %c0_i32_0 : i32, i32
  }
  func.func @transform_8(%arg0: i32) -> (i32, i32) {
    %c0_i32 = arith.constant 0 : i32
    %c0_i32_0 = arith.constant 0 : i32
    %c0_i32_1 = arith.constant 0 : i32
    return %c0_i32, %c0_i32_0 : i32, i32
  }
  func.func @transform_9(%arg0: i32) -> (i32, i32) {
    %c0_i32 = arith.constant 0 : i32
    %c0_i32_0 = arith.constant 0 : i32
    %c0_i32_1 = arith.constant 0 : i32
    return %c0_i32, %c0_i32_0 : i32, i32
  }
  func.func @transform_10(%arg0: i32) -> (i32, i32) {
    %c0_i32 = arith.constant 0 : i32
    %c0_i32_0 = arith.constant 0 : i32
    %c0_i32_1 = arith.constant 0 : i32
    return %c0_i32, %c0_i32_0 : i32, i32
  }
  func.func @transform_11(%arg0: i32) -> (i32, i32) {
    %c0_i32 = arith.constant 0 : i32
    %c0_i32_0 = arith.constant 0 : i32
    return %arg0, %c0_i32 : i32, i32
  }
}

</mosaic_0001>

<llo_original>
// kernel: _lambda_.3
$region0: #{_lambda_.3}
  #allocation0 [shape = 'u32[]', space=smem, size = 0x4, offset = 0x4, fixed_abs, tag = 'smem constant byte address 0x4 - core index']
  #allocation1 [shape = 'u32[144,128]{1,0:T(1,128)}', space=vmem, size = 0x12000, scoped, tag = 'internal scratch']
  %s0 = inlined_call_operand.vmem [shape: bf16[128,256], index: 0, kind: input, shape index: {}]
  %s1 = inlined_call_operand.vmem [shape: bf16[256,128], index: 1, kind: input, shape index: {}]
  %s2 = inlined_call_operand.vmem [shape: f32[1,128], index: 2, kind: input, shape index: {}]
  %s3 = inlined_call_operand.vmem [shape: bf16[128,128], index: 3, kind: output, shape index: {}]
  %s4 = sld [smem:[#allocation0]]
  $region45: #{_lambda_.3} parent=0
    _
  %s6 = ssub.s32 1, %s4
  %s7 = scalar_select 0, %s6, %s4
  loop: start=0, step=1, limit=4
  $region2: #{_lambda_.3} parent=0 // loop_pre_header
    _
  $region3: #{_lambda_.3} parent=0 // loop_header
    %s9 = sphi 0, %s13
    %p10 = scmp.ge.s32.totalorder %s9, 4
    %s19 = sphi 0, %s21
    %s22 = sphi 0, %s19
    %s23 = sphi 0, %s22
    %s39 = sphi 0, %s23
    %s43 = sphi 0, %s43
    %s45 = sphi 0, %s43
    %s46 = sphi 0, %s45
    %s60 = sphi 0, %s46
    %s64 = sphi 0, %s64
    %s66 = sphi 0, %s64
    %s67 = sphi 0, %s66
    %s81 = sphi 0, %s67
    %s87 = sphi 0, %s89
    %s90 = sphi 0, %s87
    %s91 = sphi 0, %s90
    %s107 = sphi 0, %s91
  $region4: #{_lambda_.3} parent=0 // loop_header_branch
    %12 = sbr.rel (%p10) target = $region8
  $region5: #{_lambda_.3} parent=0 // loop_body
    %s14 = ssub.s32 %s9, 1
    %s15 = ssub.s32 %s9, 2
    %s16 = sadd.s32 %s9, 1
    %s17 = ssub.s32 %s9, %s16
    %p18 = scmp.eq.s32.totalorder %s17, 0
    %s20 = sadd.s32 %s19, 1
    %s21 = scalar_select %p18, %s19, %s20
    %p24 = pneg %p18
    %p25 = scmp.eq.s32.totalorder %s9, 1
    %p26 = por %p24, %p25
    %p27 = scmp.ne.s32.totalorder %s19, %s22
    %p28 = scmp.eq.s32.totalorder %s9, 0
    %p29 = por %p27, %p28
    %p30 = scmp.ne.s32.totalorder %s19, %s22
    %p31 = scmp.eq.s32.totalorder %s14, 1
    %p32 = por %p30, %p31
    %p33 = scmp.ne.s32.totalorder %s22, %s23
    %p34 = scmp.eq.s32.totalorder %s14, 0
    %p35 = por %p33, %p34
    %p36 = scmp.ne.s32.totalorder %s22, %s23
    %p37 = scmp.eq.s32.totalorder %s15, 1
    %p38 = por %p36, %p37
    %p40 = scmp.ne.s32.totalorder %s23, %s39
    %p41 = scmp.eq.s32.totalorder %s15, 0
    %p42 = por %p40, %p41
    %s44 = sadd.s32 %s43, 1
    %p47 = scmp.eq.s32.totalorder %s9, 1
    %p48 = scmp.ne.s32.totalorder %s43, %s45
    %p49 = scmp.eq.s32.totalorder %s9, 0
    %p50 = por %p48, %p49
    %p51 = scmp.ne.s32.totalorder %s43, %s45
    %p52 = scmp.eq.s32.totalorder %s14, 1
    %p53 = por %p51, %p52
    %p54 = scmp.ne.s32.totalorder %s45, %s46
    %p55 = scmp.eq.s32.totalorder %s14, 0
    %p56 = por %p54, %p55
    %p57 = scmp.ne.s32.totalorder %s45, %s46
    %p58 = scmp.eq.s32.totalorder %s15, 1
    %p59 = por %p57, %p58
    %p61 = scmp.ne.s32.totalorder %s46, %s60
    %p62 = scmp.eq.s32.totalorder %s15, 0
    %p63 = por %p61, %p62
    %s65 = sadd.s32 %s64, 1
    %p68 = scmp.eq.s32.totalorder %s9, 1
    %p69 = scmp.ne.s32.totalorder %s64, %s66
    %p70 = scmp.eq.s32.totalorder %s9, 0
    %p71 = por %p69, %p70
    %p72 = scmp.ne.s32.totalorder %s64, %s66
    %p73 = scmp.eq.s32.totalorder %s14, 1
    %p74 = por %p72, %p73
    %p75 = scmp.ne.s32.totalorder %s66, %s67
    %p76 = scmp.eq.s32.totalorder %s14, 0
    %p77 = por %p75, %p76
    %p78 = scmp.ne.s32.totalorder %s66, %s67
    %p79 = scmp.eq.s32.totalorder %s15, 1
    %p80 = por %p78, %p79
    %p82 = scmp.ne.s32.totalorder %s67, %s81
    %p83 = scmp.eq.s32.totalorder %s15, 0
    %p84 = por %p82, %p83
    %s85 = ssub.s32 %s9, %s16
    %p86 = scmp.eq.s32.totalorder %s85, 0
    %s88 = sadd.s32 %s87, 1
    %s89 = scalar_select %p86, %s87, %s88
    %p92 = pneg %p86
    %p93 = scmp.eq.s32.totalorder %s9, 1
    %p94 = por %p92, %p93
    %p95 = scmp.ne.s32.totalorder %s87, %s90
    %p96 = scmp.eq.s32.totalorder %s9, 0
    %p97 = por %p95, %p96
    %p98 = scmp.ne.s32.totalorder %s87, %s90
    %p99 = scmp.eq.s32.totalorder %s14, 1
    %p100 = por %p98, %p99
    %p101 = scmp.ne.s32.totalorder %s90, %s91
    %p102 = scmp.eq.s32.totalorder %s14, 0
    %p103 = por %p101, %p102
    %p104 = scmp.ne.s32.totalorder %s90, %s91
    %p105 = scmp.eq.s32.totalorder %s15, 1
    %p106 = por %p104, %p105
    %p108 = scmp.ne.s32.totalorder %s91, %s107
    %p109 = scmp.eq.s32.totalorder %s15, 0
    %p110 = por %p108, %p109
    %p111 = scmp.le.s32.totalorder 1, %s9
    %p112 = scmp.lt.s32.totalorder %s9, 3
    %p113 = pnand %p111, %p112
    %p114 = pneg %p113
    // Predicated region
    $region9: #{_lambda_.3} parent=5 // pred_check
      _
    $region10: #{_lambda_.3} parent=5 // pred_check_branch
      %116 = sbr.rel (%p113) target = $region12
    $region11: #{_lambda_.3} parent=5 // pred_region
      %s117 = ssub.s32 %s9, 1
      // Predicated region
      $region13: #{_lambda_.3} parent=11 // pred_check
        %p118 = pneg %p56
      $region14: #{_lambda_.3} parent=11 // pred_check_branch
        %120 = sbr.rel (%p118) target = $region16
      $region15: #{_lambda_.3} parent=11 // pred_region
        _
      $region16: #{_lambda_.3} parent=11 // pred_fallthru
        _
      // Predicated region
      $region17: #{_lambda_.3} parent=11 // pred_check
        %p121 = pneg %p77
      $region18: #{_lambda_.3} parent=11 // pred_check_branch
        %123 = sbr.rel (%p121) target = $region20
      $region19: #{_lambda_.3} parent=11 // pred_region
        _
      $region20: #{_lambda_.3} parent=11 // pred_fallthru
        _
    $region12: #{_lambda_.3} parent=5 // pred_fallthru
      _
    %p124 = scmp.lt.s32.totalorder %s9, 2
    // Predicated region
    $region21: #{_lambda_.3} parent=5 // pred_check
      %p125 = pneg %p124
    $region22: #{_lambda_.3} parent=5 // pred_check_branch
      %127 = sbr.rel (%p125) target = $region24
    $region23: #{_lambda_.3} parent=5 // pred_region
      // Predicated region
      $region25: #{_lambda_.3} parent=23 // pred_check
        %p128 = pneg %p29
      $region26: #{_lambda_.3} parent=23 // pred_check_branch
        %130 = sbr.rel (%p128) target = $region28
      $region27: #{_lambda_.3} parent=23 // pred_region
        %s131 = smul.u32 8, %s9
        %p132 = scmp.lt.s32.totalorder %s131, 15
        %s133 = scalar_select %p132, %s131, 15
        %s134 = smul.addr %s133, 2
        %s135 = smul.addr %s134, 4
        %s136 = scalar_lea.vmem %s0, %s135
        %s137 = smul.u32 8, %s9
      $region28: #{_lambda_.3} parent=23 // pred_fallthru
        _
    $region24: #{_lambda_.3} parent=5 // pred_fallthru
      _
    %p138 = scmp.le.s32.totalorder 1, %s9
    %p139 = scmp.lt.s32.totalorder %s9, 3
    %p140 = pnand %p138, %p139
    %p141 = pneg %p140
    // Predicated region
    $region29: #{_lambda_.3} parent=5 // pred_check
      _
    $region30: #{_lambda_.3} parent=5 // pred_check_branch
      %143 = sbr.rel (%p140) target = $region32
    $region31: #{_lambda_.3} parent=5 // pred_region
      %s144 = ssub.s32 %s9, 1
      %s145 = smul.u32 8, %s14
      %p146 = scmp.lt.s32.totalorder %s145, 15
      %s147 = scalar_select %p146, %s145, 15
      %s148 = smul.addr %s147, 2
      %s149 = smul.addr %s148, 4
      %s150 = scalar_lea.vmem %s0, %s149
      %p151 = pneg %p35
      %p152 = pneg %p32
      %p153 = pneg %p56
      %p154 = pneg %p53
      %p155 = pneg %p77
      %p156 = pneg %p74
      %p157 = pneg %p103
      %p158 = pneg %p100
      %s159 = smul.u32 8, %s14
      %p160 = scmp.lt.s32.totalorder %s159, 15
      %s161 = scalar_select %p160, %s159, 15
      %s162 = smul.addr %s161, 4
      %s163 = scalar_lea.vmem %s3, %s162
      %s164 = smul.u32 8, %s14
      %p165 = scmp.lt.s32.totalorder %s164, 15
      %s166 = scalar_select %p165, %s164, 15
      %s167 = smul.addr %s166, 2
      %s168 = smul.addr %s167, 4
      %s169 = scalar_lea.vmem %s0, %s168
      %s170 = smul.u32 8, %s14
      %s171 = smul.u32 8, %s14
      %p172 = scmp.lt.s32.totalorder %s171, 15
      %s173 = scalar_select %p172, %s171, 15
      %s174 = smul.addr %s173, 4
      %s175 = scalar_lea.vmem %s3, %s174
      %s176 = smul.u32 8, %s14
      %v178 = vld [vmem:[%s169] sm:$0xff]
      %v179 = vld [vmem:[%s169 + $0x8] sm:$0xff]
      %v180 = vld [vmem:[%s169 + $0x10] sm:$0xff]
      %v181 = vld [vmem:[%s169 + $0x18] sm:$0xff]
      %v182 = vld [vmem:[%s169 + $0x20] sm:$0xff]
      %v183 = vld [vmem:[%s169 + $0x28] sm:$0xff]
      %v184 = vld [vmem:[%s169 + $0x30] sm:$0xff]
      %v185 = vld [vmem:[%s169 + $0x38] sm:$0xff]
      %v186 = vld [vmem:[%s1] sm:$0xf]
      %v187 = vld [vmem:[%s1 + $0x4] sm:$0xf]
      %v188 = vld [vmem:[%s1 + $0x8] sm:$0xf]
      %v189 = vld [vmem:[%s1 + $0xc] sm:$0xf]
      %v190 = vld [vmem:[%s1 + $0x10] sm:$0xf]
      %v191 = vld [vmem:[%s1 + $0x14] sm:$0xf]
      %v192 = vld [vmem:[%s1 + $0x18] sm:$0xf]
      %v193 = vld [vmem:[%s1 + $0x1c] sm:$0xf]
      %v194 = vld [vmem:[%s1 + $0x20] sm:$0xf]
      %v195 = vld [vmem:[%s1 + $0x24] sm:$0xf]
      %v196 = vld [vmem:[%s1 + $0x28] sm:$0xf]
      %v197 = vld [vmem:[%s1 + $0x2c] sm:$0xf]
      %v198 = vld [vmem:[%s1 + $0x30] sm:$0xf]
      %v199 = vld [vmem:[%s1 + $0x34] sm:$0xf]
      %v200 = vld [vmem:[%s1 + $0x38] sm:$0xf]
      %v201 = vld [vmem:[%s1 + $0x3c] sm:$0xf]
      %v202 = vld [vmem:[%s1 + $0x40] sm:$0xf]
      %v203 = vld [vmem:[%s1 + $0x44] sm:$0xf]
      %v204 = vld [vmem:[%s1 + $0x48] sm:$0xf]
      %v205 = vld [vmem:[%s1 + $0x4c] sm:$0xf]
      %v206 = vld [vmem:[%s1 + $0x50] sm:$0xf]
      %v207 = vld [vmem:[%s1 + $0x54] sm:$0xf]
      %v208 = vld [vmem:[%s1 + $0x58] sm:$0xf]
      %v209 = vld [vmem:[%s1 + $0x5c] sm:$0xf]
      %v210 = vld [vmem:[%s1 + $0x60] sm:$0xf]
      %v211 = vld [vmem:[%s1 + $0x64] sm:$0xf]
      %v212 = vld [vmem:[%s1 + $0x68] sm:$0xf]
      %v213 = vld [vmem:[%s1 + $0x6c] sm:$0xf]
      %v214 = vld [vmem:[%s1 + $0x70] sm:$0xf]
      %v215 = vld [vmem:[%s1 + $0x74] sm:$0xf]
      %v216 = vld [vmem:[%s1 + $0x78] sm:$0xf]
      %v217 = vld [vmem:[%s1 + $0x7c] sm:$0xf]
      %v218 = vld [vmem:[%s2] sm:$0x1]
      %v220 = vlaneseq
      %v221 = vshrl.u32 %v220, 7
      %v222 = vsub.s32 0, %v221
      %v223 = vrot.slane %v218, %v222
      %v233 = vunpack.c.l.b16 %v178
      %v234 = vunpack.c.h.b16 %v178
      %v235 = vunpack.c.l.b16 %v179
      %v236 = vunpack.c.h.b16 %v179
      %v237 = vunpack.c.l.b16 %v180
      %v238 = vunpack.c.h.b16 %v180
      %v239 = vunpack.c.l.b16 %v181
      %v240 = vunpack.c.h.b16 %v181
      %v241 = vunpack.c.l.b16 %v182
      %v242 = vunpack.c.h.b16 %v182
      %v243 = vunpack.c.l.b16 %v183
      %v244 = vunpack.c.h.b16 %v183
      %v245 = vunpack.c.l.b16 %v184
      %v246 = vunpack.c.h.b16 %v184
      %v247 = vunpack.c.l.b16 %v185
      %v248 = vunpack.c.h.b16 %v185
      %v249 = vpack.c.b16 %v235, %v233
      %v250 = vpack.c.b16 %v236, %v234
      %v251 = vpack.c.b16 %v239, %v237
      %v252 = vpack.c.b16 %v240, %v238
      %v253 = vpack.c.b16 %v243, %v241
      %v254 = vpack.c.b16 %v244, %v242
      %v255 = vpack.c.b16 %v247, %v245
      %v256 = vpack.c.b16 %v248, %v246
      %v297 = vunpack.c.l.b16 %v186
      %v298 = vunpack.c.l.b16 %v187
      %v299 = vunpack.c.l.b16 %v188
      %v300 = vunpack.c.l.b16 %v189
      %v301 = vunpack.c.l.b16 %v190
      %v302 = vunpack.c.l.b16 %v191
      %v303 = vunpack.c.l.b16 %v192
      %v304 = vunpack.c.l.b16 %v193
      %v305 = vunpack.c.l.b16 %v194
      %v306 = vunpack.c.l.b16 %v195
      %v307 = vunpack.c.l.b16 %v196
      %v308 = vunpack.c.l.b16 %v197
      %v309 = vunpack.c.l.b16 %v198
      %v310 = vunpack.c.l.b16 %v199
      %v311 = vunpack.c.l.b16 %v200
      %v312 = vunpack.c.l.b16 %v201
      %v313 = vunpack.c.l.b16 %v202
      %v314 = vunpack.c.l.b16 %v203
      %v315 = vunpack.c.l.b16 %v204
      %v316 = vunpack.c.l.b16 %v205
      %v317 = vunpack.c.l.b16 %v206
      %v318 = vunpack.c.l.b16 %v207
      %v319 = vunpack.c.l.b16 %v208
      %v320 = vunpack.c.l.b16 %v209
      %v321 = vunpack.c.l.b16 %v210
      %v322 = vunpack.c.l.b16 %v211
      %v323 = vunpack.c.l.b16 %v212
      %v324 = vunpack.c.l.b16 %v213
      %v325 = vunpack.c.l.b16 %v214
      %v326 = vunpack.c.l.b16 %v215
      %v327 = vunpack.c.l.b16 %v216
      %v328 = vunpack.c.l.b16 %v217
      %v329 = vpack.c.b16 %v298, %v297
      %v330 = vpack.c.b16 %v300, %v299
      %v331 = vpack.c.b16 %v302, %v301
      %v332 = vpack.c.b16 %v304, %v303
      %v333 = vpack.c.b16 %v306, %v305
      %v334 = vpack.c.b16 %v308, %v307
      %v335 = vpack.c.b16 %v310, %v309
      %v336 = vpack.c.b16 %v312, %v311
      %v337 = vpack.c.b16 %v314, %v313
      %v338 = vpack.c.b16 %v316, %v315
      %v339 = vpack.c.b16 %v318, %v317
      %v340 = vpack.c.b16 %v320, %v319
      %v341 = vpack.c.b16 %v322, %v321
      %v342 = vpack.c.b16 %v324, %v323
      %v343 = vpack.c.b16 %v326, %v325
      %v344 = vpack.c.b16 %v328, %v327
      %361 = vmatprep.subr.bf16.mxu0 0
      %362 = vmatpush1.bf16.msra.mxu0 %v329
      %363 = vmatprep.subr.bf16.mxu0 0
      %364 = vmatpush1.bf16.msra.mxu0 %v330
      %365 = vmatprep.subr.bf16.mxu0 0
      %366 = vmatpush1.bf16.msra.mxu0 %v331
      %367 = vmatprep.subr.bf16.mxu0 0
      %368 = vmatpush1.bf16.msra.mxu0 %v332
      %369 = vmatprep.subr.bf16.mxu0 0
      %370 = vmatpush1.bf16.msra.mxu0 %v333
      %371 = vmatprep.subr.bf16.mxu0 0
      %372 = vmatpush1.bf16.msra.mxu0 %v334
      %373 = vmatprep.subr.bf16.mxu0 0
      %374 = vmatpush1.bf16.msra.mxu0 %v335
      %375 = vmatprep.subr.bf16.mxu0 0
      %376 = vmatpush1.bf16.msra.mxu0 %v336
      %377 = vmatprep.subr.bf16.mxu0 0
      %378 = vmatpush1.bf16.msra.mxu0 %v337
      %379 = vmatprep.subr.bf16.mxu0 0
      %380 = vmatpush1.bf16.msra.mxu0 %v338
      %381 = vmatprep.subr.bf16.mxu0 0
      %382 = vmatpush1.bf16.msra.mxu0 %v339
      %383 = vmatprep.subr.bf16.mxu0 0
      %384 = vmatpush1.bf16.msra.mxu0 %v340
      %385 = vmatprep.subr.bf16.mxu0 0
      %386 = vmatpush1.bf16.msra.mxu0 %v341
      %387 = vmatprep.subr.bf16.mxu0 0
      %388 = vmatpush1.bf16.msra.mxu0 %v342
      %389 = vmatprep.subr.bf16.mxu0 0
      %390 = vmatpush1.bf16.msra.mxu0 %v343
      %391 = vmatprep.subr.bf16.mxu0 0
      %392 = vmatpush1.bf16.msra.mxu0 %v344
      %393 = vmatprep.mubr.bf16.mxu0 %v250
      %394 = vmatmul.mubr.bf16.gmra.mrb[0].mxu0 %v249
      %v395 = vpop.f32.mrb[0].mxu0
      %v396 = vadd.f32 %v223, %v395
      %v397 = vpop.f32.mrb[0].mxu0
      %v398 = vpop.f32.mrb[0].mxu0
      %v399 = vadd.f32 %v223, %v398
      %v400 = vpop.f32.mrb[0].mxu0
      %401 = vmatprep.mubr.bf16.mxu0 %v252
      %402 = vmatmul.mubr.bf16.gmra.mrb[0].mxu0 %v251
      %v403 = vpop.f32.mrb[0].mxu0
      %v404 = vadd.f32 %v223, %v403
      %v405 = vpop.f32.mrb[0].mxu0
      %v406 = vpop.f32.mrb[0].mxu0
      %v407 = vadd.f32 %v223, %v406
      %v408 = vpop.f32.mrb[0].mxu0
      %409 = vmatprep.mubr.bf16.mxu0 %v254
      %410 = vmatmul.mubr.bf16.gmra.mrb[0].mxu0 %v253
      %v411 = vpop.f32.mrb[0].mxu0
      %v412 = vadd.f32 %v223, %v411
      %v413 = vpop.f32.mrb[0].mxu0
      %v414 = vpop.f32.mrb[0].mxu0
      %v415 = vadd.f32 %v223, %v414
      %v416 = vpop.f32.mrb[0].mxu0
      %417 = vmatprep.mubr.bf16.mxu0 %v256
      %418 = vmatmul.mubr.bf16.gmra.mrb[0].mxu0 %v255
      %v419 = vpop.f32.mrb[0].mxu0
      %v420 = vadd.f32 %v223, %v419
      %v421 = vpop.f32.mrb[0].mxu0
      %v422 = vpop.f32.mrb[0].mxu0
      %v423 = vadd.f32 %v223, %v422
      %v424 = vpop.f32.mrb[0].mxu0
      %425 = vdwg.mxu0
      %v426 = vmax.f32 %v396, 0.0
      %v427 = vmax.f32 %v399, 0.0
      %v428 = vmax.f32 %v404, 0.0
      %v429 = vmax.f32 %v407, 0.0
      %v430 = vmax.f32 %v412, 0.0
      %v431 = vmax.f32 %v415, 0.0
      %v432 = vmax.f32 %v420, 0.0
      %v433 = vmax.f32 %v423, 0.0
      %v434 = vpack.c.bf16 %v427, %v426
      %v435 = vpack.c.bf16 %v429, %v428
      %v436 = vpack.c.bf16 %v431, %v430
      %v437 = vpack.c.bf16 %v433, %v432
      %v442 = vunpack.c.l.b16 %v434
      %v443 = vunpack.c.h.b16 %v434
      %v444 = vunpack.c.l.b16 %v435
      %v445 = vunpack.c.h.b16 %v435
      %v446 = vunpack.c.l.b16 %v436
      %v447 = vunpack.c.h.b16 %v436
      %v448 = vunpack.c.l.b16 %v437
      %v449 = vunpack.c.h.b16 %v437
      %v450 = vpack.c.b16 %v442, %v442
      %v451 = vpack.c.b16 %v443, %v443
      %v452 = vpack.c.b16 %v444, %v444
      %v453 = vpack.c.b16 %v445, %v445
      %v454 = vpack.c.b16 %v446, %v446
      %v455 = vpack.c.b16 %v447, %v447
      %v456 = vpack.c.b16 %v448, %v448
      %v457 = vpack.c.b16 %v449, %v449
      %466 = vst [vmem:[%s175] sm:$0xf] %v450
      %467 = vst [vmem:[%s175 + $0x4] sm:$0xf] %v451
      %468 = vst [vmem:[%s175 + $0x8] sm:$0xf] %v452
      %469 = vst [vmem:[%s175 + $0xc] sm:$0xf] %v453
      %470 = vst [vmem:[%s175 + $0x10] sm:$0xf] %v454
      %471 = vst [vmem:[%s175 + $0x14] sm:$0xf] %v455
      %472 = vst [vmem:[%s175 + $0x18] sm:$0xf] %v456
      %473 = vst [vmem:[%s175 + $0x1c] sm:$0xf] %v457
      %s474 = smul.u32 8, %s14
      %p475 = scmp.lt.s32.totalorder %s474, 15
      %s476 = scalar_select %p475, %s474, 15
      %s477 = smul.addr %s476, 4
      %s478 = scalar_lea.vmem %s3, %s477
      // Predicated region
      $region33: #{_lambda_.3} parent=31 // pred_check
        %p479 = pneg %p100
      $region34: #{_lambda_.3} parent=31 // pred_check_branch
        %481 = sbr.rel (%p479) target = $region36
      $region35: #{_lambda_.3} parent=31 // pred_region
        %s482 = smul.u32 8, %s14
      $region36: #{_lambda_.3} parent=31 // pred_fallthru
        _
    $region32: #{_lambda_.3} parent=5 // pred_fallthru
      _
    %p483 = scmp.le.s32.totalorder 2, %s9
    // Predicated region
    $region37: #{_lambda_.3} parent=5 // pred_check
      %p484 = pneg %p483
    $region38: #{_lambda_.3} parent=5 // pred_check_branch
      %486 = sbr.rel (%p484) target = $region40
    $region39: #{_lambda_.3} parent=5 // pred_region
      %s487 = ssub.s32 %s9, 2
      // Predicated region
      $region41: #{_lambda_.3} parent=39 // pred_check
        %p488 = pneg %p106
      $region42: #{_lambda_.3} parent=39 // pred_check_branch
        %490 = sbr.rel (%p488) target = $region44
      $region43: #{_lambda_.3} parent=39 // pred_region
        %s491 = smul.u32 8, %s15
        %p492 = scmp.lt.s32.totalorder %s491, 15
        %s493 = scalar_select %p492, %s491, 15
        %s494 = smul.addr %s493, 4
        %s495 = scalar_lea.vmem %s3, %s494
      $region44: #{_lambda_.3} parent=39 // pred_fallthru
        _
    $region40: #{_lambda_.3} parent=5 // pred_fallthru
      _
  $region6: #{_lambda_.3} parent=0 // loop_footer
    %s13 = sadd.s32 1, %s9
  $region7: #{_lambda_.3} parent=0 // loop_footer_branch
    %8 = sbr.rel target = $region3
  $region8: #{_lambda_.3} parent=0 // loop_exit
    _

// kernel: _lambda_.4
$region0: #{_lambda_.4}
  #allocation0 [shape = 'u32[]', space=smem, size = 0x4, offset = 0x4, fixed_abs, tag = 'smem constant byte address 0x4 - core index']
  #allocation1 [shape = 'u32[144,128]{1,0:T(1,128)}', space=vmem, size = 0x12000, scoped, tag = 'internal scratch']
  %s0 = inlined_call_operand.vmem [shape: bf16[18,2048], index: 0, kind: input, shape index: {}]
  %s1 = inlined_call_operand.vmem [shape: bf16[2048,128], index: 1, kind: input, shape index: {}]
  %s2 = inlined_call_operand.vmem [shape: f32[1,128], index: 2, kind: input, shape index: {}]
  %s3 = inlined_call_operand.vmem [shape: bf16[18,128], index: 3, kind: output, shape index: {}]
  %s4 = sld [smem:[#allocation0]]
  $region22: #{_lambda_.4} parent=0
    _
  %s6 = ssub.s32 1, %s4
  %s7 = scalar_select 0, %s6, %s4
  // Predicated region
  $region2: #{_lambda_.4} parent=0 // pred_check
    _
  $region3: #{_lambda_.4} parent=0 // pred_check_branch
    %9 = sbr.rel (0) target = $region5
  $region4: #{_lambda_.4} parent=0 // pred_region
    _
  $region5: #{_lambda_.4} parent=0 // pred_fallthru
    _
  // Predicated region
  $region6: #{_lambda_.4} parent=0 // pred_check
    _
  $region7: #{_lambda_.4} parent=0 // pred_check_branch
    %11 = sbr.rel (0) target = $region9
  $region8: #{_lambda_.4} parent=0 // pred_region
    _
  $region9: #{_lambda_.4} parent=0 // pred_fallthru
    _
  // Predicated region
  $region10: #{_lambda_.4} parent=0 // pred_check
    _
  $region11: #{_lambda_.4} parent=0 // pred_check_branch
    %13 = sbr.rel (0) target = $region13
  $region12: #{_lambda_.4} parent=0 // pred_region
    _
  $region13: #{_lambda_.4} parent=0 // pred_fallthru
    _
  %v15 = vld [vmem:[%s0] sm:$0xff]
  %v16 = vld [vmem:[%s0 + $0x8] sm:$0xff]
  %v17 = vld [vmem:[%s0 + $0x10] sm:$0xff]
  %v18 = vld [vmem:[%s0 + $0x18] sm:$0xff]
  %v19 = vld [vmem:[%s0 + $0x20] sm:$0xff]
  %v20 = vld [vmem:[%s0 + $0x28] sm:$0xff]
  %v21 = vld [vmem:[%s0 + $0x30] sm:$0xff]
  %v22 = vld [vmem:[%s0 + $0x38] sm:$0xff]
  %v23 = vld [vmem:[%s0 + $0x40] sm:$0xff]
  %v24 = vld [vmem:[%s0 + $0x48] sm:$0xff]
  %v25 = vld [vmem:[%s0 + $0x50] sm:$0xff]
  %v26 = vld [vmem:[%s0 + $0x58] sm:$0xff]
  %v27 = vld [vmem:[%s0 + $0x60] sm:$0xff]
  %v28 = vld [vmem:[%s0 + $0x68] sm:$0xff]
  %v29 = vld [vmem:[%s0 + $0x70] sm:$0xff]
  %v30 = vld [vmem:[%s0 + $0x78] sm:$0xff]
  %v31 = vld [vmem:[%s0 + $0x80] sm:$0x11]
  %v32 = vld [vmem:[%s0 + $0x88] sm:$0x11]
  %v33 = vld [vmem:[%s0 + $0x90] sm:$0x11]
  %v34 = vld [vmem:[%s0 + $0x98] sm:$0x11]
  %v35 = vld [vmem:[%s0 + $0xa0] sm:$0x11]
  %v36 = vld [vmem:[%s0 + $0xa8] sm:$0x11]
  %v37 = vld [vmem:[%s0 + $0xb0] sm:$0x11]
  %v38 = vld [vmem:[%s0 + $0xb8] sm:$0x11]
  %v39 = vld [vmem:[%s1] sm:$0xf]
  %v40 = vld [vmem:[%s1 + $0x4] sm:$0xf]
  %v41 = vld [vmem:[%s1 + $0x8] sm:$0xf]
  %v42 = vld [vmem:[%s1 + $0xc] sm:$0xf]
  %v43 = vld [vmem:[%s1 + $0x10] sm:$0xf]
  %v44 = vld [vmem:[%s1 + $0x14] sm:$0xf]
  %v45 = vld [vmem:[%s1 + $0x18] sm:$0xf]
  %v46 = vld [vmem:[%s1 + $0x1c] sm:$0xf]
  %v47 = vld [vmem:[%s1 + $0x20] sm:$0xf]
  %v48 = vld [vmem:[%s1 + $0x24] sm:$0xf]
  %v49 = vld [vmem:[%s1 + $0x28] sm:$0xf]
  %v50 = vld [vmem:[%s1 + $0x2c] sm:$0xf]
  %v51 = vld [vmem:[%s1 + $0x30] sm:$0xf]
  %v52 = vld [vmem:[%s1 + $0x34] sm:$0xf]
  %v53 = vld [vmem:[%s1 + $0x38] sm:$0xf]
  %v54 = vld [vmem:[%s1 + $0x3c] sm:$0xf]
  %v55 = vld [vmem:[%s1 + $0x40] sm:$0xf]
  %v56 = vld [vmem:[%s1 + $0x44] sm:$0xf]
  %v57 = vld [vmem:[%s1 + $0x48] sm:$0xf]
  %v58 = vld [vmem:[%s1 + $0x4c] sm:$0xf]
  %v59 = vld [vmem:[%s1 + $0x50] sm:$0xf]
  %v60 = vld [vmem:[%s1 + $0x54] sm:$0xf]
  %v61 = vld [vmem:[%s1 + $0x58] sm:$0xf]
  %v62 = vld [vmem:[%s1 + $0x5c] sm:$0xf]
  %v63 = vld [vmem:[%s1 + $0x60] sm:$0xf]
  %v64 = vld [vmem:[%s1 + $0x64] sm:$0xf]
  %v65 = vld [vmem:[%s1 + $0x68] sm:$0xf]
  %v66 = vld [vmem:[%s1 + $0x6c] sm:$0xf]
  %v67 = vld [vmem:[%s1 + $0x70] sm:$0xf]
  %v68 = vld [vmem:[%s1 + $0x74] sm:$0xf]
  %v69 = vld [vmem:[%s1 + $0x78] sm:$0xf]
  %v70 = vld [vmem:[%s1 + $0x7c] sm:$0xf]
  %v71 = vld [vmem:[%s1 + $0x80] sm:$0xf]
  %v72 = vld [vmem:[%s1 + $0x84] sm:$0xf]
  %v73 = vld [vmem:[%s1 + $0x88] sm:$0xf]
  %v74 = vld [vmem:[%s1 + $0x8c] sm:$0xf]
  %v75 = vld [vmem:[%s1 + $0x90] sm:$0xf]
  %v76 = vld [vmem:[%s1 + $0x94] sm:$0xf]
  %v77 = vld [vmem:[%s1 + $0x98] sm:$0xf]
  %v78 = vld [vmem:[%s1 + $0x9c] sm:$0xf]
  %v79 = vld [vmem:[%s1 + $0xa0] sm:$0xf]
  %v80 = vld [vmem:[%s1 + $0xa4] sm:$0xf]
  %v81 = vld [vmem:[%s1 + $0xa8] sm:$0xf]
  %v82 = vld [vmem:[%s1 + $0xac] sm:$0xf]
  %v83 = vld [vmem:[%s1 + $0xb0] sm:$0xf]
  %v84 = vld [vmem:[%s1 + $0xb4] sm:$0xf]
  %v85 = vld [vmem:[%s1 + $0xb8] sm:$0xf]
  %v86 = vld [vmem:[%s1 + $0xbc] sm:$0xf]
  %v87 = vld [vmem:[%s1 + $0xc0] sm:$0xf]
  %v88 = vld [vmem:[%s1 + $0xc4] sm:$0xf]
  %v89 = vld [vmem:[%s1 + $0xc8] sm:$0xf]
  %v90 = vld [vmem:[%s1 + $0xcc] sm:$0xf]
  %v91 = vld [vmem:[%s1 + $0xd0] sm:$0xf]
  %v92 = vld [vmem:[%s1 + $0xd4] sm:$0xf]
  %v93 = vld [vmem:[%s1 + $0xd8] sm:$0xf]
  %v94 = vld [vmem:[%s1 + $0xdc] sm:$0xf]
  %v95 = vld [vmem:[%s1 + $0xe0] sm:$0xf]
  %v96 = vld [vmem:[%s1 + $0xe4] sm:$0xf]
  %v97 = vld [vmem:[%s1 + $0xe8] sm:$0xf]
  %v98 = vld [vmem:[%s1 + $0xec] sm:$0xf]
  %v99 = vld [vmem:[%s1 + $0xf0] sm:$0xf]
  %v100 = vld [vmem:[%s1 + $0xf4] sm:$0xf]
  %v101 = vld [vmem:[%s1 + $0xf8] sm:$0xf]
  %v102 = vld [vmem:[%s1 + $0xfc] sm:$0xf]
  %v103 = vld [vmem:[%s1 + $0x100] sm:$0xf]
  %v104 = vld [vmem:[%s1 + $0x104] sm:$0xf]
  %v105 = vld [vmem:[%s1 + $0x108] sm:$0xf]
  %v106 = vld [vmem:[%s1 + $0x10c] sm:$0xf]
  %v107 = vld [vmem:[%s1 + $0x110] sm:$0xf]
  %v108 = vld [vmem:[%s1 + $0x114] sm:$0xf]
  %v109 = vld [vmem:[%s1 + $0x118] sm:$0xf]
  %v110 = vld [vmem:[%s1 + $0x11c] sm:$0xf]
  %v111 = vld [vmem:[%s1 + $0x120] sm:$0xf]
  %v112 = vld [vmem:[%s1 + $0x124] sm:$0xf]
  %v113 = vld [vmem:[%s1 + $0x128] sm:$0xf]
  %v114 = vld [vmem:[%s1 + $0x12c] sm:$0xf]
  %v115 = vld [vmem:[%s1 + $0x130] sm:$0xf]
  %v116 = vld [vmem:[%s1 + $0x134] sm:$0xf]
  %v117 = vld [vmem:[%s1 + $0x138] sm:$0xf]
  %v118 = vld [vmem:[%s1 + $0x13c] sm:$0xf]
  %v119 = vld [vmem:[%s1 + $0x140] sm:$0xf]
  %v120 = vld [vmem:[%s1 + $0x144] sm:$0xf]
  %v121 = vld [vmem:[%s1 + $0x148] sm:$0xf]
  %v122 = vld [vmem:[%s1 + $0x14c] sm:$0xf]
  %v123 = vld [vmem:[%s1 + $0x150] sm:$0xf]
  %v124 = vld [vmem:[%s1 + $0x154] sm:$0xf]
  %v125 = vld [vmem:[%s1 + $0x158] sm:$0xf]
  %v126 = vld [vmem:[%s1 + $0x15c] sm:$0xf]
  %v127 = vld [vmem:[%s1 + $0x160] sm:$0xf]
  %v128 = vld [vmem:[%s1 + $0x164] sm:$0xf]
  %v129 = vld [vmem:[%s1 + $0x168] sm:$0xf]
  %v130 = vld [vmem:[%s1 + $0x16c] sm:$0xf]
  %v131 = vld [vmem:[%s1 + $0x170] sm:$0xf]
  %v132 = vld [vmem:[%s1 + $0x174] sm:$0xf]
  %v133 = vld [vmem:[%s1 + $0x178] sm:$0xf]
  %v134 = vld [vmem:[%s1 + $0x17c] sm:$0xf]
  %v135 = vld [vmem:[%s1 + $0x180] sm:$0xf]
  %v136 = vld [vmem:[%s1 + $0x184] sm:$0xf]
  %v137 = vld [vmem:[%s1 + $0x188] sm:$0xf]
  %v138 = vld [vmem:[%s1 + $0x18c] sm:$0xf]
  %v139 = vld [vmem:[%s1 + $0x190] sm:$0xf]
  %v140 = vld [vmem:[%s1 + $0x194] sm:$0xf]
  %v141 = vld [vmem:[%s1 + $0x198] sm:$0xf]
  %v142 = vld [vmem:[%s1 + $0x19c] sm:$0xf]
  %v143 = vld [vmem:[%s1 + $0x1a0] sm:$0xf]
  %v144 = vld [vmem:[%s1 + $0x1a4] sm:$0xf]
  %v145 = vld [vmem:[%s1 + $0x1a8] sm:$0xf]
  %v146 = vld [vmem:[%s1 + $0x1ac] sm:$0xf]
  %v147 = vld [vmem:[%s1 + $0x1b0] sm:$0xf]
  %v148 = vld [vmem:[%s1 + $0x1b4] sm:$0xf]
  %v149 = vld [vmem:[%s1 + $0x1b8] sm:$0xf]
  %v150 = vld [vmem:[%s1 + $0x1bc] sm:$0xf]
  %v151 = vld [vmem:[%s1 + $0x1c0] sm:$0xf]
  %v152 = vld [vmem:[%s1 + $0x1c4] sm:$0xf]
  %v153 = vld [vmem:[%s1 + $0x1c8] sm:$0xf]
  %v154 = vld [vmem:[%s1 + $0x1cc] sm:$0xf]
  %v155 = vld [vmem:[%s1 + $0x1d0] sm:$0xf]
  %v156 = vld [vmem:[%s1 + $0x1d4] sm:$0xf]
  %v157 = vld [vmem:[%s1 + $0x1d8] sm:$0xf]
  %v158 = vld [vmem:[%s1 + $0x1dc] sm:$0xf]
  %v159 = vld [vmem:[%s1 + $0x1e0] sm:$0xf]
  %v160 = vld [vmem:[%s1 + $0x1e4] sm:$0xf]
  %v161 = vld [vmem:[%s1 + $0x1e8] sm:$0xf]
  %v162 = vld [vmem:[%s1 + $0x1ec] sm:$0xf]
  %v163 = vld [vmem:[%s1 + $0x1f0] sm:$0xf]
  %v164 = vld [vmem:[%s1 + $0x1f4] sm:$0xf]
  %v165 = vld [vmem:[%s1 + $0x1f8] sm:$0xf]
  %v166 = vld [vmem:[%s1 + $0x1fc] sm:$0xf]
  %v167 = vld [vmem:[%s1 + $0x200] sm:$0xf]
  %v168 = vld [vmem:[%s1 + $0x204] sm:$0xf]
  %v169 = vld [vmem:[%s1 + $0x208] sm:$0xf]
  %v170 = vld [vmem:[%s1 + $0x20c] sm:$0xf]
  %v171 = vld [vmem:[%s1 + $0x210] sm:$0xf]
  %v172 = vld [vmem:[%s1 + $0x214] sm:$0xf]
  %v173 = vld [vmem:[%s1 + $0x218] sm:$0xf]
  %v174 = vld [vmem:[%s1 + $0x21c] sm:$0xf]
  %v175 = vld [vmem:[%s1 + $0x220] sm:$0xf]
  %v176 = vld [vmem:[%s1 + $0x224] sm:$0xf]
  %v177 = vld [vmem:[%s1 + $0x228] sm:$0xf]
  %v178 = vld [vmem:[%s1 + $0x22c] sm:$0xf]
  %v179 = vld [vmem:[%s1 + $0x230] sm:$0xf]
  %v180 = vld [vmem:[%s1 + $0x234] sm:$0xf]
  %v181 = vld [vmem:[%s1 + $0x238] sm:$0xf]
  %v182 = vld [vmem:[%s1 + $0x23c] sm:$0xf]
  %v183 = vld [vmem:[%s1 + $0x240] sm:$0xf]
  %v184 = vld [vmem:[%s1 + $0x244] sm:$0xf]
  %v185 = vld [vmem:[%s1 + $0x248] sm:$0xf]
  %v186 = vld [vmem:[%s1 + $0x24c] sm:$0xf]
  %v187 = vld [vmem:[%s1 + $0x250] sm:$0xf]
  %v188 = vld [vmem:[%s1 + $0x254] sm:$0xf]
  %v189 = vld [vmem:[%s1 + $0x258] sm:$0xf]
  %v190 = vld [vmem:[%s1 + $0x25c] sm:$0xf]
  %v191 = vld [vmem:[%s1 + $0x260] sm:$0xf]
  %v192 = vld [vmem:[%s1 + $0x264] sm:$0xf]
  %v193 = vld [vmem:[%s1 + $0x268] sm:$0xf]
  %v194 = vld [vmem:[%s1 + $0x26c] sm:$0xf]
  %v195 = vld [vmem:[%s1 + $0x270] sm:$0xf]
  %v196 = vld [vmem:[%s1 + $0x274] sm:$0xf]
  %v197 = vld [vmem:[%s1 + $0x278] sm:$0xf]
  %v198 = vld [vmem:[%s1 + $0x27c] sm:$0xf]
  %v199 = vld [vmem:[%s1 + $0x280] sm:$0xf]
  %v200 = vld [vmem:[%s1 + $0x284] sm:$0xf]
  %v201 = vld [vmem:[%s1 + $0x288] sm:$0xf]
  %v202 = vld [vmem:[%s1 + $0x28c] sm:$0xf]
  %v203 = vld [vmem:[%s1 + $0x290] sm:$0xf]
  %v204 = vld [vmem:[%s1 + $0x294] sm:$0xf]
  %v205 = vld [vmem:[%s1 + $0x298] sm:$0xf]
  %v206 = vld [vmem:[%s1 + $0x29c] sm:$0xf]
  %v207 = vld [vmem:[%s1 + $0x2a0] sm:$0xf]
  %v208 = vld [vmem:[%s1 + $0x2a4] sm:$0xf]
  %v209 = vld [vmem:[%s1 + $0x2a8] sm:$0xf]
  %v210 = vld [vmem:[%s1 + $0x2ac] sm:$0xf]
  %v211 = vld [vmem:[%s1 + $0x2b0] sm:$0xf]
  %v212 = vld [vmem:[%s1 + $0x2b4] sm:$0xf]
  %v213 = vld [vmem:[%s1 + $0x2b8] sm:$0xf]
  %v214 = vld [vmem:[%s1 + $0x2bc] sm:$0xf]
  %v215 = vld [vmem:[%s1 + $0x2c0] sm:$0xf]
  %v216 = vld [vmem:[%s1 + $0x2c4] sm:$0xf]
  %v217 = vld [vmem:[%s1 + $0x2c8] sm:$0xf]
  %v218 = vld [vmem:[%s1 + $0x2cc] sm:$0xf]
  %v219 = vld [vmem:[%s1 + $0x2d0] sm:$0xf]
  %v220 = vld [vmem:[%s1 + $0x2d4] sm:$0xf]
  %v221 = vld [vmem:[%s1 + $0x2d8] sm:$0xf]
  %v222 = vld [vmem:[%s1 + $0x2dc] sm:$0xf]
  %v223 = vld [vmem:[%s1 + $0x2e0] sm:$0xf]
  %v224 = vld [vmem:[%s1 + $0x2e4] sm:$0xf]
  %v225 = vld [vmem:[%s1 + $0x2e8] sm:$0xf]
  %v226 = vld [vmem:[%s1 + $0x2ec] sm:$0xf]
  %v227 = vld [vmem:[%s1 + $0x2f0] sm:$0xf]
  %v228 = vld [vmem:[%s1 + $0x2f4] sm:$0xf]
  %v229 = vld [vmem:[%s1 + $0x2f8] sm:$0xf]
  %v230 = vld [vmem:[%s1 + $0x2fc] sm:$0xf]
  %v231 = vld [vmem:[%s1 + $0x300] sm:$0xf]
  %v232 = vld [vmem:[%s1 + $0x304] sm:$0xf]
  %v233 = vld [vmem:[%s1 + $0x308] sm:$0xf]
  %v234 = vld [vmem:[%s1 + $0x30c] sm:$0xf]
  %v235 = vld [vmem:[%s1 + $0x310] sm:$0xf]
  %v236 = vld [vmem:[%s1 + $0x314] sm:$0xf]
  %v237 = vld [vmem:[%s1 + $0x318] sm:$0xf]
  %v238 = vld [vmem:[%s1 + $0x31c] sm:$0xf]
  %v239 = vld [vmem:[%s1 + $0x320] sm:$0xf]
  %v240 = vld [vmem:[%s1 + $0x324] sm:$0xf]
  %v241 = vld [vmem:[%s1 + $0x328] sm:$0xf]
  %v242 = vld [vmem:[%s1 + $0x32c] sm:$0xf]
  %v243 = vld [vmem:[%s1 + $0x330] sm:$0xf]
  %v244 = vld [vmem:[%s1 + $0x334] sm:$0xf]
  %v245 = vld [vmem:[%s1 + $0x338] sm:$0xf]
  %v246 = vld [vmem:[%s1 + $0x33c] sm:$0xf]
  %v247 = vld [vmem:[%s1 + $0x340] sm:$0xf]
  %v248 = vld [vmem:[%s1 + $0x344] sm:$0xf]
  %v249 = vld [vmem:[%s1 + $0x348] sm:$0xf]
  %v250 = vld [vmem:[%s1 + $0x34c] sm:$0xf]
  %v251 = vld [vmem:[%s1 + $0x350] sm:$0xf]
  %v252 = vld [vmem:[%s1 + $0x354] sm:$0xf]
  %v253 = vld [vmem:[%s1 + $0x358] sm:$0xf]
  %v254 = vld [vmem:[%s1 + $0x35c] sm:$0xf]
  %v255 = vld [vmem:[%s1 + $0x360] sm:$0xf]
  %v256 = vld [vmem:[%s1 + $0x364] sm:$0xf]
  %v257 = vld [vmem:[%s1 + $0x368] sm:$0xf]
  %v258 = vld [vmem:[%s1 + $0x36c] sm:$0xf]
  %v259 = vld [vmem:[%s1 + $0x370] sm:$0xf]
  %v260 = vld [vmem:[%s1 + $0x374] sm:$0xf]
  %v261 = vld [vmem:[%s1 + $0x378] sm:$0xf]
  %v262 = vld [vmem:[%s1 + $0x37c] sm:$0xf]
  %v263 = vld [vmem:[%s1 + $0x380] sm:$0xf]
  %v264 = vld [vmem:[%s1 + $0x384] sm:$0xf]
  %v265 = vld [vmem:[%s1 + $0x388] sm:$0xf]
  %v266 = vld [vmem:[%s1 + $0x38c] sm:$0xf]
  %v267 = vld [vmem:[%s1 + $0x390] sm:$0xf]
  %v268 = vld [vmem:[%s1 + $0x394] sm:$0xf]
  %v269 = vld [vmem:[%s1 + $0x398] sm:$0xf]
  %v270 = vld [vmem:[%s1 + $0x39c] sm:$0xf]
  %v271 = vld [vmem:[%s1 + $0x3a0] sm:$0xf]
  %v272 = vld [vmem:[%s1 + $0x3a4] sm:$0xf]
  %v273 = vld [vmem:[%s1 + $0x3a8] sm:$0xf]
  %v274 = vld [vmem:[%s1 + $0x3ac] sm:$0xf]
  %v275 = vld [vmem:[%s1 + $0x3b0] sm:$0xf]
  %v276 = vld [vmem:[%s1 + $0x3b4] sm:$0xf]
  %v277 = vld [vmem:[%s1 + $0x3b8] sm:$0xf]
  %v278 = vld [vmem:[%s1 + $0x3bc] sm:$0xf]
  %v279 = vld [vmem:[%s1 + $0x3c0] sm:$0xf]
  %v280 = vld [vmem:[%s1 + $0x3c4] sm:$0xf]
  %v281 = vld [vmem:[%s1 + $0x3c8] sm:$0xf]
  %v282 = vld [vmem:[%s1 + $0x3cc] sm:$0xf]
  %v283 = vld [vmem:[%s1 + $0x3d0] sm:$0xf]
  %v284 = vld [vmem:[%s1 + $0x3d4] sm:$0xf]
  %v285 = vld [vmem:[%s1 + $0x3d8] sm:$0xf]
  %v286 = vld [vmem:[%s1 + $0x3dc] sm:$0xf]
  %v287 = vld [vmem:[%s1 + $0x3e0] sm:$0xf]
  %v288 = vld [vmem:[%s1 + $0x3e4] sm:$0xf]
  %v289 = vld [vmem:[%s1 + $0x3e8] sm:$0xf]
  %v290 = vld [vmem:[%s1 + $0x3ec] sm:$0xf]
  %v291 = vld [vmem:[%s1 + $0x3f0] sm:$0xf]
  %v292 = vld [vmem:[%s1 + $0x3f4] sm:$0xf]
  %v293 = vld [vmem:[%s1 + $0x3f8] sm:$0xf]
  %v294 = vld [vmem:[%s1 + $0x3fc] sm:$0xf]
  %v295 = vld [vmem:[%s2] sm:$0x1]
  %v297 = vlaneseq
  %v298 = vshrl.u32 %v297, 7
  %v299 = vsub.s32 0, %v298
  %v300 = vrot.slane %v295, %v299
  %v326 = vunpack.c.l.b16 %v15
  %v327 = vunpack.c.h.b16 %v15
  %v328 = vunpack.c.l.b16 %v16
  %v329 = vunpack.c.h.b16 %v16
  %v330 = vunpack.c.l.b16 %v17
  %v331 = vunpack.c.h.b16 %v17
  %v332 = vunpack.c.l.b16 %v18
  %v333 = vunpack.c.h.b16 %v18
  %v334 = vunpack.c.l.b16 %v19
  %v335 = vunpack.c.h.b16 %v19
  %v336 = vunpack.c.l.b16 %v20
  %v337 = vunpack.c.h.b16 %v20
  %v338 = vunpack.c.l.b16 %v21
  %v339 = vunpack.c.h.b16 %v21
  %v340 = vunpack.c.l.b16 %v22
  %v341 = vunpack.c.h.b16 %v22
  %v342 = vunpack.c.l.b16 %v23
  %v343 = vunpack.c.h.b16 %v23
  %v344 = vunpack.c.l.b16 %v24
  %v345 = vunpack.c.h.b16 %v24
  %v346 = vunpack.c.l.b16 %v25
  %v347 = vunpack.c.h.b16 %v25
  %v348 = vunpack.c.l.b16 %v26
  %v349 = vunpack.c.h.b16 %v26
  %v350 = vunpack.c.l.b16 %v27
  %v351 = vunpack.c.h.b16 %v27
  %v352 = vunpack.c.l.b16 %v28
  %v353 = vunpack.c.h.b16 %v28
  %v354 = vunpack.c.l.b16 %v29
  %v355 = vunpack.c.h.b16 %v29
  %v356 = vunpack.c.l.b16 %v30
  %v357 = vunpack.c.h.b16 %v30
  %v358 = vunpack.c.l.b16 %v31
  %v359 = vunpack.c.h.b16 %v31
  %v360 = vunpack.c.l.b16 %v32
  %v361 = vunpack.c.h.b16 %v32
  %v362 = vunpack.c.l.b16 %v33
  %v363 = vunpack.c.h.b16 %v33
  %v364 = vunpack.c.l.b16 %v34
  %v365 = vunpack.c.h.b16 %v34
  %v366 = vunpack.c.l.b16 %v35
  %v367 = vunpack.c.h.b16 %v35
  %v368 = vunpack.c.l.b16 %v36
  %v369 = vunpack.c.h.b16 %v36
  %v370 = vunpack.c.l.b16 %v37
  %v371 = vunpack.c.h.b16 %v37
  %v372 = vunpack.c.l.b16 %v38
  %v373 = vunpack.c.h.b16 %v38
  %v374 = vpack.c.b16 %v342, %v326
  %v375 = vpack.c.b16 %v343, %v327
  %v376 = vpack.c.b16 %v344, %v328
  %v377 = vpack.c.b16 %v345, %v329
  %v378 = vpack.c.b16 %v346, %v330
  %v379 = vpack.c.b16 %v347, %v331
  %v380 = vpack.c.b16 %v348, %v332
  %v381 = vpack.c.b16 %v349, %v333
  %v382 = vpack.c.b16 %v350, %v334
  %v383 = vpack.c.b16 %v351, %v335
  %v384 = vpack.c.b16 %v352, %v336
  %v385 = vpack.c.b16 %v353, %v337
  %v386 = vpack.c.b16 %v354, %v338
  %v387 = vpack.c.b16 %v355, %v339
  %v388 = vpack.c.b16 %v356, %v340
  %v389 = vpack.c.b16 %v357, %v341
  %v390 = vpack.c.b16 %v358, %v358
  %v391 = vpack.c.b16 %v359, %v359
  %v392 = vpack.c.b16 %v360, %v360
  %v393 = vpack.c.b16 %v361, %v361
  %v394 = vpack.c.b16 %v362, %v362
  %v395 = vpack.c.b16 %v363, %v363
  %v396 = vpack.c.b16 %v364, %v364
  %v397 = vpack.c.b16 %v365, %v365
  %v398 = vpack.c.b16 %v366, %v366
  %v399 = vpack.c.b16 %v367, %v367
  %v400 = vpack.c.b16 %v368, %v368
  %v401 = vpack.c.b16 %v369, %v369
  %v402 = vpack.c.b16 %v370, %v370
  %v403 = vpack.c.b16 %v371, %v371
  %v404 = vpack.c.b16 %v372, %v372
  %v405 = vpack.c.b16 %v373, %v373
  %v694 = vunpack.c.l.b16 %v39
  %v695 = vunpack.c.l.b16 %v40
  %v696 = vunpack.c.l.b16 %v41
  %v697 = vunpack.c.l.b16 %v42
  %v698 = vunpack.c.l.b16 %v43
  %v699 = vunpack.c.l.b16 %v44
  %v700 = vunpack.c.l.b16 %v45
  %v701 = vunpack.c.l.b16 %v46
  %v702 = vunpack.c.l.b16 %v47
  %v703 = vunpack.c.l.b16 %v48
  %v704 = vunpack.c.l.b16 %v49
  %v705 = vunpack.c.l.b16 %v50
  %v706 = vunpack.c.l.b16 %v51
  %v707 = vunpack.c.l.b16 %v52
  %v708 = vunpack.c.l.b16 %v53
  %v709 = vunpack.c.l.b16 %v54
  %v710 = vunpack.c.l.b16 %v55
  %v711 = vunpack.c.l.b16 %v56
  %v712 = vunpack.c.l.b16 %v57
  %v713 = vunpack.c.l.b16 %v58
  %v714 = vunpack.c.l.b16 %v59
  %v715 = vunpack.c.l.b16 %v60
  %v716 = vunpack.c.l.b16 %v61
  %v717 = vunpack.c.l.b16 %v62
  %v718 = vunpack.c.l.b16 %v63
  %v719 = vunpack.c.l.b16 %v64
  %v720 = vunpack.c.l.b16 %v65
  %v721 = vunpack.c.l.b16 %v66
  %v722 = vunpack.c.l.b16 %v67
  %v723 = vunpack.c.l.b16 %v68
  %v724 = vunpack.c.l.b16 %v69
  %v725 = vunpack.c.l.b16 %v70
  %v726 = vunpack.c.l.b16 %v71
  %v727 = vunpack.c.l.b16 %v72
  %v728 = vunpack.c.l.b16 %v73
  %v729 = vunpack.c.l.b16 %v74
  %v730 = vunpack.c.l.b16 %v75
  %v731 = vunpack.c.l.b16 %v76
  %v732 = vunpack.c.l.b16 %v77
  %v733 = vunpack.c.l.b16 %v78
  %v734 = vunpack.c.l.b16 %v79
  %v735 = vunpack.c.l.b16 %v80
  %v736 = vunpack.c.l.b16 %v81
  %v737 = vunpack.c.l.b16 %v82
  %v738 = vunpack.c.l.b16 %v83
  %v739 = vunpack.c.l.b16 %v84
  %v740 = vunpack.c.l.b16 %v85
  %v741 = vunpack.c.l.b16 %v86
  %v742 = vunpack.c.l.b16 %v87
  %v743 = vunpack.c.l.b16 %v88
  %v744 = vunpack.c.l.b16 %v89
  %v745 = vunpack.c.l.b16 %v90
  %v746 = vunpack.c.l.b16 %v91
  %v747 = vunpack.c.l.b16 %v92
  %v748 = vunpack.c.l.b16 %v93
  %v749 = vunpack.c.l.b16 %v94
  %v750 = vunpack.c.l.b16 %v95
  %v751 = vunpack.c.l.b16 %v96
  %v752 = vunpack.c.l.b16 %v97
  %v753 = vunpack.c.l.b16 %v98
  %v754 = vunpack.c.l.b16 %v99
  %v755 = vunpack.c.l.b16 %v100
  %v756 = vunpack.c.l.b16 %v101
  %v757 = vunpack.c.l.b16 %v102
  %v758 = vunpack.c.l.b16 %v103
  %v759 = vunpack.c.l.b16 %v104
  %v760 = vunpack.c.l.b16 %v105
  %v761 = vunpack.c.l.b16 %v106
  %v762 = vunpack.c.l.b16 %v107
  %v763 = vunpack.c.l.b16 %v108
  %v764 = vunpack.c.l.b16 %v109
  %v765 = vunpack.c.l.b16 %v110
  %v766 = vunpack.c.l.b16 %v111
  %v767 = vunpack.c.l.b16 %v112
  %v768 = vunpack.c.l.b16 %v113
  %v769 = vunpack.c.l.b16 %v114
  %v770 = vunpack.c.l.b16 %v115
  %v771 = vunpack.c.l.b16 %v116
  %v772 = vunpack.c.l.b16 %v117
  %v773 = vunpack.c.l.b16 %v118
  %v774 = vunpack.c.l.b16 %v119
  %v775 = vunpack.c.l.b16 %v120
  %v776 = vunpack.c.l.b16 %v121
  %v777 = vunpack.c.l.b16 %v122
  %v778 = vunpack.c.l.b16 %v123
  %v779 = vunpack.c.l.b16 %v124
  %v780 = vunpack.c.l.b16 %v125
  %v781 = vunpack.c.l.b16 %v126
  %v782 = vunpack.c.l.b16 %v127
  %v783 = vunpack.c.l.b16 %v128
  %v784 = vunpack.c.l.b16 %v129
  %v785 = vunpack.c.l.b16 %v130
  %v786 = vunpack.c.l.b16 %v131
  %v787 = vunpack.c.l.b16 %v132
  %v788 = vunpack.c.l.b16 %v133
  %v789 = vunpack.c.l.b16 %v134
  %v790 = vunpack.c.l.b16 %v135
  %v791 = vunpack.c.l.b16 %v136
  %v792 = vunpack.c.l.b16 %v137
  %v793 = vunpack.c.l.b16 %v138
  %v794 = vunpack.c.l.b16 %v139
  %v795 = vunpack.c.l.b16 %v140
  %v796 = vunpack.c.l.b16 %v141
  %v797 = vunpack.c.l.b16 %v142
  %v798 = vunpack.c.l.b16 %v143
  %v799 = vunpack.c.l.b16 %v144
  %v800 = vunpack.c.l.b16 %v145
  %v801 = vunpack.c.l.b16 %v146
  %v802 = vunpack.c.l.b16 %v147
  %v803 = vunpack.c.l.b16 %v148
  %v804 = vunpack.c.l.b16 %v149
  %v805 = vunpack.c.l.b16 %v150
  %v806 = vunpack.c.l.b16 %v151
  %v807 = vunpack.c.l.b16 %v152
  %v808 = vunpack.c.l.b16 %v153
  %v809 = vunpack.c.l.b16 %v154
  %v810 = vunpack.c.l.b16 %v155
  %v811 = vunpack.c.l.b16 %v156
  %v812 = vunpack.c.l.b16 %v157
  %v813 = vunpack.c.l.b16 %v158
  %v814 = vunpack.c.l.b16 %v159
  %v815 = vunpack.c.l.b16 %v160
  %v816 = vunpack.c.l.b16 %v161
  %v817 = vunpack.c.l.b16 %v162
  %v818 = vunpack.c.l.b16 %v163
  %v819 = vunpack.c.l.b16 %v164
  %v820 = vunpack.c.l.b16 %v165
  %v821 = vunpack.c.l.b16 %v166
  %v822 = vunpack.c.l.b16 %v167
  %v823 = vunpack.c.l.b16 %v168
  %v824 = vunpack.c.l.b16 %v169
  %v825 = vunpack.c.l.b16 %v170
  %v826 = vunpack.c.l.b16 %v171
  %v827 = vunpack.c.l.b16 %v172
  %v828 = vunpack.c.l.b16 %v173
  %v829 = vunpack.c.l.b16 %v174
  %v830 = vunpack.c.l.b16 %v175
  %v831 = vunpack.c.l.b16 %v176
  %v832 = vunpack.c.l.b16 %v177
  %v833 = vunpack.c.l.b16 %v178
  %v834 = vunpack.c.l.b16 %v179
  %v835 = vunpack.c.l.b16 %v180
  %v836 = vunpack.c.l.b16 %v181
  %v837 = vunpack.c.l.b16 %v182
  %v838 = vunpack.c.l.b16 %v183
  %v839 = vunpack.c.l.b16 %v184
  %v840 = vunpack.c.l.b16 %v185
  %v841 = vunpack.c.l.b16 %v186
  %v842 = vunpack.c.l.b16 %v187
  %v843 = vunpack.c.l.b16 %v188
  %v844 = vunpack.c.l.b16 %v189
  %v845 = vunpack.c.l.b16 %v190
  %v846 = vunpack.c.l.b16 %v191
  %v847 = vunpack.c.l.b16 %v192
  %v848 = vunpack.c.l.b16 %v193
  %v849 = vunpack.c.l.b16 %v194
  %v850 = vunpack.c.l.b16 %v195
  %v851 = vunpack.c.l.b16 %v196
  %v852 = vunpack.c.l.b16 %v197
  %v853 = vunpack.c.l.b16 %v198
  %v854 = vunpack.c.l.b16 %v199
  %v855 = vunpack.c.l.b16 %v200
  %v856 = vunpack.c.l.b16 %v201
  %v857 = vunpack.c.l.b16 %v202
  %v858 = vunpack.c.l.b16 %v203
  %v859 = vunpack.c.l.b16 %v204
  %v860 = vunpack.c.l.b16 %v205
  %v861 = vunpack.c.l.b16 %v206
  %v862 = vunpack.c.l.b16 %v207
  %v863 = vunpack.c.l.b16 %v208
  %v864 = vunpack.c.l.b16 %v209
  %v865 = vunpack.c.l.b16 %v210
  %v866 = vunpack.c.l.b16 %v211
  %v867 = vunpack.c.l.b16 %v212
  %v868 = vunpack.c.l.b16 %v213
  %v869 = vunpack.c.l.b16 %v214
  %v870 = vunpack.c.l.b16 %v215
  %v871 = vunpack.c.l.b16 %v216
  %v872 = vunpack.c.l.b16 %v217
  %v873 = vunpack.c.l.b16 %v218
  %v874 = vunpack.c.l.b16 %v219
  %v875 = vunpack.c.l.b16 %v220
  %v876 = vunpack.c.l.b16 %v221
  %v877 = vunpack.c.l.b16 %v222
  %v878 = vunpack.c.l.b16 %v223
  %v879 = vunpack.c.l.b16 %v224
  %v880 = vunpack.c.l.b16 %v225
  %v881 = vunpack.c.l.b16 %v226
  %v882 = vunpack.c.l.b16 %v227
  %v883 = vunpack.c.l.b16 %v228
  %v884 = vunpack.c.l.b16 %v229
  %v885 = vunpack.c.l.b16 %v230
  %v886 = vunpack.c.l.b16 %v231
  %v887 = vunpack.c.l.b16 %v232
  %v888 = vunpack.c.l.b16 %v233
  %v889 = vunpack.c.l.b16 %v234
  %v890 = vunpack.c.l.b16 %v235
  %v891 = vunpack.c.l.b16 %v236
  %v892 = vunpack.c.l.b16 %v237
  %v893 = vunpack.c.l.b16 %v238
  %v894 = vunpack.c.l.b16 %v239
  %v895 = vunpack.c.l.b16 %v240
  %v896 = vunpack.c.l.b16 %v241
  %v897 = vunpack.c.l.b16 %v242
  %v898 = vunpack.c.l.b16 %v243
  %v899 = vunpack.c.l.b16 %v244
  %v900 = vunpack.c.l.b16 %v245
  %v901 = vunpack.c.l.b16 %v246
  %v902 = vunpack.c.l.b16 %v247
  %v903 = vunpack.c.l.b16 %v248
  %v904 = vunpack.c.l.b16 %v249
  %v905 = vunpack.c.l.b16 %v250
  %v906 = vunpack.c.l.b16 %v251
  %v907 = vunpack.c.l.b16 %v252
  %v908 = vunpack.c.l.b16 %v253
  %v909 = vunpack.c.l.b16 %v254
  %v910 = vunpack.c.l.b16 %v255
  %v911 = vunpack.c.l.b16 %v256
  %v912 = vunpack.c.l.b16 %v257
  %v913 = vunpack.c.l.b16 %v258
  %v914 = vunpack.c.l.b16 %v259
  %v915 = vunpack.c.l.b16 %v260
  %v916 = vunpack.c.l.b16 %v261
  %v917 = vunpack.c.l.b16 %v262
  %v918 = vunpack.c.l.b16 %v263
  %v919 = vunpack.c.l.b16 %v264
  %v920 = vunpack.c.l.b16 %v265
  %v921 = vunpack.c.l.b16 %v266
  %v922 = vunpack.c.l.b16 %v267
  %v923 = vunpack.c.l.b16 %v268
  %v924 = vunpack.c.l.b16 %v269
  %v925 = vunpack.c.l.b16 %v270
  %v926 = vunpack.c.l.b16 %v271
  %v927 = vunpack.c.l.b16 %v272
  %v928 = vunpack.c.l.b16 %v273
  %v929 = vunpack.c.l.b16 %v274
  %v930 = vunpack.c.l.b16 %v275
  %v931 = vunpack.c.l.b16 %v276
  %v932 = vunpack.c.l.b16 %v277
  %v933 = vunpack.c.l.b16 %v278
  %v934 = vunpack.c.l.b16 %v279
  %v935 = vunpack.c.l.b16 %v280
  %v936 = vunpack.c.l.b16 %v281
  %v937 = vunpack.c.l.b16 %v282
  %v938 = vunpack.c.l.b16 %v283
  %v939 = vunpack.c.l.b16 %v284
  %v940 = vunpack.c.l.b16 %v285
  %v941 = vunpack.c.l.b16 %v286
  %v942 = vunpack.c.l.b16 %v287
  %v943 = vunpack.c.l.b16 %v288
  %v944 = vunpack.c.l.b16 %v289
  %v945 = vunpack.c.l.b16 %v290
  %v946 = vunpack.c.l.b16 %v291
  %v947 = vunpack.c.l.b16 %v292
  %v948 = vunpack.c.l.b16 %v293
  %v949 = vunpack.c.l.b16 %v294
  %v950 = vpack.c.b16 %v695, %v694
  %v951 = vpack.c.b16 %v697, %v696
  %v952 = vpack.c.b16 %v699, %v698
  %v953 = vpack.c.b16 %v701, %v700
  %v954 = vpack.c.b16 %v703, %v702
  %v955 = vpack.c.b16 %v705, %v704
  %v956 = vpack.c.b16 %v707, %v706
  %v957 = vpack.c.b16 %v709, %v708
  %v958 = vpack.c.b16 %v711, %v710
  %v959 = vpack.c.b16 %v713, %v712
  %v960 = vpack.c.b16 %v715, %v714
  %v961 = vpack.c.b16 %v717, %v716
  %v962 = vpack.c.b16 %v719, %v718
  %v963 = vpack.c.b16 %v721, %v720
  %v964 = vpack.c.b16 %v723, %v722
  %v965 = vpack.c.b16 %v725, %v724
  %v966 = vpack.c.b16 %v727, %v726
  %v967 = vpack.c.b16 %v729, %v728
  %v968 = vpack.c.b16 %v731, %v730
  %v969 = vpack.c.b16 %v733, %v732
  %v970 = vpack.c.b16 %v735, %v734
  %v971 = vpack.c.b16 %v737, %v736
  %v972 = vpack.c.b16 %v739, %v738
  %v973 = vpack.c.b16 %v741, %v740
  %v974 = vpack.c.b16 %v743, %v742
  %v975 = vpack.c.b16 %v745, %v744
  %v976 = vpack.c.b16 %v747, %v746
  %v977 = vpack.c.b16 %v749, %v748
  %v978 = vpack.c.b16 %v751, %v750
  %v979 = vpack.c.b16 %v753, %v752
  %v980 = vpack.c.b16 %v755, %v754
  %v981 = vpack.c.b16 %v757, %v756
  %v982 = vpack.c.b16 %v759, %v758
  %v983 = vpack.c.b16 %v761, %v760
  %v984 = vpack.c.b16 %v763, %v762
  %v985 = vpack.c.b16 %v765, %v764
  %v986 = vpack.c.b16 %v767, %v766
  %v987 = vpack.c.b16 %v769, %v768
  %v988 = vpack.c.b16 %v771, %v770
  %v989 = vpack.c.b16 %v773, %v772
  %v990 = vpack.c.b16 %v775, %v774
  %v991 = vpack.c.b16 %v777, %v776
  %v992 = vpack.c.b16 %v779, %v778
  %v993 = vpack.c.b16 %v781, %v780
  %v994 = vpack.c.b16 %v783, %v782
  %v995 = vpack.c.b16 %v785, %v784
  %v996 = vpack.c.b16 %v787, %v786
  %v997 = vpack.c.b16 %v789, %v788
  %v998 = vpack.c.b16 %v791, %v790
  %v999 = vpack.c.b16 %v793, %v792
  %v1000 = vpack.c.b16 %v795, %v794
  %v1001 = vpack.c.b16 %v797, %v796
  %v1002 = vpack.c.b16 %v799, %v798
  %v1003 = vpack.c.b16 %v801, %v800
  %v1004 = vpack.c.b16 %v803, %v802
  %v1005 = vpack.c.b16 %v805, %v804
  %v1006 = vpack.c.b16 %v807, %v806
  %v1007 = vpack.c.b16 %v809, %v808
  %v1008 = vpack.c.b16 %v811, %v810
  %v1009 = vpack.c.b16 %v813, %v812
  %v1010 = vpack.c.b16 %v815, %v814
  %v1011 = vpack.c.b16 %v817, %v816
  %v1012 = vpack.c.b16 %v819, %v818
  %v1013 = vpack.c.b16 %v821, %v820
  %v1014 = vpack.c.b16 %v823, %v822
  %v1015 = vpack.c.b16 %v825, %v824
  %v1016 = vpack.c.b16 %v827, %v826
  %v1017 = vpack.c.b16 %v829, %v828
  %v1018 = vpack.c.b16 %v831, %v830
  %v1019 = vpack.c.b16 %v833, %v832
  %v1020 = vpack.c.b16 %v835, %v834
  %v1021 = vpack.c.b16 %v837, %v836
  %v1022 = vpack.c.b16 %v839, %v838
  %v1023 = vpack.c.b16 %v841, %v840
  %v1024 = vpack.c.b16 %v843, %v842
  %v1025 = vpack.c.b16 %v845, %v844
  %v1026 = vpack.c.b16 %v847, %v846
  %v1027 = vpack.c.b16 %v849, %v848
  %v1028 = vpack.c.b16 %v851, %v850
  %v1029 = vpack.c.b16 %v853, %v852
  %v1030 = vpack.c.b16 %v855, %v854
  %v1031 = vpack.c.b16 %v857, %v856
  %v1032 = vpack.c.b16 %v859, %v858
  %v1033 = vpack.c.b16 %v861, %v860
  %v1034 = vpack.c.b16 %v863, %v862
  %v1035 = vpack.c.b16 %v865, %v864
  %v1036 = vpack.c.b16 %v867, %v866
  %v1037 = vpack.c.b16 %v869, %v868
  %v1038 = vpack.c.b16 %v871, %v870
  %v1039 = vpack.c.b16 %v873, %v872
  %v1040 = vpack.c.b16 %v875, %v874
  %v1041 = vpack.c.b16 %v877, %v876
  %v1042 = vpack.c.b16 %v879, %v878
  %v1043 = vpack.c.b16 %v881, %v880
  %v1044 = vpack.c.b16 %v883, %v882
  %v1045 = vpack.c.b16 %v885, %v884
  %v1046 = vpack.c.b16 %v887, %v886
  %v1047 = vpack.c.b16 %v889, %v888
  %v1048 = vpack.c.b16 %v891, %v890
  %v1049 = vpack.c.b16 %v893, %v892
  %v1050 = vpack.c.b16 %v895, %v894
  %v1051 = vpack.c.b16 %v897, %v896
  %v1052 = vpack.c.b16 %v899, %v898
  %v1053 = vpack.c.b16 %v901, %v900
  %v1054 = vpack.c.b16 %v903, %v902
  %v1055 = vpack.c.b16 %v905, %v904
  %v1056 = vpack.c.b16 %v907, %v906
  %v1057 = vpack.c.b16 %v909, %v908
  %v1058 = vpack.c.b16 %v911, %v910
  %v1059 = vpack.c.b16 %v913, %v912
  %v1060 = vpack.c.b16 %v915, %v914
  %v1061 = vpack.c.b16 %v917, %v916
  %v1062 = vpack.c.b16 %v919, %v918
  %v1063 = vpack.c.b16 %v921, %v920
  %v1064 = vpack.c.b16 %v923, %v922
  %v1065 = vpack.c.b16 %v925, %v924
  %v1066 = vpack.c.b16 %v927, %v926
  %v1067 = vpack.c.b16 %v929, %v928
  %v1068 = vpack.c.b16 %v931, %v930
  %v1069 = vpack.c.b16 %v933, %v932
  %v1070 = vpack.c.b16 %v935, %v934
  %v1071 = vpack.c.b16 %v937, %v936
  %v1072 = vpack.c.b16 %v939, %v938
  %v1073 = vpack.c.b16 %v941, %v940
  %v1074 = vpack.c.b16 %v943, %v942
  %v1075 = vpack.c.b16 %v945, %v944
  %v1076 = vpack.c.b16 %v947, %v946
  %v1077 = vpack.c.b16 %v949, %v948
  %1206 = vmatprep.subr.bf16.mxu0 0
  %1207 = vmatpush1.bf16.msra.mxu0 %v950
  %1208 = vmatprep.subr.bf16.mxu0 0
  %1209 = vmatpush1.bf16.msra.mxu0 %v951
  %1210 = vmatprep.subr.bf16.mxu0 0
  %1211 = vmatpush1.bf16.msra.mxu0 %v952
  %1212 = vmatprep.subr.bf16.mxu0 0
  %1213 = vmatpush1.bf16.msra.mxu0 %v953
  %1214 = vmatprep.subr.bf16.mxu0 0
  %1215 = vmatpush1.bf16.msra.mxu0 %v954
  %1216 = vmatprep.subr.bf16.mxu0 0
  %1217 = vmatpush1.bf16.msra.mxu0 %v955
  %1218 = vmatprep.subr.bf16.mxu0 0
  %1219 = vmatpush1.bf16.msra.mxu0 %v956
  %1220 = vmatprep.subr.bf16.mxu0 0
  %1221 = vmatpush1.bf16.msra.mxu0 %v957
  %1222 = vmatprep.subr.bf16.mxu0 0
  %1223 = vmatpush1.bf16.msra.mxu0 %v958
  %1224 = vmatprep.subr.bf16.mxu0 0
  %1225 = vmatpush1.bf16.msra.mxu0 %v959
  %1226 = vmatprep.subr.bf16.mxu0 0
  %1227 = vmatpush1.bf16.msra.mxu0 %v960
  %1228 = vmatprep.subr.bf16.mxu0 0
  %1229 = vmatpush1.bf16.msra.mxu0 %v961
  %1230 = vmatprep.subr.bf16.mxu0 0
  %1231 = vmatpush1.bf16.msra.mxu0 %v962
  %1232 = vmatprep.subr.bf16.mxu0 0
  %1233 = vmatpush1.bf16.msra.mxu0 %v963
  %1234 = vmatprep.subr.bf16.mxu0 0
  %1235 = vmatpush1.bf16.msra.mxu0 %v964
  %1236 = vmatprep.subr.bf16.mxu0 0
  %1237 = vmatpush1.bf16.msra.mxu0 %v965
  %1238 = vmatprep.mubr.bf16.mxu0 %v375
  %1239 = vmatmul.mubr.bf16.gmra.mrb[0].mxu0 %v374
  %v1240 = vpop.f32.mrb[0].mxu0
  %v1241 = vadd.f32 %v300, %v1240
  %v1242 = vpop.f32.mrb[0].mxu0
  %v1243 = vpop.f32.mrb[0].mxu0
  %v1244 = vadd.f32 %v300, %v1243
  %v1245 = vpop.f32.mrb[0].mxu0
  %1246 = vmatprep.mubr.bf16.mxu0 %v391
  %1247 = vmatmul.mubr.bf16.gmra.mrb[0].mxu0 %v390
  %v1248 = vpop.f32.mrb[0].mxu0
  %v1249 = vadd.f32 %v300, %v1248
  %v1250 = vpop.f32.mrb[0].mxu0
  %v1251 = vpop.f32.mrb[0].mxu0
  %v1252 = vpop.f32.mrb[0].mxu0
  %1253 = vdwg.mxu0
  %1254 = vmatprep.subr.bf16.mxu0 0
  %1255 = vmatpush1.bf16.msra.mxu0 %v966
  %1256 = vmatprep.subr.bf16.mxu0 0
  %1257 = vmatpush1.bf16.msra.mxu0 %v967
  %1258 = vmatprep.subr.bf16.mxu0 0
  %1259 = vmatpush1.bf16.msra.mxu0 %v968
  %1260 = vmatprep.subr.bf16.mxu0 0
  %1261 = vmatpush1.bf16.msra.mxu0 %v969
  %1262 = vmatprep.subr.bf16.mxu0 0
  %1263 = vmatpush1.bf16.msra.mxu0 %v970
  %1264 = vmatprep.subr.bf16.mxu0 0
  %1265 = vmatpush1.bf16.msra.mxu0 %v971
  %1266 = vmatprep.subr.bf16.mxu0 0
  %1267 = vmatpush1.bf16.msra.mxu0 %v972
  %1268 = vmatprep.subr.bf16.mxu0 0
  %1269 = vmatpush1.bf16.msra.mxu0 %v973
  %1270 = vmatprep.subr.bf16.mxu0 0
  %1271 = vmatpush1.bf16.msra.mxu0 %v974
  %1272 = vmatprep.subr.bf16.mxu0 0
  %1273 = vmatpush1.bf16.msra.mxu0 %v975
  %1274 = vmatprep.subr.bf16.mxu0 0
  %1275 = vmatpush1.bf16.msra.mxu0 %v976
  %1276 = vmatprep.subr.bf16.mxu0 0
  %1277 = vmatpush1.bf16.msra.mxu0 %v977
  %1278 = vmatprep.subr.bf16.mxu0 0
  %1279 = vmatpush1.bf16.msra.mxu0 %v978
  %1280 = vmatprep.subr.bf16.mxu0 0
  %1281 = vmatpush1.bf16.msra.mxu0 %v979
  %1282 = vmatprep.subr.bf16.mxu0 0
  %1283 = vmatpush1.bf16.msra.mxu0 %v980
  %1284 = vmatprep.subr.bf16.mxu0 0
  %1285 = vmatpush1.bf16.msra.mxu0 %v981
  %1286 = vmatprep.mubr.bf16.mxu0 %v377
  %1287 = vmatmul.mubr.bf16.gmra.mrb[0].mxu0 %v376
  %v1288 = vpop.f32.mrb[0].mxu0
  %v1289 = vadd.f32 %v1241, %v1288
  %v1290 = vpop.f32.mrb[0].mxu0
  %v1291 = vpop.f32.mrb[0].mxu0
  %v1292 = vadd.f32 %v1244, %v1291
  %v1293 = vpop.f32.mrb[0].mxu0
  %1294 = vmatprep.mubr.bf16.mxu0 %v393
  %1295 = vmatmul.mubr.bf16.gmra.mrb[0].mxu0 %v392
  %v1296 = vpop.f32.mrb[0].mxu0
  %v1297 = vadd.f32 %v1249, %v1296
  %v1298 = vpop.f32.mrb[0].mxu0
  %v1299 = vpop.f32.mrb[0].mxu0
  %v1300 = vpop.f32.mrb[0].mxu0
  %1301 = vdwg.mxu0
  %1302 = vmatprep.subr.bf16.mxu0 0
  %1303 = vmatpush1.bf16.msra.mxu0 %v982
  %1304 = vmatprep.subr.bf16.mxu0 0
  %1305 = vmatpush1.bf16.msra.mxu0 %v983
  %1306 = vmatprep.subr.bf16.mxu0 0
  %1307 = vmatpush1.bf16.msra.mxu0 %v984
  %1308 = vmatprep.subr.bf16.mxu0 0
  %1309 = vmatpush1.bf16.msra.mxu0 %v985
  %1310 = vmatprep.subr.bf16.mxu0 0
  %1311 = vmatpush1.bf16.msra.mxu0 %v986
  %1312 = vmatprep.subr.bf16.mxu0 0
  %1313 = vmatpush1.bf16.msra.mxu0 %v987
  %1314 = vmatprep.subr.bf16.mxu0 0
  %1315 = vmatpush1.bf16.msra.mxu0 %v988
  %1316 = vmatprep.subr.bf16.mxu0 0
  %1317 = vmatpush1.bf16.msra.mxu0 %v989
  %1318 = vmatprep.subr.bf16.mxu0 0
  %1319 = vmatpush1.bf16.msra.mxu0 %v990
  %1320 = vmatprep.subr.bf16.mxu0 0
  %1321 = vmatpush1.bf16.msra.mxu0 %v991
  %1322 = vmatprep.subr.bf16.mxu0 0
  %1323 = vmatpush1.bf16.msra.mxu0 %v992
  %1324 = vmatprep.subr.bf16.mxu0 0
  %1325 = vmatpush1.bf16.msra.mxu0 %v993
  %1326 = vmatprep.subr.bf16.mxu0 0
  %1327 = vmatpush1.bf16.msra.mxu0 %v994
  %1328 = vmatprep.subr.bf16.mxu0 0
  %1329 = vmatpush1.bf16.msra.mxu0 %v995
  %1330 = vmatprep.subr.bf16.mxu0 0
  %1331 = vmatpush1.bf16.msra.mxu0 %v996
  %1332 = vmatprep.subr.bf16.mxu0 0
  %1333 = vmatpush1.bf16.msra.mxu0 %v997
  %1334 = vmatprep.mubr.bf16.mxu0 %v379
  %1335 = vmatmul.mubr.bf16.gmra.mrb[0].mxu0 %v378
  %v1336 = vpop.f32.mrb[0].mxu0
  %v1337 = vadd.f32 %v1289, %v1336
  %v1338 = vpop.f32.mrb[0].mxu0
  %v1339 = vpop.f32.mrb[0].mxu0
  %v1340 = vadd.f32 %v1292, %v1339
  %v1341 = vpop.f32.mrb[0].mxu0
  %1342 = vmatprep.mubr.bf16.mxu0 %v395
  %1343 = vmatmul.mubr.bf16.gmra.mrb[0].mxu0 %v394
  %v1344 = vpop.f32.mrb[0].mxu0
  %v1345 = vadd.f32 %v1297, %v1344
  %v1346 = vpop.f32.mrb[0].mxu0
  %v1347 = vpop.f32.mrb[0].mxu0
  %v1348 = vpop.f32.mrb[0].mxu0
  %1349 = vdwg.mxu0
  %1350 = vmatprep.subr.bf16.mxu0 0
  %1351 = vmatpush1.bf16.msra.mxu0 %v998
  %1352 = vmatprep.subr.bf16.mxu0 0
  %1353 = vmatpush1.bf16.msra.mxu0 %v999
  %1354 = vmatprep.subr.bf16.mxu0 0
  %1355 = vmatpush1.bf16.msra.mxu0 %v1000
  %1356 = vmatprep.subr.bf16.mxu0 0
  %1357 = vmatpush1.bf16.msra.mxu0 %v1001
  %1358 = vmatprep.subr.bf16.mxu0 0
  %1359 = vmatpush1.bf16.msra.mxu0 %v1002
  %1360 = vmatprep.subr.bf16.mxu0 0
  %1361 = vmatpush1.bf16.msra.mxu0 %v1003
  %1362 = vmatprep.subr.bf16.mxu0 0
  %1363 = vmatpush1.bf16.msra.mxu0 %v1004
  %1364 = vmatprep.subr.bf16.mxu0 0
  %1365 = vmatpush1.bf16.msra.mxu0 %v1005
  %1366 = vmatprep.subr.bf16.mxu0 0
  %1367 = vmatpush1.bf16.msra.mxu0 %v1006
  %1368 = vmatprep.subr.bf16.mxu0 0
  %1369 = vmatpush1.bf16.msra.mxu0 %v1007
  %1370 = vmatprep.subr.bf16.mxu0 0
  %1371 = vmatpush1.bf16.msra.mxu0 %v1008
  %1372 = vmatprep.subr.bf16.mxu0 0
  %1373 = vmatpush1.bf16.msra.mxu0 %v1009
  %1374 = vmatprep.subr.bf16.mxu0 0
  %1375 = vmatpush1.bf16.msra.mxu0 %v1010
  %1376 = vmatprep.subr.bf16.mxu0 0
  %1377 = vmatpush1.bf16.msra.mxu0 %v1011
  %1378 = vmatprep.subr.bf16.mxu0 0
  %1379 = vmatpush1.bf16.msra.mxu0 %v1012
  %1380 = vmatprep.subr.bf16.mxu0 0
  %1381 = vmatpush1.bf16.msra.mxu0 %v1013
  %1382 = vmatprep.mubr.bf16.mxu0 %v381
  %1383 = vmatmul.mubr.bf16.gmra.mrb[0].mxu0 %v380
  %v1384 = vpop.f32.mrb[0].mxu0
  %v1385 = vadd.f32 %v1337, %v1384
  %v1386 = vpop.f32.mrb[0].mxu0
  %v1387 = vpop.f32.mrb[0].mxu0
  %v1388 = vadd.f32 %v1340, %v1387
  %v1389 = vpop.f32.mrb[0].mxu0
  %1390 = vmatprep.mubr.bf16.mxu0 %v397
  %1391 = vmatmul.mubr.bf16.gmra.mrb[0].mxu0 %v396
  %v1392 = vpop.f32.mrb[0].mxu0
  %v1393 = vadd.f32 %v1345, %v1392
  %v1394 = vpop.f32.mrb[0].mxu0
  %v1395 = vpop.f32.mrb[0].mxu0
  %v1396 = vpop.f32.mrb[0].mxu0
  %1397 = vdwg.mxu0
  %1398 = vmatprep.subr.bf16.mxu0 0
  %1399 = vmatpush1.bf16.msra.mxu0 %v1014
  %1400 = vmatprep.subr.bf16.mxu0 0
  %1401 = vmatpush1.bf16.msra.mxu0 %v1015
  %1402 = vmatprep.subr.bf16.mxu0 0
  %1403 = vmatpush1.bf16.msra.mxu0 %v1016
  %1404 = vmatprep.subr.bf16.mxu0 0
  %1405 = vmatpush1.bf16.msra.mxu0 %v1017
  %1406 = vmatprep.subr.bf16.mxu0 0
  %1407 = vmatpush1.bf16.msra.mxu0 %v1018
  %1408 = vmatprep.subr.bf16.mxu0 0
  %1409 = vmatpush1.bf16.msra.mxu0 %v1019
  %1410 = vmatprep.subr.bf16.mxu0 0
  %1411 = vmatpush1.bf16.msra.mxu0 %v1020
  %1412 = vmatprep.subr.bf16.mxu0 0
  %1413 = vmatpush1.bf16.msra.mxu0 %v1021
  %1414 = vmatprep.subr.bf16.mxu0 0
  %1415 = vmatpush1.bf16.msra.mxu0 %v1022
  %1416 = vmatprep.subr.bf16.mxu0 0
  %1417 = vmatpush1.bf16.msra.mxu0 %v1023
  %1418 = vmatprep.subr.bf16.mxu0 0
  %1419 = vmatpush1.bf16.msra.mxu0 %v1024
  %1420 = vmatprep.subr.bf16.mxu0 0
  %1421 = vmatpush1.bf16.msra.mxu0 %v1025
  %1422 = vmatprep.subr.bf16.mxu0 0
  %1423 = vmatpush1.bf16.msra.mxu0 %v1026
  %1424 = vmatprep.subr.bf16.mxu0 0
  %1425 = vmatpush1.bf16.msra.mxu0 %v1027
  %1426 = vmatprep.subr.bf16.mxu0 0
  %1427 = vmatpush1.bf16.msra.mxu0 %v1028
  %1428 = vmatprep.subr.bf16.mxu0 0
  %1429 = vmatpush1.bf16.msra.mxu0 %v1029
  %1430 = vmatprep.mubr.bf16.mxu0 %v383
  %1431 = vmatmul.mubr.bf16.gmra.mrb[0].mxu0 %v382
  %v1432 = vpop.f32.mrb[0].mxu0
  %v1433 = vadd.f32 %v1385, %v1432
  %v1434 = vpop.f32.mrb[0].mxu0
  %v1435 = vpop.f32.mrb[0].mxu0
  %v1436 = vadd.f32 %v1388, %v1435
  %v1437 = vpop.f32.mrb[0].mxu0
  %1438 = vmatprep.mubr.bf16.mxu0 %v399
  %1439 = vmatmul.mubr.bf16.gmra.mrb[0].mxu0 %v398
  %v1440 = vpop.f32.mrb[0].mxu0
  %v1441 = vadd.f32 %v1393, %v1440
  %v1442 = vpop.f32.mrb[0].mxu0
  %v1443 = vpop.f32.mrb[0].mxu0
  %v1444 = vpop.f32.mrb[0].mxu0
  %1445 = vdwg.mxu0
  %1446 = vmatprep.subr.bf16.mxu0 0
  %1447 = vmatpush1.bf16.msra.mxu0 %v1030
  %1448 = vmatprep.subr.bf16.mxu0 0
  %1449 = vmatpush1.bf16.msra.mxu0 %v1031
  %1450 = vmatprep.subr.bf16.mxu0 0
  %1451 = vmatpush1.bf16.msra.mxu0 %v1032
  %1452 = vmatprep.subr.bf16.mxu0 0
  %1453 = vmatpush1.bf16.msra.mxu0 %v1033
  %1454 = vmatprep.subr.bf16.mxu0 0
  %1455 = vmatpush1.bf16.msra.mxu0 %v1034
  %1456 = vmatprep.subr.bf16.mxu0 0
  %1457 = vmatpush1.bf16.msra.mxu0 %v1035
  %1458 = vmatprep.subr.bf16.mxu0 0
  %1459 = vmatpush1.bf16.msra.mxu0 %v1036
  %1460 = vmatprep.subr.bf16.mxu0 0
  %1461 = vmatpush1.bf16.msra.mxu0 %v1037
  %1462 = vmatprep.subr.bf16.mxu0 0
  %1463 = vmatpush1.bf16.msra.mxu0 %v1038
  %1464 = vmatprep.subr.bf16.mxu0 0
  %1465 = vmatpush1.bf16.msra.mxu0 %v1039
  %1466 = vmatprep.subr.bf16.mxu0 0
  %1467 = vmatpush1.bf16.msra.mxu0 %v1040
  %1468 = vmatprep.subr.bf16.mxu0 0
  %1469 = vmatpush1.bf16.msra.mxu0 %v1041
  %1470 = vmatprep.subr.bf16.mxu0 0
  %1471 = vmatpush1.bf16.msra.mxu0 %v1042
  %1472 = vmatprep.subr.bf16.mxu0 0
  %1473 = vmatpush1.bf16.msra.mxu0 %v1043
  %1474 = vmatprep.subr.bf16.mxu0 0
  %1475 = vmatpush1.bf16.msra.mxu0 %v1044
  %1476 = vmatprep.subr.bf16.mxu0 0
  %1477 = vmatpush1.bf16.msra.mxu0 %v1045
  %1478 = vmatprep.mubr.bf16.mxu0 %v385
  %1479 = vmatmul.mubr.bf16.gmra.mrb[0].mxu0 %v384
  %v1480 = vpop.f32.mrb[0].mxu0
  %v1481 = vadd.f32 %v1433, %v1480
  %v1482 = vpop.f32.mrb[0].mxu0
  %v1483 = vpop.f32.mrb[0].mxu0
  %v1484 = vadd.f32 %v1436, %v1483
  %v1485 = vpop.f32.mrb[0].mxu0
  %1486 = vmatprep.mubr.bf16.mxu0 %v401
  %1487 = vmatmul.mubr.bf16.gmra.mrb[0].mxu0 %v400
  %v1488 = vpop.f32.mrb[0].mxu0
  %v1489 = vadd.f32 %v1441, %v1488
  %v1490 = vpop.f32.mrb[0].mxu0
  %v1491 = vpop.f32.mrb[0].mxu0
  %v1492 = vpop.f32.mrb[0].mxu0
  %1493 = vdwg.mxu0
  %1494 = vmatprep.subr.bf16.mxu0 0
  %1495 = vmatpush1.bf16.msra.mxu0 %v1046
  %1496 = vmatprep.subr.bf16.mxu0 0
  %1497 = vmatpush1.bf16.msra.mxu0 %v1047
  %1498 = vmatprep.subr.bf16.mxu0 0
  %1499 = vmatpush1.bf16.msra.mxu0 %v1048
  %1500 = vmatprep.subr.bf16.mxu0 0
  %1501 = vmatpush1.bf16.msra.mxu0 %v1049
  %1502 = vmatprep.subr.bf16.mxu0 0
  %1503 = vmatpush1.bf16.msra.mxu0 %v1050
  %1504 = vmatprep.subr.bf16.mxu0 0
  %1505 = vmatpush1.bf16.msra.mxu0 %v1051
  %1506 = vmatprep.subr.bf16.mxu0 0
  %1507 = vmatpush1.bf16.msra.mxu0 %v1052
  %1508 = vmatprep.subr.bf16.mxu0 0
  %1509 = vmatpush1.bf16.msra.mxu0 %v1053
  %1510 = vmatprep.subr.bf16.mxu0 0
  %1511 = vmatpush1.bf16.msra.mxu0 %v1054
  %1512 = vmatprep.subr.bf16.mxu0 0
  %1513 = vmatpush1.bf16.msra.mxu0 %v1055
  %1514 = vmatprep.subr.bf16.mxu0 0
  %1515 = vmatpush1.bf16.msra.mxu0 %v1056
  %1516 = vmatprep.subr.bf16.mxu0 0
  %1517 = vmatpush1.bf16.msra.mxu0 %v1057
  %1518 = vmatprep.subr.bf16.mxu0 0
  %1519 = vmatpush1.bf16.msra.mxu0 %v1058
  %1520 = vmatprep.subr.bf16.mxu0 0
  %1521 = vmatpush1.bf16.msra.mxu0 %v1059
  %1522 = vmatprep.subr.bf16.mxu0 0
  %1523 = vmatpush1.bf16.msra.mxu0 %v1060
  %1524 = vmatprep.subr.bf16.mxu0 0
  %1525 = vmatpush1.bf16.msra.mxu0 %v1061
  %1526 = vmatprep.mubr.bf16.mxu0 %v387
  %1527 = vmatmul.mubr.bf16.gmra.mrb[0].mxu0 %v386
  %v1528 = vpop.f32.mrb[0].mxu0
  %v1529 = vadd.f32 %v1481, %v1528
  %v1530 = vpop.f32.mrb[0].mxu0
  %v1531 = vpop.f32.mrb[0].mxu0
  %v1532 = vadd.f32 %v1484, %v1531
  %v1533 = vpop.f32.mrb[0].mxu0
  %1534 = vmatprep.mubr.bf16.mxu0 %v403
  %1535 = vmatmul.mubr.bf16.gmra.mrb[0].mxu0 %v402
  %v1536 = vpop.f32.mrb[0].mxu0
  %v1537 = vadd.f32 %v1489, %v1536
  %v1538 = vpop.f32.mrb[0].mxu0
  %v1539 = vpop.f32.mrb[0].mxu0
  %v1540 = vpop.f32.mrb[0].mxu0
  %1541 = vdwg.mxu0
  %1542 = vmatprep.subr.bf16.mxu0 0
  %1543 = vmatpush1.bf16.msra.mxu0 %v1062
  %1544 = vmatprep.subr.bf16.mxu0 0
  %1545 = vmatpush1.bf16.msra.mxu0 %v1063
  %1546 = vmatprep.subr.bf16.mxu0 0
  %1547 = vmatpush1.bf16.msra.mxu0 %v1064
  %1548 = vmatprep.subr.bf16.mxu0 0
  %1549 = vmatpush1.bf16.msra.mxu0 %v1065
  %1550 = vmatprep.subr.bf16.mxu0 0
  %1551 = vmatpush1.bf16.msra.mxu0 %v1066
  %1552 = vmatprep.subr.bf16.mxu0 0
  %1553 = vmatpush1.bf16.msra.mxu0 %v1067
  %1554 = vmatprep.subr.bf16.mxu0 0
  %1555 = vmatpush1.bf16.msra.mxu0 %v1068
  %1556 = vmatprep.subr.bf16.mxu0 0
  %1557 = vmatpush1.bf16.msra.mxu0 %v1069
  %1558 = vmatprep.subr.bf16.mxu0 0
  %1559 = vmatpush1.bf16.msra.mxu0 %v1070
  %1560 = vmatprep.subr.bf16.mxu0 0
  %1561 = vmatpush1.bf16.msra.mxu0 %v1071
  %1562 = vmatprep.subr.bf16.mxu0 0
  %1563 = vmatpush1.bf16.msra.mxu0 %v1072
  %1564 = vmatprep.subr.bf16.mxu0 0
  %1565 = vmatpush1.bf16.msra.mxu0 %v1073
  %1566 = vmatprep.subr.bf16.mxu0 0
  %1567 = vmatpush1.bf16.msra.mxu0 %v1074
  %1568 = vmatprep.subr.bf16.mxu0 0
  %1569 = vmatpush1.bf16.msra.mxu0 %v1075
  %1570 = vmatprep.subr.bf16.mxu0 0
  %1571 = vmatpush1.bf16.msra.mxu0 %v1076
  %1572 = vmatprep.subr.bf16.mxu0 0
  %1573 = vmatpush1.bf16.msra.mxu0 %v1077
  %1574 = vmatprep.mubr.bf16.mxu0 %v389
  %1575 = vmatmul.mubr.bf16.gmra.mrb[0].mxu0 %v388
  %v1576 = vpop.f32.mrb[0].mxu0
  %v1577 = vadd.f32 %v1529, %v1576
  %v1578 = vpop.f32.mrb[0].mxu0
  %v1579 = vpop.f32.mrb[0].mxu0
  %v1580 = vadd.f32 %v1532, %v1579
  %v1581 = vpop.f32.mrb[0].mxu0
  %1582 = vmatprep.mubr.bf16.mxu0 %v405
  %1583 = vmatmul.mubr.bf16.gmra.mrb[0].mxu0 %v404
  %v1584 = vpop.f32.mrb[0].mxu0
  %v1585 = vadd.f32 %v1537, %v1584
  %v1586 = vpop.f32.mrb[0].mxu0
  %v1587 = vpop.f32.mrb[0].mxu0
  %v1588 = vpop.f32.mrb[0].mxu0
  %1589 = vdwg.mxu0
  %v1590 = vmax.f32 %v1577, 0.0
  %v1591 = vmax.f32 %v1580, 0.0
  %v1592 = vmax.f32 %v1585, 0.0
  %v1593 = vpack.c.bf16 %v1591, %v1590
  %v1594 = vpack.c.bf16 %v1592, %v1592
  %v1597 = vunpack.c.l.b16 %v1593
  %v1598 = vunpack.c.h.b16 %v1593
  %v1599 = vunpack.c.l.b16 %v1594
  %v1600 = vpack.c.b16 %v1597, %v1597
  %v1601 = vpack.c.b16 %v1598, %v1598
  %v1602 = vpack.c.b16 %v1599, %v1599
  %1606 = vst [vmem:[%s3] sm:$0xf] %v1600
  %1607 = vst [vmem:[%s3 + $0x4] sm:$0xf] %v1601
  %1608 = vst [vmem:[%s3 + $0x8] sm:$0x1] %v1602
  // Predicated region
  $region14: #{_lambda_.4} parent=0 // pred_check
    _
  $region15: #{_lambda_.4} parent=0 // pred_check_branch
    %1610 = sbr.rel (0) target = $region17
  $region16: #{_lambda_.4} parent=0 // pred_region
    _
  $region17: #{_lambda_.4} parent=0 // pred_fallthru
    _
  // Predicated region
  $region18: #{_lambda_.4} parent=0 // pred_check
    _
  $region19: #{_lambda_.4} parent=0 // pred_check_branch
    %1612 = sbr.rel (0) target = $region21
  $region20: #{_lambda_.4} parent=0 // pred_region
    _
  $region21: #{_lambda_.4} parent=0 // pred_fallthru
    _

// kernel: _lambda_.5
$region0: #{_lambda_.5}
  #allocation0 [shape = 'u32[]', space=smem, size = 0x4, offset = 0x4, fixed_abs, tag = 'smem constant byte address 0x4 - core index']
  #allocation1 [shape = 'u32[144,128]{1,0:T(1,128)}', space=vmem, size = 0x12000, scoped, tag = 'internal scratch']
  %s0 = inlined_call_operand.vmem [shape: bf16[2,1152], index: 0, kind: input, shape index: {}]
  %s1 = inlined_call_operand.vmem [shape: bf16[1152,128], index: 1, kind: input, shape index: {}]
  %s2 = inlined_call_operand.vmem [shape: f32[1,128], index: 2, kind: input, shape index: {}]
  %s3 = inlined_call_operand.vmem [shape: bf16[128,128], index: 3, kind: input, shape index: {}]
  %s4 = inlined_call_operand.vmem [shape: f32[1,128], index: 4, kind: input, shape index: {}]
  %s5 = inlined_call_operand.vmem [shape: bf16[128,512], index: 5, kind: input, shape index: {}]
  %s6 = inlined_call_operand.vmem [shape: f32[1,512], index: 6, kind: input, shape index: {}]
  %s7 = inlined_call_operand.vmem [shape: bf16[512,256], index: 7, kind: input, shape index: {}]
  %s8 = inlined_call_operand.vmem [shape: f32[1,256], index: 8, kind: input, shape index: {}]
  %s9 = inlined_call_operand.vmem [shape: bf16[256,128], index: 9, kind: input, shape index: {}]
  %s10 = inlined_call_operand.vmem [shape: f32[1,128], index: 10, kind: input, shape index: {}]
  %s11 = inlined_call_operand.hbm [shape: f32[2,128], index: 11, kind: output, shape index: {}]
  %s12 = sld [smem:[#allocation0]]
  $region54: #{_lambda_.5} parent=0
    _
  %s14 = ssub.s32 1, %s12
  %s15 = scalar_select 0, %s14, %s12
  $region1: #{_lambda_.5} parent=0
    #allocation2 [shape = 'u8[1024]{0}', space=vmem, size = 0x400, scoped, tag = 'output window, operand 0, single buffered']
    #allocation3 [shape = 's32[1]{0}', space=sflag, size = 0x4, scoped, tag = 'scoped memory for _lambda_.5']
    %16 = vsyncpa [#allocation3], 0
    // Predicated region
    $region2: #{_lambda_.5} parent=1 // pred_check
      _
    $region3: #{_lambda_.5} parent=1 // pred_check_branch
      %18 = sbr.rel (0) target = $region5
    $region4: #{_lambda_.5} parent=1 // pred_region
      _
    $region5: #{_lambda_.5} parent=1 // pred_fallthru
      _
    // Predicated region
    $region6: #{_lambda_.5} parent=1 // pred_check
      _
    $region7: #{_lambda_.5} parent=1 // pred_check_branch
      %20 = sbr.rel (0) target = $region9
    $region8: #{_lambda_.5} parent=1 // pred_region
      _
    $region9: #{_lambda_.5} parent=1 // pred_fallthru
      _
    // Predicated region
    $region10: #{_lambda_.5} parent=1 // pred_check
      _
    $region11: #{_lambda_.5} parent=1 // pred_check_branch
      %22 = sbr.rel (0) target = $region13
    $region12: #{_lambda_.5} parent=1 // pred_region
      _
    $region13: #{_lambda_.5} parent=1 // pred_fallthru
      _
    // Predicated region
    $region14: #{_lambda_.5} parent=1 // pred_check
      _
    $region15: #{_lambda_.5} parent=1 // pred_check_branch
      %24 = sbr.rel (0) target = $region17
    $region16: #{_lambda_.5} parent=1 // pred_region
      _
    $region17: #{_lambda_.5} parent=1 // pred_fallthru
      _
    // Predicated region
    $region18: #{_lambda_.5} parent=1 // pred_check
      _
    $region19: #{_lambda_.5} parent=1 // pred_check_branch
      %26 = sbr.rel (0) target = $region21
    $region20: #{_lambda_.5} parent=1 // pred_region
      _
    $region21: #{_lambda_.5} parent=1 // pred_fallthru
      _
    // Predicated region
    $region22: #{_lambda_.5} parent=1 // pred_check
      _
    $region23: #{_lambda_.5} parent=1 // pred_check_branch
      %28 = sbr.rel (0) target = $region25
    $region24: #{_lambda_.5} parent=1 // pred_region
      _
    $region25: #{_lambda_.5} parent=1 // pred_fallthru
      _
    // Predicated region
    $region26: #{_lambda_.5} parent=1 // pred_check
      _
    $region27: #{_lambda_.5} parent=1 // pred_check_branch
      %30 = sbr.rel (0) target = $region29
    $region28: #{_lambda_.5} parent=1 // pred_region
      _
    $region29: #{_lambda_.5} parent=1 // pred_fallthru
      _
    // Predicated region
    $region30: #{_lambda_.5} parent=1 // pred_check
      _
    $region31: #{_lambda_.5} parent=1 // pred_check_branch
      %32 = sbr.rel (0) target = $region33
    $region32: #{_lambda_.5} parent=1 // pred_region
      _
    $region33: #{_lambda_.5} parent=1 // pred_fallthru
      _
    // Predicated region
    $region34: #{_lambda_.5} parent=1 // pred_check
      _
    $region35: #{_lambda_.5} parent=1 // pred_check_branch
      %34 = sbr.rel (0) target = $region37
    $region36: #{_lambda_.5} parent=1 // pred_region
      _
    $region37: #{_lambda_.5} parent=1 // pred_fallthru
      _
    // Predicated region
    $region38: #{_lambda_.5} parent=1 // pred_check
      _
    $region39: #{_lambda_.5} parent=1 // pred_check_branch
      %36 = sbr.rel (0) target = $region41
    $region40: #{_lambda_.5} parent=1 // pred_region
      _
    $region41: #{_lambda_.5} parent=1 // pred_fallthru
      _
    // Predicated region
    $region42: #{_lambda_.5} parent=1 // pred_check
      _
    $region43: #{_lambda_.5} parent=1 // pred_check_branch
      %38 = sbr.rel (0) target = $region45
    $region44: #{_lambda_.5} parent=1 // pred_region
      _
    $region45: #{_lambda_.5} parent=1 // pred_fallthru
      _
    %v40 = vld [vmem:[%s0] sm:$0xff]
    %v41 = vld [vmem:[%s0 + $0x8] sm:$0x1]
    %v42 = vld [vmem:[%s1] sm:$0xf]
    %v43 = vld [vmem:[%s1 + $0x4] sm:$0xf]
    %v44 = vld [vmem:[%s1 + $0x8] sm:$0xf]
    %v45 = vld [vmem:[%s1 + $0xc] sm:$0xf]
    %v46 = vld [vmem:[%s1 + $0x10] sm:$0xf]
    %v47 = vld [vmem:[%s1 + $0x14] sm:$0xf]
    %v48 = vld [vmem:[%s1 + $0x18] sm:$0xf]
    %v49 = vld [vmem:[%s1 + $0x1c] sm:$0xf]
    %v50 = vld [vmem:[%s1 + $0x20] sm:$0xf]
    %v51 = vld [vmem:[%s1 + $0x24] sm:$0xf]
    %v52 = vld [vmem:[%s1 + $0x28] sm:$0xf]
    %v53 = vld [vmem:[%s1 + $0x2c] sm:$0xf]
    %v54 = vld [vmem:[%s1 + $0x30] sm:$0xf]
    %v55 = vld [vmem:[%s1 + $0x34] sm:$0xf]
    %v56 = vld [vmem:[%s1 + $0x38] sm:$0xf]
    %v57 = vld [vmem:[%s1 + $0x3c] sm:$0xf]
    %v58 = vld [vmem:[%s1 + $0x40] sm:$0xf]
    %v59 = vld [vmem:[%s1 + $0x44] sm:$0xf]
    %v60 = vld [vmem:[%s1 + $0x48] sm:$0xf]
    %v61 = vld [vmem:[%s1 + $0x4c] sm:$0xf]
    %v62 = vld [vmem:[%s1 + $0x50] sm:$0xf]
    %v63 = vld [vmem:[%s1 + $0x54] sm:$0xf]
    %v64 = vld [vmem:[%s1 + $0x58] sm:$0xf]
    %v65 = vld [vmem:[%s1 + $0x5c] sm:$0xf]
    %v66 = vld [vmem:[%s1 + $0x60] sm:$0xf]
    %v67 = vld [vmem:[%s1 + $0x64] sm:$0xf]
    %v68 = vld [vmem:[%s1 + $0x68] sm:$0xf]
    %v69 = vld [vmem:[%s1 + $0x6c] sm:$0xf]
    %v70 = vld [vmem:[%s1 + $0x70] sm:$0xf]
    %v71 = vld [vmem:[%s1 + $0x74] sm:$0xf]
    %v72 = vld [vmem:[%s1 + $0x78] sm:$0xf]
    %v73 = vld [vmem:[%s1 + $0x7c] sm:$0xf]
    %v74 = vld [vmem:[%s1 + $0x80] sm:$0xf]
    %v75 = vld [vmem:[%s1 + $0x84] sm:$0xf]
    %v76 = vld [vmem:[%s1 + $0x88] sm:$0xf]
    %v77 = vld [vmem:[%s1 + $0x8c] sm:$0xf]
    %v78 = vld [vmem:[%s1 + $0x90] sm:$0xf]
    %v79 = vld [vmem:[%s1 + $0x94] sm:$0xf]
    %v80 = vld [vmem:[%s1 + $0x98] sm:$0xf]
    %v81 = vld [vmem:[%s1 + $0x9c] sm:$0xf]
    %v82 = vld [vmem:[%s1 + $0xa0] sm:$0xf]
    %v83 = vld [vmem:[%s1 + $0xa4] sm:$0xf]
    %v84 = vld [vmem:[%s1 + $0xa8] sm:$0xf]
    %v85 = vld [vmem:[%s1 + $0xac] sm:$0xf]
    %v86 = vld [vmem:[%s1 + $0xb0] sm:$0xf]
    %v87 = vld [vmem:[%s1 + $0xb4] sm:$0xf]
    %v88 = vld [vmem:[%s1 + $0xb8] sm:$0xf]
    %v89 = vld [vmem:[%s1 + $0xbc] sm:$0xf]
    %v90 = vld [vmem:[%s1 + $0xc0] sm:$0xf]
    %v91 = vld [vmem:[%s1 + $0xc4] sm:$0xf]
    %v92 = vld [vmem:[%s1 + $0xc8] sm:$0xf]
    %v93 = vld [vmem:[%s1 + $0xcc] sm:$0xf]
    %v94 = vld [vmem:[%s1 + $0xd0] sm:$0xf]
    %v95 = vld [vmem:[%s1 + $0xd4] sm:$0xf]
    %v96 = vld [vmem:[%s1 + $0xd8] sm:$0xf]
    %v97 = vld [vmem:[%s1 + $0xdc] sm:$0xf]
    %v98 = vld [vmem:[%s1 + $0xe0] sm:$0xf]
    %v99 = vld [vmem:[%s1 + $0xe4] sm:$0xf]
    %v100 = vld [vmem:[%s1 + $0xe8] sm:$0xf]
    %v101 = vld [vmem:[%s1 + $0xec] sm:$0xf]
    %v102 = vld [vmem:[%s1 + $0xf0] sm:$0xf]
    %v103 = vld [vmem:[%s1 + $0xf4] sm:$0xf]
    %v104 = vld [vmem:[%s1 + $0xf8] sm:$0xf]
    %v105 = vld [vmem:[%s1 + $0xfc] sm:$0xf]
    %v106 = vld [vmem:[%s1 + $0x100] sm:$0xf]
    %v107 = vld [vmem:[%s1 + $0x104] sm:$0xf]
    %v108 = vld [vmem:[%s1 + $0x108] sm:$0xf]
    %v109 = vld [vmem:[%s1 + $0x10c] sm:$0xf]
    %v110 = vld [vmem:[%s1 + $0x110] sm:$0xf]
    %v111 = vld [vmem:[%s1 + $0x114] sm:$0xf]
    %v112 = vld [vmem:[%s1 + $0x118] sm:$0xf]
    %v113 = vld [vmem:[%s1 + $0x11c] sm:$0xf]
    %v114 = vld [vmem:[%s1 + $0x120] sm:$0xf]
    %v115 = vld [vmem:[%s1 + $0x124] sm:$0xf]
    %v116 = vld [vmem:[%s1 + $0x128] sm:$0xf]
    %v117 = vld [vmem:[%s1 + $0x12c] sm:$0xf]
    %v118 = vld [vmem:[%s1 + $0x130] sm:$0xf]
    %v119 = vld [vmem:[%s1 + $0x134] sm:$0xf]
    %v120 = vld [vmem:[%s1 + $0x138] sm:$0xf]
    %v121 = vld [vmem:[%s1 + $0x13c] sm:$0xf]
    %v122 = vld [vmem:[%s1 + $0x140] sm:$0xf]
    %v123 = vld [vmem:[%s1 + $0x144] sm:$0xf]
    %v124 = vld [vmem:[%s1 + $0x148] sm:$0xf]
    %v125 = vld [vmem:[%s1 + $0x14c] sm:$0xf]
    %v126 = vld [vmem:[%s1 + $0x150] sm:$0xf]
    %v127 = vld [vmem:[%s1 + $0x154] sm:$0xf]
    %v128 = vld [vmem:[%s1 + $0x158] sm:$0xf]
    %v129 = vld [vmem:[%s1 + $0x15c] sm:$0xf]
    %v130 = vld [vmem:[%s1 + $0x160] sm:$0xf]
    %v131 = vld [vmem:[%s1 + $0x164] sm:$0xf]
    %v132 = vld [vmem:[%s1 + $0x168] sm:$0xf]
    %v133 = vld [vmem:[%s1 + $0x16c] sm:$0xf]
    %v134 = vld [vmem:[%s1 + $0x170] sm:$0xf]
    %v135 = vld [vmem:[%s1 + $0x174] sm:$0xf]
    %v136 = vld [vmem:[%s1 + $0x178] sm:$0xf]
    %v137 = vld [vmem:[%s1 + $0x17c] sm:$0xf]
    %v138 = vld [vmem:[%s1 + $0x180] sm:$0xf]
    %v139 = vld [vmem:[%s1 + $0x184] sm:$0xf]
    %v140 = vld [vmem:[%s1 + $0x188] sm:$0xf]
    %v141 = vld [vmem:[%s1 + $0x18c] sm:$0xf]
    %v142 = vld [vmem:[%s1 + $0x190] sm:$0xf]
    %v143 = vld [vmem:[%s1 + $0x194] sm:$0xf]
    %v144 = vld [vmem:[%s1 + $0x198] sm:$0xf]
    %v145 = vld [vmem:[%s1 + $0x19c] sm:$0xf]
    %v146 = vld [vmem:[%s1 + $0x1a0] sm:$0xf]
    %v147 = vld [vmem:[%s1 + $0x1a4] sm:$0xf]
    %v148 = vld [vmem:[%s1 + $0x1a8] sm:$0xf]
    %v149 = vld [vmem:[%s1 + $0x1ac] sm:$0xf]
    %v150 = vld [vmem:[%s1 + $0x1b0] sm:$0xf]
    %v151 = vld [vmem:[%s1 + $0x1b4] sm:$0xf]
    %v152 = vld [vmem:[%s1 + $0x1b8] sm:$0xf]
    %v153 = vld [vmem:[%s1 + $0x1bc] sm:$0xf]
    %v154 = vld [vmem:[%s1 + $0x1c0] sm:$0xf]
    %v155 = vld [vmem:[%s1 + $0x1c4] sm:$0xf]
    %v156 = vld [vmem:[%s1 + $0x1c8] sm:$0xf]
    %v157 = vld [vmem:[%s1 + $0x1cc] sm:$0xf]
    %v158 = vld [vmem:[%s1 + $0x1d0] sm:$0xf]
    %v159 = vld [vmem:[%s1 + $0x1d4] sm:$0xf]
    %v160 = vld [vmem:[%s1 + $0x1d8] sm:$0xf]
    %v161 = vld [vmem:[%s1 + $0x1dc] sm:$0xf]
    %v162 = vld [vmem:[%s1 + $0x1e0] sm:$0xf]
    %v163 = vld [vmem:[%s1 + $0x1e4] sm:$0xf]
    %v164 = vld [vmem:[%s1 + $0x1e8] sm:$0xf]
    %v165 = vld [vmem:[%s1 + $0x1ec] sm:$0xf]
    %v166 = vld [vmem:[%s1 + $0x1f0] sm:$0xf]
    %v167 = vld [vmem:[%s1 + $0x1f4] sm:$0xf]
    %v168 = vld [vmem:[%s1 + $0x1f8] sm:$0xf]
    %v169 = vld [vmem:[%s1 + $0x1fc] sm:$0xf]
    %v170 = vld [vmem:[%s1 + $0x200] sm:$0xf]
    %v171 = vld [vmem:[%s1 + $0x204] sm:$0xf]
    %v172 = vld [vmem:[%s1 + $0x208] sm:$0xf]
    %v173 = vld [vmem:[%s1 + $0x20c] sm:$0xf]
    %v174 = vld [vmem:[%s1 + $0x210] sm:$0xf]
    %v175 = vld [vmem:[%s1 + $0x214] sm:$0xf]
    %v176 = vld [vmem:[%s1 + $0x218] sm:$0xf]
    %v177 = vld [vmem:[%s1 + $0x21c] sm:$0xf]
    %v178 = vld [vmem:[%s1 + $0x220] sm:$0xf]
    %v179 = vld [vmem:[%s1 + $0x224] sm:$0xf]
    %v180 = vld [vmem:[%s1 + $0x228] sm:$0xf]
    %v181 = vld [vmem:[%s1 + $0x22c] sm:$0xf]
    %v182 = vld [vmem:[%s1 + $0x230] sm:$0xf]
    %v183 = vld [vmem:[%s1 + $0x234] sm:$0xf]
    %v184 = vld [vmem:[%s1 + $0x238] sm:$0xf]
    %v185 = vld [vmem:[%s1 + $0x23c] sm:$0xf]
    %v186 = vld [vmem:[%s2] sm:$0x1]
    %v188 = vlaneseq
    %v189 = vshrl.u32 %v188, 7
    %v190 = vsub.s32 0, %v189
    %v191 = vrot.slane %v186, %v190
    %v195 = vcombine.high %v40, %v40
    %v197 = vunpack.c.l.s4 1966171168
    %v198 = vunpack.c.0.s8 %v197
    %v199 = vlaneseq
    %v200 = vshrl.u32 %v199, 7
    %v201 = vsub.s32 %v198, %v200
    %v202 = vrot.slane %v40, %v201
    %v204 = vunpack.c.l.s4 1966171168
    %v205 = vunpack.c.0.s8 %v204
    %v206 = vlaneseq
    %v207 = vshrl.u32 %v206, 7
    %v208 = vsub.s32 %v205, %v207
    %v209 = vrot.slane %v195, %v208
    %v210 = vcombine.high %v202, %v202
    %v211 = vcombine.high %v209, %v209
    %v213 = vunpack.c.l.s4 1966171168
    %v214 = vunpack.c.0.s8 %v213
    %v215 = vlaneseq
    %v216 = vshrl.u32 %v215, 7
    %v217 = vsub.s32 %v214, %v216
    %v218 = vrot.slane %v202, %v217
    %v220 = vunpack.c.l.s4 1966171168
    %v221 = vunpack.c.0.s8 %v220
    %v222 = vlaneseq
    %v223 = vshrl.u32 %v222, 7
    %v224 = vsub.s32 %v221, %v223
    %v225 = vrot.slane %v209, %v224
    %v227 = vunpack.c.l.s4 1966171168
    %v228 = vunpack.c.0.s8 %v227
    %v229 = vlaneseq
    %v230 = vshrl.u32 %v229, 7
    %v231 = vsub.s32 %v228, %v230
    %v232 = vrot.slane %v210, %v231
    %v234 = vunpack.c.l.s4 1966171168
    %v235 = vunpack.c.0.s8 %v234
    %v236 = vlaneseq
    %v237 = vshrl.u32 %v236, 7
    %v238 = vsub.s32 %v235, %v237
    %v239 = vrot.slane %v211, %v238
    %v240 = vcombine.high %v218, %v218
    %v241 = vcombine.high %v225, %v225
    %v242 = vcombine.high %v232, %v232
    %v243 = vcombine.high %v239, %v239
    %v245 = vunpack.c.l.s4 1966171168
    %v246 = vunpack.c.0.s8 %v245
    %v247 = vlaneseq
    %v248 = vshrl.u32 %v247, 7
    %v249 = vsub.s32 %v246, %v248
    %v250 = vrot.slane %v41, %v249
    %v252 = vunpack.c.l.s4 1966171168
    %v253 = vunpack.c.0.s8 %v252
    %v254 = vlaneseq
    %v255 = vshrl.u32 %v254, 7
    %v256 = vsub.s32 %v253, %v255
    %v257 = vrot.slane %v250, %v256
    %v411 = vunpack.c.l.b16 %v42
    %v412 = vunpack.c.l.b16 %v43
    %v413 = vunpack.c.l.b16 %v44
    %v414 = vunpack.c.l.b16 %v45
    %v415 = vunpack.c.l.b16 %v46
    %v416 = vunpack.c.l.b16 %v47
    %v417 = vunpack.c.l.b16 %v48
    %v418 = vunpack.c.l.b16 %v49
    %v419 = vunpack.c.l.b16 %v50
    %v420 = vunpack.c.l.b16 %v51
    %v421 = vunpack.c.l.b16 %v52
    %v422 = vunpack.c.l.b16 %v53
    %v423 = vunpack.c.l.b16 %v54
    %v424 = vunpack.c.l.b16 %v55
    %v425 = vunpack.c.l.b16 %v56
    %v426 = vunpack.c.l.b16 %v57
    %v427 = vunpack.c.l.b16 %v58
    %v428 = vunpack.c.l.b16 %v59
    %v429 = vunpack.c.l.b16 %v60
    %v430 = vunpack.c.l.b16 %v61
    %v431 = vunpack.c.l.b16 %v62
    %v432 = vunpack.c.l.b16 %v63
    %v433 = vunpack.c.l.b16 %v64
    %v434 = vunpack.c.l.b16 %v65
    %v435 = vunpack.c.l.b16 %v66
    %v436 = vunpack.c.l.b16 %v67
    %v437 = vunpack.c.l.b16 %v68
    %v438 = vunpack.c.l.b16 %v69
    %v439 = vunpack.c.l.b16 %v70
    %v440 = vunpack.c.l.b16 %v71
    %v441 = vunpack.c.l.b16 %v72
    %v442 = vunpack.c.l.b16 %v73
    %v443 = vunpack.c.l.b16 %v74
    %v444 = vunpack.c.l.b16 %v75
    %v445 = vunpack.c.l.b16 %v76
    %v446 = vunpack.c.l.b16 %v77
    %v447 = vunpack.c.l.b16 %v78
    %v448 = vunpack.c.l.b16 %v79
    %v449 = vunpack.c.l.b16 %v80
    %v450 = vunpack.c.l.b16 %v81
    %v451 = vunpack.c.l.b16 %v82
    %v452 = vunpack.c.l.b16 %v83
    %v453 = vunpack.c.l.b16 %v84
    %v454 = vunpack.c.l.b16 %v85
    %v455 = vunpack.c.l.b16 %v86
    %v456 = vunpack.c.l.b16 %v87
    %v457 = vunpack.c.l.b16 %v88
    %v458 = vunpack.c.l.b16 %v89
    %v459 = vunpack.c.l.b16 %v90
    %v460 = vunpack.c.l.b16 %v91
    %v461 = vunpack.c.l.b16 %v92
    %v462 = vunpack.c.l.b16 %v93
    %v463 = vunpack.c.l.b16 %v94
    %v464 = vunpack.c.l.b16 %v95
    %v465 = vunpack.c.l.b16 %v96
    %v466 = vunpack.c.l.b16 %v97
    %v467 = vunpack.c.l.b16 %v98
    %v468 = vunpack.c.l.b16 %v99
    %v469 = vunpack.c.l.b16 %v100
    %v470 = vunpack.c.l.b16 %v101
    %v471 = vunpack.c.l.b16 %v102
    %v472 = vunpack.c.l.b16 %v103
    %v473 = vunpack.c.l.b16 %v104
    %v474 = vunpack.c.l.b16 %v105
    %v475 = vunpack.c.l.b16 %v106
    %v476 = vunpack.c.l.b16 %v107
    %v477 = vunpack.c.l.b16 %v108
    %v478 = vunpack.c.l.b16 %v109
    %v479 = vunpack.c.l.b16 %v110
    %v480 = vunpack.c.l.b16 %v111
    %v481 = vunpack.c.l.b16 %v112
    %v482 = vunpack.c.l.b16 %v113
    %v483 = vunpack.c.l.b16 %v114
    %v484 = vunpack.c.l.b16 %v115
    %v485 = vunpack.c.l.b16 %v116
    %v486 = vunpack.c.l.b16 %v117
    %v487 = vunpack.c.l.b16 %v118
    %v488 = vunpack.c.l.b16 %v119
    %v489 = vunpack.c.l.b16 %v120
    %v490 = vunpack.c.l.b16 %v121
    %v491 = vunpack.c.l.b16 %v122
    %v492 = vunpack.c.l.b16 %v123
    %v493 = vunpack.c.l.b16 %v124
    %v494 = vunpack.c.l.b16 %v125
    %v495 = vunpack.c.l.b16 %v126
    %v496 = vunpack.c.l.b16 %v127
    %v497 = vunpack.c.l.b16 %v128
    %v498 = vunpack.c.l.b16 %v129
    %v499 = vunpack.c.l.b16 %v130
    %v500 = vunpack.c.l.b16 %v131
    %v501 = vunpack.c.l.b16 %v132
    %v502 = vunpack.c.l.b16 %v133
    %v503 = vunpack.c.l.b16 %v134
    %v504 = vunpack.c.l.b16 %v135
    %v505 = vunpack.c.l.b16 %v136
    %v506 = vunpack.c.l.b16 %v137
    %v507 = vunpack.c.l.b16 %v138
    %v508 = vunpack.c.l.b16 %v139
    %v509 = vunpack.c.l.b16 %v140
    %v510 = vunpack.c.l.b16 %v141
    %v511 = vunpack.c.l.b16 %v142
    %v512 = vunpack.c.l.b16 %v143
    %v513 = vunpack.c.l.b16 %v144
    %v514 = vunpack.c.l.b16 %v145
    %v515 = vunpack.c.l.b16 %v146
    %v516 = vunpack.c.l.b16 %v147
    %v517 = vunpack.c.l.b16 %v148
    %v518 = vunpack.c.l.b16 %v149
    %v519 = vunpack.c.l.b16 %v150
    %v520 = vunpack.c.l.b16 %v151
    %v521 = vunpack.c.l.b16 %v152
    %v522 = vunpack.c.l.b16 %v153
    %v523 = vunpack.c.l.b16 %v154
    %v524 = vunpack.c.l.b16 %v155
    %v525 = vunpack.c.l.b16 %v156
    %v526 = vunpack.c.l.b16 %v157
    %v527 = vunpack.c.l.b16 %v158
    %v528 = vunpack.c.l.b16 %v159
    %v529 = vunpack.c.l.b16 %v160
    %v530 = vunpack.c.l.b16 %v161
    %v531 = vunpack.c.l.b16 %v162
    %v532 = vunpack.c.l.b16 %v163
    %v533 = vunpack.c.l.b16 %v164
    %v534 = vunpack.c.l.b16 %v165
    %v535 = vunpack.c.l.b16 %v166
    %v536 = vunpack.c.l.b16 %v167
    %v537 = vunpack.c.l.b16 %v168
    %v538 = vunpack.c.l.b16 %v169
    %v539 = vunpack.c.l.b16 %v170
    %v540 = vunpack.c.l.b16 %v171
    %v541 = vunpack.c.l.b16 %v172
    %v542 = vunpack.c.l.b16 %v173
    %v543 = vunpack.c.l.b16 %v174
    %v544 = vunpack.c.l.b16 %v175
    %v545 = vunpack.c.l.b16 %v176
    %v546 = vunpack.c.l.b16 %v177
    %v547 = vunpack.c.l.b16 %v178
    %v548 = vunpack.c.l.b16 %v179
    %v549 = vunpack.c.l.b16 %v180
    %v550 = vunpack.c.l.b16 %v181
    %v551 = vunpack.c.l.b16 %v182
    %v552 = vunpack.c.l.b16 %v183
    %v553 = vunpack.c.l.b16 %v184
    %v554 = vunpack.c.l.b16 %v185
    %v555 = vpack.c.b16 %v412, %v411
    %v556 = vpack.c.b16 %v414, %v413
    %v557 = vpack.c.b16 %v416, %v415
    %v558 = vpack.c.b16 %v418, %v417
    %v559 = vpack.c.b16 %v420, %v419
    %v560 = vpack.c.b16 %v422, %v421
    %v561 = vpack.c.b16 %v424, %v423
    %v562 = vpack.c.b16 %v426, %v425
    %v563 = vpack.c.b16 %v428, %v427
    %v564 = vpack.c.b16 %v430, %v429
    %v565 = vpack.c.b16 %v432, %v431
    %v566 = vpack.c.b16 %v434, %v433
    %v567 = vpack.c.b16 %v436, %v435
    %v568 = vpack.c.b16 %v438, %v437
    %v569 = vpack.c.b16 %v440, %v439
    %v570 = vpack.c.b16 %v442, %v441
    %v571 = vpack.c.b16 %v444, %v443
    %v572 = vpack.c.b16 %v446, %v445
    %v573 = vpack.c.b16 %v448, %v447
    %v574 = vpack.c.b16 %v450, %v449
    %v575 = vpack.c.b16 %v452, %v451
    %v576 = vpack.c.b16 %v454, %v453
    %v577 = vpack.c.b16 %v456, %v455
    %v578 = vpack.c.b16 %v458, %v457
    %v579 = vpack.c.b16 %v460, %v459
    %v580 = vpack.c.b16 %v462, %v461
    %v581 = vpack.c.b16 %v464, %v463
    %v582 = vpack.c.b16 %v466, %v465
    %v583 = vpack.c.b16 %v468, %v467
    %v584 = vpack.c.b16 %v470, %v469
    %v585 = vpack.c.b16 %v472, %v471
    %v586 = vpack.c.b16 %v474, %v473
    %v587 = vpack.c.b16 %v476, %v475
    %v588 = vpack.c.b16 %v478, %v477
    %v589 = vpack.c.b16 %v480, %v479
    %v590 = vpack.c.b16 %v482, %v481
    %v591 = vpack.c.b16 %v484, %v483
    %v592 = vpack.c.b16 %v486, %v485
    %v593 = vpack.c.b16 %v488, %v487
    %v594 = vpack.c.b16 %v490, %v489
    %v595 = vpack.c.b16 %v492, %v491
    %v596 = vpack.c.b16 %v494, %v493
    %v597 = vpack.c.b16 %v496, %v495
    %v598 = vpack.c.b16 %v498, %v497
    %v599 = vpack.c.b16 %v500, %v499
    %v600 = vpack.c.b16 %v502, %v501
    %v601 = vpack.c.b16 %v504, %v503
    %v602 = vpack.c.b16 %v506, %v505
    %v603 = vpack.c.b16 %v508, %v507
    %v604 = vpack.c.b16 %v510, %v509
    %v605 = vpack.c.b16 %v512, %v511
    %v606 = vpack.c.b16 %v514, %v513
    %v607 = vpack.c.b16 %v516, %v515
    %v608 = vpack.c.b16 %v518, %v517
    %v609 = vpack.c.b16 %v520, %v519
    %v610 = vpack.c.b16 %v522, %v521
    %v611 = vpack.c.b16 %v524, %v523
    %v612 = vpack.c.b16 %v526, %v525
    %v613 = vpack.c.b16 %v528, %v527
    %v614 = vpack.c.b16 %v530, %v529
    %v615 = vpack.c.b16 %v532, %v531
    %v616 = vpack.c.b16 %v534, %v533
    %v617 = vpack.c.b16 %v536, %v535
    %v618 = vpack.c.b16 %v538, %v537
    %v619 = vpack.c.b16 %v540, %v539
    %v620 = vpack.c.b16 %v542, %v541
    %v621 = vpack.c.b16 %v544, %v543
    %v622 = vpack.c.b16 %v546, %v545
    %v623 = vpack.c.b16 %v548, %v547
    %v624 = vpack.c.b16 %v550, %v549
    %v625 = vpack.c.b16 %v552, %v551
    %v626 = vpack.c.b16 %v554, %v553
    %699 = vmatprep.subr.bf16.mxu0 0
    %700 = vmatpush1.bf16.msra.mxu0 %v555
    %701 = vmatprep.subr.bf16.mxu0 0
    %702 = vmatpush1.bf16.msra.mxu0 %v556
    %703 = vmatprep.subr.bf16.mxu0 0
    %704 = vmatpush1.bf16.msra.mxu0 %v557
    %705 = vmatprep.subr.bf16.mxu0 0
    %706 = vmatpush1.bf16.msra.mxu0 %v558
    %707 = vmatprep.subr.bf16.mxu0 0
    %708 = vmatpush1.bf16.msra.mxu0 %v559
    %709 = vmatprep.subr.bf16.mxu0 0
    %710 = vmatpush1.bf16.msra.mxu0 %v560
    %711 = vmatprep.subr.bf16.mxu0 0
    %712 = vmatpush1.bf16.msra.mxu0 %v561
    %713 = vmatprep.subr.bf16.mxu0 0
    %714 = vmatpush1.bf16.msra.mxu0 %v562
    %715 = vmatprep.subr.bf16.mxu0 0
    %716 = vmatpush1.bf16.msra.mxu0 %v563
    %717 = vmatprep.subr.bf16.mxu0 0
    %718 = vmatpush1.bf16.msra.mxu0 %v564
    %719 = vmatprep.subr.bf16.mxu0 0
    %720 = vmatpush1.bf16.msra.mxu0 %v565
    %721 = vmatprep.subr.bf16.mxu0 0
    %722 = vmatpush1.bf16.msra.mxu0 %v566
    %723 = vmatprep.subr.bf16.mxu0 0
    %724 = vmatpush1.bf16.msra.mxu0 %v567
    %725 = vmatprep.subr.bf16.mxu0 0
    %726 = vmatpush1.bf16.msra.mxu0 %v568
    %727 = vmatprep.subr.bf16.mxu0 0
    %728 = vmatpush1.bf16.msra.mxu0 %v569
    %729 = vmatprep.subr.bf16.mxu0 0
    %730 = vmatpush1.bf16.msra.mxu0 %v570
    %731 = vmatprep.mubr.bf16.mxu0 %v232
    %732 = vmatmul.mubr.bf16.gmra.mrb[0].mxu0 %v218
    %v733 = vpop.f32.mrb[0].mxu0
    %v734 = vadd.f32 %v191, %v733
    %v735 = vpop.f32.mrb[0].mxu0
    %v736 = vpop.f32.mrb[0].mxu0
    %v737 = vpop.f32.mrb[0].mxu0
    %738 = vdwg.mxu0
    %739 = vmatprep.subr.bf16.mxu0 0
    %740 = vmatpush1.bf16.msra.mxu0 %v571
    %741 = vmatprep.subr.bf16.mxu0 0
    %742 = vmatpush1.bf16.msra.mxu0 %v572
    %743 = vmatprep.subr.bf16.mxu0 0
    %744 = vmatpush1.bf16.msra.mxu0 %v573
    %745 = vmatprep.subr.bf16.mxu0 0
    %746 = vmatpush1.bf16.msra.mxu0 %v574
    %747 = vmatprep.subr.bf16.mxu0 0
    %748 = vmatpush1.bf16.msra.mxu0 %v575
    %749 = vmatprep.subr.bf16.mxu0 0
    %750 = vmatpush1.bf16.msra.mxu0 %v576
    %751 = vmatprep.subr.bf16.mxu0 0
    %752 = vmatpush1.bf16.msra.mxu0 %v577
    %753 = vmatprep.subr.bf16.mxu0 0
    %754 = vmatpush1.bf16.msra.mxu0 %v578
    %755 = vmatprep.subr.bf16.mxu0 0
    %756 = vmatpush1.bf16.msra.mxu0 %v579
    %757 = vmatprep.subr.bf16.mxu0 0
    %758 = vmatpush1.bf16.msra.mxu0 %v580
    %759 = vmatprep.subr.bf16.mxu0 0
    %760 = vmatpush1.bf16.msra.mxu0 %v581
    %761 = vmatprep.subr.bf16.mxu0 0
    %762 = vmatpush1.bf16.msra.mxu0 %v582
    %763 = vmatprep.subr.bf16.mxu0 0
    %764 = vmatpush1.bf16.msra.mxu0 %v583
    %765 = vmatprep.subr.bf16.mxu0 0
    %766 = vmatpush1.bf16.msra.mxu0 %v584
    %767 = vmatprep.subr.bf16.mxu0 0
    %768 = vmatpush1.bf16.msra.mxu0 %v585
    %769 = vmatprep.subr.bf16.mxu0 0
    %770 = vmatpush1.bf16.msra.mxu0 %v586
    %771 = vmatprep.mubr.bf16.mxu0 %v242
    %772 = vmatmul.mubr.bf16.gmra.mrb[0].mxu0 %v240
    %v773 = vpop.f32.mrb[0].mxu0
    %v774 = vadd.f32 %v734, %v773
    %v775 = vpop.f32.mrb[0].mxu0
    %v776 = vpop.f32.mrb[0].mxu0
    %v777 = vpop.f32.mrb[0].mxu0
    %778 = vdwg.mxu0
    %779 = vmatprep.subr.bf16.mxu0 0
    %780 = vmatpush1.bf16.msra.mxu0 %v587
    %781 = vmatprep.subr.bf16.mxu0 0
    %782 = vmatpush1.bf16.msra.mxu0 %v588
    %783 = vmatprep.subr.bf16.mxu0 0
    %784 = vmatpush1.bf16.msra.mxu0 %v589
    %785 = vmatprep.subr.bf16.mxu0 0
    %786 = vmatpush1.bf16.msra.mxu0 %v590
    %787 = vmatprep.subr.bf16.mxu0 0
    %788 = vmatpush1.bf16.msra.mxu0 %v591
    %789 = vmatprep.subr.bf16.mxu0 0
    %790 = vmatpush1.bf16.msra.mxu0 %v592
    %791 = vmatprep.subr.bf16.mxu0 0
    %792 = vmatpush1.bf16.msra.mxu0 %v593
    %793 = vmatprep.subr.bf16.mxu0 0
    %794 = vmatpush1.bf16.msra.mxu0 %v594
    %795 = vmatprep.subr.bf16.mxu0 0
    %796 = vmatpush1.bf16.msra.mxu0 %v595
    %797 = vmatprep.subr.bf16.mxu0 0
    %798 = vmatpush1.bf16.msra.mxu0 %v596
    %799 = vmatprep.subr.bf16.mxu0 0
    %800 = vmatpush1.bf16.msra.mxu0 %v597
    %801 = vmatprep.subr.bf16.mxu0 0
    %802 = vmatpush1.bf16.msra.mxu0 %v598
    %803 = vmatprep.subr.bf16.mxu0 0
    %804 = vmatpush1.bf16.msra.mxu0 %v599
    %805 = vmatprep.subr.bf16.mxu0 0
    %806 = vmatpush1.bf16.msra.mxu0 %v600
    %807 = vmatprep.subr.bf16.mxu0 0
    %808 = vmatpush1.bf16.msra.mxu0 %v601
    %809 = vmatprep.subr.bf16.mxu0 0
    %810 = vmatpush1.bf16.msra.mxu0 %v602
    %811 = vmatprep.mubr.bf16.mxu0 %v239
    %812 = vmatmul.mubr.bf16.gmra.mrb[0].mxu0 %v225
    %v813 = vpop.f32.mrb[0].mxu0
    %v814 = vadd.f32 %v774, %v813
    %v815 = vpop.f32.mrb[0].mxu0
    %v816 = vpop.f32.mrb[0].mxu0
    %v817 = vpop.f32.mrb[0].mxu0
    %818 = vdwg.mxu0
    %819 = vmatprep.subr.bf16.mxu0 0
    %820 = vmatpush1.bf16.msra.mxu0 %v603
    %821 = vmatprep.subr.bf16.mxu0 0
    %822 = vmatpush1.bf16.msra.mxu0 %v604
    %823 = vmatprep.subr.bf16.mxu0 0
    %824 = vmatpush1.bf16.msra.mxu0 %v605
    %825 = vmatprep.subr.bf16.mxu0 0
    %826 = vmatpush1.bf16.msra.mxu0 %v606
    %827 = vmatprep.subr.bf16.mxu0 0
    %828 = vmatpush1.bf16.msra.mxu0 %v607
    %829 = vmatprep.subr.bf16.mxu0 0
    %830 = vmatpush1.bf16.msra.mxu0 %v608
    %831 = vmatprep.subr.bf16.mxu0 0
    %832 = vmatpush1.bf16.msra.mxu0 %v609
    %833 = vmatprep.subr.bf16.mxu0 0
    %834 = vmatpush1.bf16.msra.mxu0 %v610
    %835 = vmatprep.subr.bf16.mxu0 0
    %836 = vmatpush1.bf16.msra.mxu0 %v611
    %837 = vmatprep.subr.bf16.mxu0 0
    %838 = vmatpush1.bf16.msra.mxu0 %v612
    %839 = vmatprep.subr.bf16.mxu0 0
    %840 = vmatpush1.bf16.msra.mxu0 %v613
    %841 = vmatprep.subr.bf16.mxu0 0
    %842 = vmatpush1.bf16.msra.mxu0 %v614
    %843 = vmatprep.subr.bf16.mxu0 0
    %844 = vmatpush1.bf16.msra.mxu0 %v615
    %845 = vmatprep.subr.bf16.mxu0 0
    %846 = vmatpush1.bf16.msra.mxu0 %v616
    %847 = vmatprep.subr.bf16.mxu0 0
    %848 = vmatpush1.bf16.msra.mxu0 %v617
    %849 = vmatprep.subr.bf16.mxu0 0
    %850 = vmatpush1.bf16.msra.mxu0 %v618
    %851 = vmatprep.mubr.bf16.mxu0 %v243
    %852 = vmatmul.mubr.bf16.gmra.mrb[0].mxu0 %v241
    %v853 = vpop.f32.mrb[0].mxu0
    %v854 = vadd.f32 %v814, %v853
    %v855 = vpop.f32.mrb[0].mxu0
    %v856 = vpop.f32.mrb[0].mxu0
    %v857 = vpop.f32.mrb[0].mxu0
    %858 = vdwg.mxu0
    %859 = vmatprep.subr.bf16.mxu0 0
    %860 = vmatpush1.bf16.msra.mxu0 %v619
    %861 = vmatprep.subr.bf16.mxu0 0
    %862 = vmatpush1.bf16.msra.mxu0 %v620
    %863 = vmatprep.subr.bf16.mxu0 0
    %864 = vmatpush1.bf16.msra.mxu0 %v621
    %865 = vmatprep.subr.bf16.mxu0 0
    %866 = vmatpush1.bf16.msra.mxu0 %v622
    %867 = vmatprep.subr.bf16.mxu0 0
    %868 = vmatpush1.bf16.msra.mxu0 %v623
    %869 = vmatprep.subr.bf16.mxu0 0
    %870 = vmatpush1.bf16.msra.mxu0 %v624
    %871 = vmatprep.subr.bf16.mxu0 0
    %872 = vmatpush1.bf16.msra.mxu0 %v625
    %873 = vmatprep.subr.bf16.mxu0 0
    %874 = vmatpush1.bf16.msra.mxu0 %v626
    %875 = vmatprep.subr.bf16.mxu0 0
    %876 = vmatpush1.bf16.msra.mxu0 0
    %877 = vmatprep.subr.bf16.mxu0 0
    %878 = vmatpush1.bf16.msra.mxu0 0
    %879 = vmatprep.subr.bf16.mxu0 0
    %880 = vmatpush1.bf16.msra.mxu0 0
    %881 = vmatprep.subr.bf16.mxu0 0
    %882 = vmatpush1.bf16.msra.mxu0 0
    %883 = vmatprep.subr.bf16.mxu0 0
    %884 = vmatpush1.bf16.msra.mxu0 0
    %885 = vmatprep.subr.bf16.mxu0 0
    %886 = vmatpush1.bf16.msra.mxu0 0
    %887 = vmatprep.subr.bf16.mxu0 0
    %888 = vmatpush1.bf16.msra.mxu0 0
    %889 = vmatprep.subr.bf16.mxu0 0
    %890 = vmatpush1.bf16.msra.mxu0 0
    %891 = vmatprep.mubr.bf16.mxu0 0
    %892 = vmatmul.mubr.bf16.gmra.mrb[0].mxu0 %v257
    %v893 = vpop.f32.mrb[0].mxu0
    %v894 = vadd.f32 %v854, %v893
    %v895 = vpop.f32.mrb[0].mxu0
    %v896 = vpop.f32.mrb[0].mxu0
    %v897 = vpop.f32.mrb[0].mxu0
    %898 = vdwg.mxu0
    %v899 = vmax.f32 %v894, 0.0
    %v900 = vpack.c.bf16 %v899, %v899
    %v901 = vld [vmem:[%s3] sm:$0xf]
    %v902 = vld [vmem:[%s3 + $0x4] sm:$0xf]
    %v903 = vld [vmem:[%s3 + $0x8] sm:$0xf]
    %v904 = vld [vmem:[%s3 + $0xc] sm:$0xf]
    %v905 = vld [vmem:[%s3 + $0x10] sm:$0xf]
    %v906 = vld [vmem:[%s3 + $0x14] sm:$0xf]
    %v907 = vld [vmem:[%s3 + $0x18] sm:$0xf]
    %v908 = vld [vmem:[%s3 + $0x1c] sm:$0xf]
    %v909 = vld [vmem:[%s3 + $0x20] sm:$0xf]
    %v910 = vld [vmem:[%s3 + $0x24] sm:$0xf]
    %v911 = vld [vmem:[%s3 + $0x28] sm:$0xf]
    %v912 = vld [vmem:[%s3 + $0x2c] sm:$0xf]
    %v913 = vld [vmem:[%s3 + $0x30] sm:$0xf]
    %v914 = vld [vmem:[%s3 + $0x34] sm:$0xf]
    %v915 = vld [vmem:[%s3 + $0x38] sm:$0xf]
    %v916 = vld [vmem:[%s3 + $0x3c] sm:$0xf]
    %v917 = vld [vmem:[%s4] sm:$0x1]
    %v919 = vlaneseq
    %v920 = vshrl.u32 %v919, 7
    %v921 = vsub.s32 0, %v920
    %v922 = vrot.slane %v917, %v921
    %v940 = vunpack.c.l.b16 %v901
    %v941 = vunpack.c.l.b16 %v902
    %v942 = vunpack.c.l.b16 %v903
    %v943 = vunpack.c.l.b16 %v904
    %v944 = vunpack.c.l.b16 %v905
    %v945 = vunpack.c.l.b16 %v906
    %v946 = vunpack.c.l.b16 %v907
    %v947 = vunpack.c.l.b16 %v908
    %v948 = vunpack.c.l.b16 %v909
    %v949 = vunpack.c.l.b16 %v910
    %v950 = vunpack.c.l.b16 %v911
    %v951 = vunpack.c.l.b16 %v912
    %v952 = vunpack.c.l.b16 %v913
    %v953 = vunpack.c.l.b16 %v914
    %v954 = vunpack.c.l.b16 %v915
    %v955 = vunpack.c.l.b16 %v916
    %v956 = vpack.c.b16 %v941, %v940
    %v957 = vpack.c.b16 %v943, %v942
    %v958 = vpack.c.b16 %v945, %v944
    %v959 = vpack.c.b16 %v947, %v946
    %v960 = vpack.c.b16 %v949, %v948
    %v961 = vpack.c.b16 %v951, %v950
    %v962 = vpack.c.b16 %v953, %v952
    %v963 = vpack.c.b16 %v955, %v954
    %972 = vmatprep.subr.bf16.mxu0 0
    %973 = vmatpush1.bf16.msra.mxu0 %v956
    %974 = vmatprep.subr.bf16.mxu0 0
    %975 = vmatpush1.bf16.msra.mxu0 %v957
    %976 = vmatprep.subr.bf16.mxu0 0
    %977 = vmatpush1.bf16.msra.mxu0 %v958
    %978 = vmatprep.subr.bf16.mxu0 0
    %979 = vmatpush1.bf16.msra.mxu0 %v959
    %980 = vmatprep.subr.bf16.mxu0 0
    %981 = vmatpush1.bf16.msra.mxu0 %v960
    %982 = vmatprep.subr.bf16.mxu0 0
    %983 = vmatpush1.bf16.msra.mxu0 %v961
    %984 = vmatprep.subr.bf16.mxu0 0
    %985 = vmatpush1.bf16.msra.mxu0 %v962
    %986 = vmatprep.subr.bf16.mxu0 0
    %987 = vmatpush1.bf16.msra.mxu0 %v963
    %988 = vmatprep.subr.bf16.mxu0 0
    %989 = vmatpush1.bf16.msra.mxu0 0
    %990 = vmatprep.subr.bf16.mxu0 0
    %991 = vmatpush1.bf16.msra.mxu0 0
    %992 = vmatprep.subr.bf16.mxu0 0
    %993 = vmatpush1.bf16.msra.mxu0 0
    %994 = vmatprep.subr.bf16.mxu0 0
    %995 = vmatpush1.bf16.msra.mxu0 0
    %996 = vmatprep.subr.bf16.mxu0 0
    %997 = vmatpush1.bf16.msra.mxu0 0
    %998 = vmatprep.subr.bf16.mxu0 0
    %999 = vmatpush1.bf16.msra.mxu0 0
    %1000 = vmatprep.subr.bf16.mxu0 0
    %1001 = vmatpush1.bf16.msra.mxu0 0
    %1002 = vmatprep.subr.bf16.mxu0 0
    %1003 = vmatpush1.bf16.msra.mxu0 0
    %1004 = vmatprep.mubr.bf16.mxu0 0
    %1005 = vmatmul.mubr.bf16.gmra.mrb[0].mxu0 %v900
    %v1006 = vpop.f32.mrb[0].mxu0
    %v1007 = vadd.f32 %v922, %v1006
    %v1008 = vpop.f32.mrb[0].mxu0
    %v1009 = vpop.f32.mrb[0].mxu0
    %v1010 = vpop.f32.mrb[0].mxu0
    %1011 = vdwg.mxu0
    %v1012 = vmax.f32 %v1007, 0.0
    %v1013 = vpack.c.bf16 %v1012, %v1012
    %v1014 = vld [vmem:[%s5] sm:$0xff]
    %v1015 = vld [vmem:[%s5 + $0x8] sm:$0xff]
    %v1016 = vld [vmem:[%s5 + $0x10] sm:$0xff]
    %v1017 = vld [vmem:[%s5 + $0x18] sm:$0xff]
    %v1018 = vld [vmem:[%s5 + $0x20] sm:$0xff]
    %v1019 = vld [vmem:[%s5 + $0x28] sm:$0xff]
    %v1020 = vld [vmem:[%s5 + $0x30] sm:$0xff]
    %v1021 = vld [vmem:[%s5 + $0x38] sm:$0xff]
    %v1022 = vld [vmem:[%s5 + $0x40] sm:$0xff]
    %v1023 = vld [vmem:[%s5 + $0x48] sm:$0xff]
    %v1024 = vld [vmem:[%s5 + $0x50] sm:$0xff]
    %v1025 = vld [vmem:[%s5 + $0x58] sm:$0xff]
    %v1026 = vld [vmem:[%s5 + $0x60] sm:$0xff]
    %v1027 = vld [vmem:[%s5 + $0x68] sm:$0xff]
    %v1028 = vld [vmem:[%s5 + $0x70] sm:$0xff]
    %v1029 = vld [vmem:[%s5 + $0x78] sm:$0xff]
    %v1030 = vld [vmem:[%s5 + $0x80] sm:$0xff]
    %v1031 = vld [vmem:[%s5 + $0x88] sm:$0xff]
    %v1032 = vld [vmem:[%s5 + $0x90] sm:$0xff]
    %v1033 = vld [vmem:[%s5 + $0x98] sm:$0xff]
    %v1034 = vld [vmem:[%s5 + $0xa0] sm:$0xff]
    %v1035 = vld [vmem:[%s5 + $0xa8] sm:$0xff]
    %v1036 = vld [vmem:[%s5 + $0xb0] sm:$0xff]
    %v1037 = vld [vmem:[%s5 + $0xb8] sm:$0xff]
    %v1038 = vld [vmem:[%s5 + $0xc0] sm:$0xff]
    %v1039 = vld [vmem:[%s5 + $0xc8] sm:$0xff]
    %v1040 = vld [vmem:[%s5 + $0xd0] sm:$0xff]
    %v1041 = vld [vmem:[%s5 + $0xd8] sm:$0xff]
    %v1042 = vld [vmem:[%s5 + $0xe0] sm:$0xff]
    %v1043 = vld [vmem:[%s5 + $0xe8] sm:$0xff]
    %v1044 = vld [vmem:[%s5 + $0xf0] sm:$0xff]
    %v1045 = vld [vmem:[%s5 + $0xf8] sm:$0xff]
    %v1046 = vld [vmem:[%s6] sm:$0xf]
    %v1048 = vlaneseq
    %v1049 = vshrl.u32 %v1048, 7
    %v1050 = vsub.s32 0, %v1049
    %v1051 = vrot.slane %v1046, %v1050
    %v1052 = vlaneseq
    %v1053 = vshrl.u32 %v1052, 7
    %v1054 = vsub.s32 1, %v1053
    %v1055 = vrot.slane %v1046, %v1054
    %v1056 = vlaneseq
    %v1057 = vshrl.u32 %v1056, 7
    %v1058 = vsub.s32 2, %v1057
    %v1059 = vrot.slane %v1046, %v1058
    %v1060 = vlaneseq
    %v1061 = vshrl.u32 %v1060, 7
    %v1062 = vsub.s32 3, %v1061
    %v1063 = vrot.slane %v1046, %v1062
    %v1100 = vunpack.c.l.b16 %v1014
    %v1101 = vunpack.c.h.b16 %v1014
    %v1102 = vunpack.c.l.b16 %v1015
    %v1103 = vunpack.c.h.b16 %v1015
    %v1104 = vunpack.c.l.b16 %v1016
    %v1105 = vunpack.c.h.b16 %v1016
    %v1106 = vunpack.c.l.b16 %v1017
    %v1107 = vunpack.c.h.b16 %v1017
    %v1108 = vunpack.c.l.b16 %v1018
    %v1109 = vunpack.c.h.b16 %v1018
    %v1110 = vunpack.c.l.b16 %v1019
    %v1111 = vunpack.c.h.b16 %v1019
    %v1112 = vunpack.c.l.b16 %v1020
    %v1113 = vunpack.c.h.b16 %v1020
    %v1114 = vunpack.c.l.b16 %v1021
    %v1115 = vunpack.c.h.b16 %v1021
    %v1116 = vunpack.c.l.b16 %v1022
    %v1117 = vunpack.c.h.b16 %v1022
    %v1118 = vunpack.c.l.b16 %v1023
    %v1119 = vunpack.c.h.b16 %v1023
    %v1120 = vunpack.c.l.b16 %v1024
    %v1121 = vunpack.c.h.b16 %v1024
    %v1122 = vunpack.c.l.b16 %v1025
    %v1123 = vunpack.c.h.b16 %v1025
    %v1124 = vunpack.c.l.b16 %v1026
    %v1125 = vunpack.c.h.b16 %v1026
    %v1126 = vunpack.c.l.b16 %v1027
    %v1127 = vunpack.c.h.b16 %v1027
    %v1128 = vunpack.c.l.b16 %v1028
    %v1129 = vunpack.c.h.b16 %v1028
    %v1130 = vunpack.c.l.b16 %v1029
    %v1131 = vunpack.c.h.b16 %v1029
    %v1132 = vunpack.c.l.b16 %v1030
    %v1133 = vunpack.c.h.b16 %v1030
    %v1134 = vunpack.c.l.b16 %v1031
    %v1135 = vunpack.c.h.b16 %v1031
    %v1136 = vunpack.c.l.b16 %v1032
    %v1137 = vunpack.c.h.b16 %v1032
    %v1138 = vunpack.c.l.b16 %v1033
    %v1139 = vunpack.c.h.b16 %v1033
    %v1140 = vunpack.c.l.b16 %v1034
    %v1141 = vunpack.c.h.b16 %v1034
    %v1142 = vunpack.c.l.b16 %v1035
    %v1143 = vunpack.c.h.b16 %v1035
    %v1144 = vunpack.c.l.b16 %v1036
    %v1145 = vunpack.c.h.b16 %v1036
    %v1146 = vunpack.c.l.b16 %v1037
    %v1147 = vunpack.c.h.b16 %v1037
    %v1148 = vunpack.c.l.b16 %v1038
    %v1149 = vunpack.c.h.b16 %v1038
    %v1150 = vunpack.c.l.b16 %v1039
    %v1151 = vunpack.c.h.b16 %v1039
    %v1152 = vunpack.c.l.b16 %v1040
    %v1153 = vunpack.c.h.b16 %v1040
    %v1154 = vunpack.c.l.b16 %v1041
    %v1155 = vunpack.c.h.b16 %v1041
    %v1156 = vunpack.c.l.b16 %v1042
    %v1157 = vunpack.c.h.b16 %v1042
    %v1158 = vunpack.c.l.b16 %v1043
    %v1159 = vunpack.c.h.b16 %v1043
    %v1160 = vunpack.c.l.b16 %v1044
    %v1161 = vunpack.c.h.b16 %v1044
    %v1162 = vunpack.c.l.b16 %v1045
    %v1163 = vunpack.c.h.b16 %v1045
    %v1164 = vpack.c.b16 %v1104, %v1100
    %v1165 = vpack.c.b16 %v1105, %v1101
    %v1166 = vpack.c.b16 %v1106, %v1102
    %v1167 = vpack.c.b16 %v1107, %v1103
    %v1168 = vpack.c.b16 %v1112, %v1108
    %v1169 = vpack.c.b16 %v1113, %v1109
    %v1170 = vpack.c.b16 %v1114, %v1110
    %v1171 = vpack.c.b16 %v1115, %v1111
    %v1172 = vpack.c.b16 %v1120, %v1116
    %v1173 = vpack.c.b16 %v1121, %v1117
    %v1174 = vpack.c.b16 %v1122, %v1118
    %v1175 = vpack.c.b16 %v1123, %v1119
    %v1176 = vpack.c.b16 %v1128, %v1124
    %v1177 = vpack.c.b16 %v1129, %v1125
    %v1178 = vpack.c.b16 %v1130, %v1126
    %v1179 = vpack.c.b16 %v1131, %v1127
    %v1180 = vpack.c.b16 %v1136, %v1132
    %v1181 = vpack.c.b16 %v1137, %v1133
    %v1182 = vpack.c.b16 %v1138, %v1134
    %v1183 = vpack.c.b16 %v1139, %v1135
    %v1184 = vpack.c.b16 %v1144, %v1140
    %v1185 = vpack.c.b16 %v1145, %v1141
    %v1186 = vpack.c.b16 %v1146, %v1142
    %v1187 = vpack.c.b16 %v1147, %v1143
    %v1188 = vpack.c.b16 %v1152, %v1148
    %v1189 = vpack.c.b16 %v1153, %v1149
    %v1190 = vpack.c.b16 %v1154, %v1150
    %v1191 = vpack.c.b16 %v1155, %v1151
    %v1192 = vpack.c.b16 %v1160, %v1156
    %v1193 = vpack.c.b16 %v1161, %v1157
    %v1194 = vpack.c.b16 %v1162, %v1158
    %v1195 = vpack.c.b16 %v1163, %v1159
    %1228 = vmatprep.subr.bf16.mxu0 %v1165
    %1229 = vmatpush1.bf16.msra.mxu0 %v1164
    %1230 = vmatprep.subr.bf16.mxu0 %v1169
    %1231 = vmatpush1.bf16.msra.mxu0 %v1168
    %1232 = vmatprep.subr.bf16.mxu0 %v1173
    %1233 = vmatpush1.bf16.msra.mxu0 %v1172
    %1234 = vmatprep.subr.bf16.mxu0 %v1177
    %1235 = vmatpush1.bf16.msra.mxu0 %v1176
    %1236 = vmatprep.subr.bf16.mxu0 %v1181
    %1237 = vmatpush1.bf16.msra.mxu0 %v1180
    %1238 = vmatprep.subr.bf16.mxu0 %v1185
    %1239 = vmatpush1.bf16.msra.mxu0 %v1184
    %1240 = vmatprep.subr.bf16.mxu0 %v1189
    %1241 = vmatpush1.bf16.msra.mxu0 %v1188
    %1242 = vmatprep.subr.bf16.mxu0 %v1193
    %1243 = vmatpush1.bf16.msra.mxu0 %v1192
    %1244 = vmatprep.subr.bf16.mxu0 0
    %1245 = vmatpush1.bf16.msra.mxu0 0
    %1246 = vmatprep.subr.bf16.mxu0 0
    %1247 = vmatpush1.bf16.msra.mxu0 0
    %1248 = vmatprep.subr.bf16.mxu0 0
    %1249 = vmatpush1.bf16.msra.mxu0 0
    %1250 = vmatprep.subr.bf16.mxu0 0
    %1251 = vmatpush1.bf16.msra.mxu0 0
    %1252 = vmatprep.subr.bf16.mxu0 0
    %1253 = vmatpush1.bf16.msra.mxu0 0
    %1254 = vmatprep.subr.bf16.mxu0 0
    %1255 = vmatpush1.bf16.msra.mxu0 0
    %1256 = vmatprep.subr.bf16.mxu0 0
    %1257 = vmatpush1.bf16.msra.mxu0 0
    %1258 = vmatprep.subr.bf16.mxu0 0
    %1259 = vmatpush1.bf16.msra.mxu0 0
    %1260 = vmatprep.mubr.bf16.mxu0 0
    %1261 = vmatmul.mubr.bf16.gmra.mrb[0].mxu0 %v1013
    %v1262 = vpop.f32.mrb[0].mxu0
    %v1263 = vadd.f32 %v1051, %v1262
    %v1264 = vpop.f32.mrb[0].mxu0
    %v1265 = vadd.f32 %v1055, %v1264
    %v1266 = vpop.f32.mrb[0].mxu0
    %v1267 = vpop.f32.mrb[0].mxu0
    %1268 = vdwg.mxu0
    %1269 = vmatprep.subr.bf16.mxu0 %v1167
    %1270 = vmatpush1.bf16.msra.mxu0 %v1166
    %1271 = vmatprep.subr.bf16.mxu0 %v1171
    %1272 = vmatpush1.bf16.msra.mxu0 %v1170
    %1273 = vmatprep.subr.bf16.mxu0 %v1175
    %1274 = vmatpush1.bf16.msra.mxu0 %v1174
    %1275 = vmatprep.subr.bf16.mxu0 %v1179
    %1276 = vmatpush1.bf16.msra.mxu0 %v1178
    %1277 = vmatprep.subr.bf16.mxu0 %v1183
    %1278 = vmatpush1.bf16.msra.mxu0 %v1182
    %1279 = vmatprep.subr.bf16.mxu0 %v1187
    %1280 = vmatpush1.bf16.msra.mxu0 %v1186
    %1281 = vmatprep.subr.bf16.mxu0 %v1191
    %1282 = vmatpush1.bf16.msra.mxu0 %v1190
    %1283 = vmatprep.subr.bf16.mxu0 %v1195
    %1284 = vmatpush1.bf16.msra.mxu0 %v1194
    %1285 = vmatprep.subr.bf16.mxu0 0
    %1286 = vmatpush1.bf16.msra.mxu0 0
    %1287 = vmatprep.subr.bf16.mxu0 0
    %1288 = vmatpush1.bf16.msra.mxu0 0
    %1289 = vmatprep.subr.bf16.mxu0 0
    %1290 = vmatpush1.bf16.msra.mxu0 0
    %1291 = vmatprep.subr.bf16.mxu0 0
    %1292 = vmatpush1.bf16.msra.mxu0 0
    %1293 = vmatprep.subr.bf16.mxu0 0
    %1294 = vmatpush1.bf16.msra.mxu0 0
    %1295 = vmatprep.subr.bf16.mxu0 0
    %1296 = vmatpush1.bf16.msra.mxu0 0
    %1297 = vmatprep.subr.bf16.mxu0 0
    %1298 = vmatpush1.bf16.msra.mxu0 0
    %1299 = vmatprep.subr.bf16.mxu0 0
    %1300 = vmatpush1.bf16.msra.mxu0 0
    %1301 = vmatprep.mubr.bf16.mxu0 0
    %1302 = vmatmul.mubr.bf16.gmra.mrb[0].mxu0 %v1013
    %v1303 = vpop.f32.mrb[0].mxu0
    %v1304 = vadd.f32 %v1059, %v1303
    %v1305 = vpop.f32.mrb[0].mxu0
    %v1306 = vadd.f32 %v1063, %v1305
    %v1307 = vpop.f32.mrb[0].mxu0
    %v1308 = vpop.f32.mrb[0].mxu0
    %1309 = vdwg.mxu0
    %v1310 = vmax.f32 %v1263, 0.0
    %v1311 = vmax.f32 %v1265, 0.0
    %v1312 = vmax.f32 %v1304, 0.0
    %v1313 = vmax.f32 %v1306, 0.0
    %v1314 = vpack.c.bf16 %v1310, %v1310
    %v1315 = vpack.c.bf16 %v1311, %v1311
    %v1316 = vpack.c.bf16 %v1312, %v1312
    %v1317 = vpack.c.bf16 %v1313, %v1313
    %v1318 = vld [vmem:[%s7] sm:$0xff]
    %v1319 = vld [vmem:[%s7 + $0x8] sm:$0xff]
    %v1320 = vld [vmem:[%s7 + $0x10] sm:$0xff]
    %v1321 = vld [vmem:[%s7 + $0x18] sm:$0xff]
    %v1322 = vld [vmem:[%s7 + $0x20] sm:$0xff]
    %v1323 = vld [vmem:[%s7 + $0x28] sm:$0xff]
    %v1324 = vld [vmem:[%s7 + $0x30] sm:$0xff]
    %v1325 = vld [vmem:[%s7 + $0x38] sm:$0xff]
    %v1326 = vld [vmem:[%s7 + $0x40] sm:$0xff]
    %v1327 = vld [vmem:[%s7 + $0x48] sm:$0xff]
    %v1328 = vld [vmem:[%s7 + $0x50] sm:$0xff]
    %v1329 = vld [vmem:[%s7 + $0x58] sm:$0xff]
    %v1330 = vld [vmem:[%s7 + $0x60] sm:$0xff]
    %v1331 = vld [vmem:[%s7 + $0x68] sm:$0xff]
    %v1332 = vld [vmem:[%s7 + $0x70] sm:$0xff]
    %v1333 = vld [vmem:[%s7 + $0x78] sm:$0xff]
    %v1334 = vld [vmem:[%s7 + $0x80] sm:$0xff]
    %v1335 = vld [vmem:[%s7 + $0x88] sm:$0xff]
    %v1336 = vld [vmem:[%s7 + $0x90] sm:$0xff]
    %v1337 = vld [vmem:[%s7 + $0x98] sm:$0xff]
    %v1338 = vld [vmem:[%s7 + $0xa0] sm:$0xff]
    %v1339 = vld [vmem:[%s7 + $0xa8] sm:$0xff]
    %v1340 = vld [vmem:[%s7 + $0xb0] sm:$0xff]
    %v1341 = vld [vmem:[%s7 + $0xb8] sm:$0xff]
    %v1342 = vld [vmem:[%s7 + $0xc0] sm:$0xff]
    %v1343 = vld [vmem:[%s7 + $0xc8] sm:$0xff]
    %v1344 = vld [vmem:[%s7 + $0xd0] sm:$0xff]
    %v1345 = vld [vmem:[%s7 + $0xd8] sm:$0xff]
    %v1346 = vld [vmem:[%s7 + $0xe0] sm:$0xff]
    %v1347 = vld [vmem:[%s7 + $0xe8] sm:$0xff]
    %v1348 = vld [vmem:[%s7 + $0xf0] sm:$0xff]
    %v1349 = vld [vmem:[%s7 + $0xf8] sm:$0xff]
    %v1350 = vld [vmem:[%s7 + $0x100] sm:$0xff]
    %v1351 = vld [vmem:[%s7 + $0x108] sm:$0xff]
    %v1352 = vld [vmem:[%s7 + $0x110] sm:$0xff]
    %v1353 = vld [vmem:[%s7 + $0x118] sm:$0xff]
    %v1354 = vld [vmem:[%s7 + $0x120] sm:$0xff]
    %v1355 = vld [vmem:[%s7 + $0x128] sm:$0xff]
    %v1356 = vld [vmem:[%s7 + $0x130] sm:$0xff]
    %v1357 = vld [vmem:[%s7 + $0x138] sm:$0xff]
    %v1358 = vld [vmem:[%s7 + $0x140] sm:$0xff]
    %v1359 = vld [vmem:[%s7 + $0x148] sm:$0xff]
    %v1360 = vld [vmem:[%s7 + $0x150] sm:$0xff]
    %v1361 = vld [vmem:[%s7 + $0x158] sm:$0xff]
    %v1362 = vld [vmem:[%s7 + $0x160] sm:$0xff]
    %v1363 = vld [vmem:[%s7 + $0x168] sm:$0xff]
    %v1364 = vld [vmem:[%s7 + $0x170] sm:$0xff]
    %v1365 = vld [vmem:[%s7 + $0x178] sm:$0xff]
    %v1366 = vld [vmem:[%s7 + $0x180] sm:$0xff]
    %v1367 = vld [vmem:[%s7 + $0x188] sm:$0xff]
    %v1368 = vld [vmem:[%s7 + $0x190] sm:$0xff]
    %v1369 = vld [vmem:[%s7 + $0x198] sm:$0xff]
    %v1370 = vld [vmem:[%s7 + $0x1a0] sm:$0xff]
    %v1371 = vld [vmem:[%s7 + $0x1a8] sm:$0xff]
    %v1372 = vld [vmem:[%s7 + $0x1b0] sm:$0xff]
    %v1373 = vld [vmem:[%s7 + $0x1b8] sm:$0xff]
    %v1374 = vld [vmem:[%s7 + $0x1c0] sm:$0xff]
    %v1375 = vld [vmem:[%s7 + $0x1c8] sm:$0xff]
    %v1376 = vld [vmem:[%s7 + $0x1d0] sm:$0xff]
    %v1377 = vld [vmem:[%s7 + $0x1d8] sm:$0xff]
    %v1378 = vld [vmem:[%s7 + $0x1e0] sm:$0xff]
    %v1379 = vld [vmem:[%s7 + $0x1e8] sm:$0xff]
    %v1380 = vld [vmem:[%s7 + $0x1f0] sm:$0xff]
    %v1381 = vld [vmem:[%s7 + $0x1f8] sm:$0xff]
    %v1382 = vld [vmem:[%s8] sm:$0x3]
    %v1384 = vlaneseq
    %v1385 = vshrl.u32 %v1384, 7
    %v1386 = vsub.s32 0, %v1385
    %v1387 = vrot.slane %v1382, %v1386
    %v1388 = vlaneseq
    %v1389 = vshrl.u32 %v1388, 7
    %v1390 = vsub.s32 1, %v1389
    %v1391 = vrot.slane %v1382, %v1390
    %v1458 = vunpack.c.l.b16 %v1318
    %v1459 = vunpack.c.h.b16 %v1318
    %v1460 = vunpack.c.l.b16 %v1319
    %v1461 = vunpack.c.h.b16 %v1319
    %v1462 = vunpack.c.l.b16 %v1320
    %v1463 = vunpack.c.h.b16 %v1320
    %v1464 = vunpack.c.l.b16 %v1321
    %v1465 = vunpack.c.h.b16 %v1321
    %v1466 = vunpack.c.l.b16 %v1322
    %v1467 = vunpack.c.h.b16 %v1322
    %v1468 = vunpack.c.l.b16 %v1323
    %v1469 = vunpack.c.h.b16 %v1323
    %v1470 = vunpack.c.l.b16 %v1324
    %v1471 = vunpack.c.h.b16 %v1324
    %v1472 = vunpack.c.l.b16 %v1325
    %v1473 = vunpack.c.h.b16 %v1325
    %v1474 = vunpack.c.l.b16 %v1326
    %v1475 = vunpack.c.h.b16 %v1326
    %v1476 = vunpack.c.l.b16 %v1327
    %v1477 = vunpack.c.h.b16 %v1327
    %v1478 = vunpack.c.l.b16 %v1328
    %v1479 = vunpack.c.h.b16 %v1328
    %v1480 = vunpack.c.l.b16 %v1329
    %v1481 = vunpack.c.h.b16 %v1329
    %v1482 = vunpack.c.l.b16 %v1330
    %v1483 = vunpack.c.h.b16 %v1330
    %v1484 = vunpack.c.l.b16 %v1331
    %v1485 = vunpack.c.h.b16 %v1331
    %v1486 = vunpack.c.l.b16 %v1332
    %v1487 = vunpack.c.h.b16 %v1332
    %v1488 = vunpack.c.l.b16 %v1333
    %v1489 = vunpack.c.h.b16 %v1333
    %v1490 = vunpack.c.l.b16 %v1334
    %v1491 = vunpack.c.h.b16 %v1334
    %v1492 = vunpack.c.l.b16 %v1335
    %v1493 = vunpack.c.h.b16 %v1335
    %v1494 = vunpack.c.l.b16 %v1336
    %v1495 = vunpack.c.h.b16 %v1336
    %v1496 = vunpack.c.l.b16 %v1337
    %v1497 = vunpack.c.h.b16 %v1337
    %v1498 = vunpack.c.l.b16 %v1338
    %v1499 = vunpack.c.h.b16 %v1338
    %v1500 = vunpack.c.l.b16 %v1339
    %v1501 = vunpack.c.h.b16 %v1339
    %v1502 = vunpack.c.l.b16 %v1340
    %v1503 = vunpack.c.h.b16 %v1340
    %v1504 = vunpack.c.l.b16 %v1341
    %v1505 = vunpack.c.h.b16 %v1341
    %v1506 = vunpack.c.l.b16 %v1342
    %v1507 = vunpack.c.h.b16 %v1342
    %v1508 = vunpack.c.l.b16 %v1343
    %v1509 = vunpack.c.h.b16 %v1343
    %v1510 = vunpack.c.l.b16 %v1344
    %v1511 = vunpack.c.h.b16 %v1344
    %v1512 = vunpack.c.l.b16 %v1345
    %v1513 = vunpack.c.h.b16 %v1345
    %v1514 = vunpack.c.l.b16 %v1346
    %v1515 = vunpack.c.h.b16 %v1346
    %v1516 = vunpack.c.l.b16 %v1347
    %v1517 = vunpack.c.h.b16 %v1347
    %v1518 = vunpack.c.l.b16 %v1348
    %v1519 = vunpack.c.h.b16 %v1348
    %v1520 = vunpack.c.l.b16 %v1349
    %v1521 = vunpack.c.h.b16 %v1349
    %v1522 = vunpack.c.l.b16 %v1350
    %v1523 = vunpack.c.h.b16 %v1350
    %v1524 = vunpack.c.l.b16 %v1351
    %v1525 = vunpack.c.h.b16 %v1351
    %v1526 = vunpack.c.l.b16 %v1352
    %v1527 = vunpack.c.h.b16 %v1352
    %v1528 = vunpack.c.l.b16 %v1353
    %v1529 = vunpack.c.h.b16 %v1353
    %v1530 = vunpack.c.l.b16 %v1354
    %v1531 = vunpack.c.h.b16 %v1354
    %v1532 = vunpack.c.l.b16 %v1355
    %v1533 = vunpack.c.h.b16 %v1355
    %v1534 = vunpack.c.l.b16 %v1356
    %v1535 = vunpack.c.h.b16 %v1356
    %v1536 = vunpack.c.l.b16 %v1357
    %v1537 = vunpack.c.h.b16 %v1357
    %v1538 = vunpack.c.l.b16 %v1358
    %v1539 = vunpack.c.h.b16 %v1358
    %v1540 = vunpack.c.l.b16 %v1359
    %v1541 = vunpack.c.h.b16 %v1359
    %v1542 = vunpack.c.l.b16 %v1360
    %v1543 = vunpack.c.h.b16 %v1360
    %v1544 = vunpack.c.l.b16 %v1361
    %v1545 = vunpack.c.h.b16 %v1361
    %v1546 = vunpack.c.l.b16 %v1362
    %v1547 = vunpack.c.h.b16 %v1362
    %v1548 = vunpack.c.l.b16 %v1363
    %v1549 = vunpack.c.h.b16 %v1363
    %v1550 = vunpack.c.l.b16 %v1364
    %v1551 = vunpack.c.h.b16 %v1364
    %v1552 = vunpack.c.l.b16 %v1365
    %v1553 = vunpack.c.h.b16 %v1365
    %v1554 = vunpack.c.l.b16 %v1366
    %v1555 = vunpack.c.h.b16 %v1366
    %v1556 = vunpack.c.l.b16 %v1367
    %v1557 = vunpack.c.h.b16 %v1367
    %v1558 = vunpack.c.l.b16 %v1368
    %v1559 = vunpack.c.h.b16 %v1368
    %v1560 = vunpack.c.l.b16 %v1369
    %v1561 = vunpack.c.h.b16 %v1369
    %v1562 = vunpack.c.l.b16 %v1370
    %v1563 = vunpack.c.h.b16 %v1370
    %v1564 = vunpack.c.l.b16 %v1371
    %v1565 = vunpack.c.h.b16 %v1371
    %v1566 = vunpack.c.l.b16 %v1372
    %v1567 = vunpack.c.h.b16 %v1372
    %v1568 = vunpack.c.l.b16 %v1373
    %v1569 = vunpack.c.h.b16 %v1373
    %v1570 = vunpack.c.l.b16 %v1374
    %v1571 = vunpack.c.h.b16 %v1374
    %v1572 = vunpack.c.l.b16 %v1375
    %v1573 = vunpack.c.h.b16 %v1375
    %v1574 = vunpack.c.l.b16 %v1376
    %v1575 = vunpack.c.h.b16 %v1376
    %v1576 = vunpack.c.l.b16 %v1377
    %v1577 = vunpack.c.h.b16 %v1377
    %v1578 = vunpack.c.l.b16 %v1378
    %v1579 = vunpack.c.h.b16 %v1378
    %v1580 = vunpack.c.l.b16 %v1379
    %v1581 = vunpack.c.h.b16 %v1379
    %v1582 = vunpack.c.l.b16 %v1380
    %v1583 = vunpack.c.h.b16 %v1380
    %v1584 = vunpack.c.l.b16 %v1381
    %v1585 = vunpack.c.h.b16 %v1381
    %v1586 = vpack.c.b16 %v1460, %v1458
    %v1587 = vpack.c.b16 %v1461, %v1459
    %v1588 = vpack.c.b16 %v1464, %v1462
    %v1589 = vpack.c.b16 %v1465, %v1463
    %v1590 = vpack.c.b16 %v1468, %v1466
    %v1591 = vpack.c.b16 %v1469, %v1467
    %v1592 = vpack.c.b16 %v1472, %v1470
    %v1593 = vpack.c.b16 %v1473, %v1471
    %v1594 = vpack.c.b16 %v1476, %v1474
    %v1595 = vpack.c.b16 %v1477, %v1475
    %v1596 = vpack.c.b16 %v1480, %v1478
    %v1597 = vpack.c.b16 %v1481, %v1479
    %v1598 = vpack.c.b16 %v1484, %v1482
    %v1599 = vpack.c.b16 %v1485, %v1483
    %v1600 = vpack.c.b16 %v1488, %v1486
    %v1601 = vpack.c.b16 %v1489, %v1487
    %v1602 = vpack.c.b16 %v1492, %v1490
    %v1603 = vpack.c.b16 %v1493, %v1491
    %v1604 = vpack.c.b16 %v1496, %v1494
    %v1605 = vpack.c.b16 %v1497, %v1495
    %v1606 = vpack.c.b16 %v1500, %v1498
    %v1607 = vpack.c.b16 %v1501, %v1499
    %v1608 = vpack.c.b16 %v1504, %v1502
    %v1609 = vpack.c.b16 %v1505, %v1503
    %v1610 = vpack.c.b16 %v1508, %v1506
    %v1611 = vpack.c.b16 %v1509, %v1507
    %v1612 = vpack.c.b16 %v1512, %v1510
    %v1613 = vpack.c.b16 %v1513, %v1511
    %v1614 = vpack.c.b16 %v1516, %v1514
    %v1615 = vpack.c.b16 %v1517, %v1515
    %v1616 = vpack.c.b16 %v1520, %v1518
    %v1617 = vpack.c.b16 %v1521, %v1519
    %v1618 = vpack.c.b16 %v1524, %v1522
    %v1619 = vpack.c.b16 %v1525, %v1523
    %v1620 = vpack.c.b16 %v1528, %v1526
    %v1621 = vpack.c.b16 %v1529, %v1527
    %v1622 = vpack.c.b16 %v1532, %v1530
    %v1623 = vpack.c.b16 %v1533, %v1531
    %v1624 = vpack.c.b16 %v1536, %v1534
    %v1625 = vpack.c.b16 %v1537, %v1535
    %v1626 = vpack.c.b16 %v1540, %v1538
    %v1627 = vpack.c.b16 %v1541, %v1539
    %v1628 = vpack.c.b16 %v1544, %v1542
    %v1629 = vpack.c.b16 %v1545, %v1543
    %v1630 = vpack.c.b16 %v1548, %v1546
    %v1631 = vpack.c.b16 %v1549, %v1547
    %v1632 = vpack.c.b16 %v1552, %v1550
    %v1633 = vpack.c.b16 %v1553, %v1551
    %v1634 = vpack.c.b16 %v1556, %v1554
    %v1635 = vpack.c.b16 %v1557, %v1555
    %v1636 = vpack.c.b16 %v1560, %v1558
    %v1637 = vpack.c.b16 %v1561, %v1559
    %v1638 = vpack.c.b16 %v1564, %v1562
    %v1639 = vpack.c.b16 %v1565, %v1563
    %v1640 = vpack.c.b16 %v1568, %v1566
    %v1641 = vpack.c.b16 %v1569, %v1567
    %v1642 = vpack.c.b16 %v1572, %v1570
    %v1643 = vpack.c.b16 %v1573, %v1571
    %v1644 = vpack.c.b16 %v1576, %v1574
    %v1645 = vpack.c.b16 %v1577, %v1575
    %v1646 = vpack.c.b16 %v1580, %v1578
    %v1647 = vpack.c.b16 %v1581, %v1579
    %v1648 = vpack.c.b16 %v1584, %v1582
    %v1649 = vpack.c.b16 %v1585, %v1583
    %1714 = vmatprep.subr.bf16.mxu0 %v1587
    %1715 = vmatpush1.bf16.msra.mxu0 %v1586
    %1716 = vmatprep.subr.bf16.mxu0 %v1589
    %1717 = vmatpush1.bf16.msra.mxu0 %v1588
    %1718 = vmatprep.subr.bf16.mxu0 %v1591
    %1719 = vmatpush1.bf16.msra.mxu0 %v1590
    %1720 = vmatprep.subr.bf16.mxu0 %v1593
    %1721 = vmatpush1.bf16.msra.mxu0 %v1592
    %1722 = vmatprep.subr.bf16.mxu0 %v1595
    %1723 = vmatpush1.bf16.msra.mxu0 %v1594
    %1724 = vmatprep.subr.bf16.mxu0 %v1597
    %1725 = vmatpush1.bf16.msra.mxu0 %v1596
    %1726 = vmatprep.subr.bf16.mxu0 %v1599
    %1727 = vmatpush1.bf16.msra.mxu0 %v1598
    %1728 = vmatprep.subr.bf16.mxu0 %v1601
    %1729 = vmatpush1.bf16.msra.mxu0 %v1600
    %1730 = vmatprep.subr.bf16.mxu0 %v1603
    %1731 = vmatpush1.bf16.msra.mxu0 %v1602
    %1732 = vmatprep.subr.bf16.mxu0 %v1605
    %1733 = vmatpush1.bf16.msra.mxu0 %v1604
    %1734 = vmatprep.subr.bf16.mxu0 %v1607
    %1735 = vmatpush1.bf16.msra.mxu0 %v1606
    %1736 = vmatprep.subr.bf16.mxu0 %v1609
    %1737 = vmatpush1.bf16.msra.mxu0 %v1608
    %1738 = vmatprep.subr.bf16.mxu0 %v1611
    %1739 = vmatpush1.bf16.msra.mxu0 %v1610
    %1740 = vmatprep.subr.bf16.mxu0 %v1613
    %1741 = vmatpush1.bf16.msra.mxu0 %v1612
    %1742 = vmatprep.subr.bf16.mxu0 %v1615
    %1743 = vmatpush1.bf16.msra.mxu0 %v1614
    %1744 = vmatprep.subr.bf16.mxu0 %v1617
    %1745 = vmatpush1.bf16.msra.mxu0 %v1616
    %1746 = vmatprep.mubr.bf16.mxu0 %v1315
    %1747 = vmatmul.mubr.bf16.gmra.mrb[0].mxu0 %v1314
    %v1748 = vpop.f32.mrb[0].mxu0
    %v1749 = vadd.f32 %v1387, %v1748
    %v1750 = vpop.f32.mrb[0].mxu0
    %v1751 = vadd.f32 %v1391, %v1750
    %v1752 = vpop.f32.mrb[0].mxu0
    %v1753 = vpop.f32.mrb[0].mxu0
    %1754 = vdwg.mxu0
    %1755 = vmatprep.subr.bf16.mxu0 %v1619
    %1756 = vmatpush1.bf16.msra.mxu0 %v1618
    %1757 = vmatprep.subr.bf16.mxu0 %v1621
    %1758 = vmatpush1.bf16.msra.mxu0 %v1620
    %1759 = vmatprep.subr.bf16.mxu0 %v1623
    %1760 = vmatpush1.bf16.msra.mxu0 %v1622
    %1761 = vmatprep.subr.bf16.mxu0 %v1625
    %1762 = vmatpush1.bf16.msra.mxu0 %v1624
    %1763 = vmatprep.subr.bf16.mxu0 %v1627
    %1764 = vmatpush1.bf16.msra.mxu0 %v1626
    %1765 = vmatprep.subr.bf16.mxu0 %v1629
    %1766 = vmatpush1.bf16.msra.mxu0 %v1628
    %1767 = vmatprep.subr.bf16.mxu0 %v1631
    %1768 = vmatpush1.bf16.msra.mxu0 %v1630
    %1769 = vmatprep.subr.bf16.mxu0 %v1633
    %1770 = vmatpush1.bf16.msra.mxu0 %v1632
    %1771 = vmatprep.subr.bf16.mxu0 %v1635
    %1772 = vmatpush1.bf16.msra.mxu0 %v1634
    %1773 = vmatprep.subr.bf16.mxu0 %v1637
    %1774 = vmatpush1.bf16.msra.mxu0 %v1636
    %1775 = vmatprep.subr.bf16.mxu0 %v1639
    %1776 = vmatpush1.bf16.msra.mxu0 %v1638
    %1777 = vmatprep.subr.bf16.mxu0 %v1641
    %1778 = vmatpush1.bf16.msra.mxu0 %v1640
    %1779 = vmatprep.subr.bf16.mxu0 %v1643
    %1780 = vmatpush1.bf16.msra.mxu0 %v1642
    %1781 = vmatprep.subr.bf16.mxu0 %v1645
    %1782 = vmatpush1.bf16.msra.mxu0 %v1644
    %1783 = vmatprep.subr.bf16.mxu0 %v1647
    %1784 = vmatpush1.bf16.msra.mxu0 %v1646
    %1785 = vmatprep.subr.bf16.mxu0 %v1649
    %1786 = vmatpush1.bf16.msra.mxu0 %v1648
    %1787 = vmatprep.mubr.bf16.mxu0 %v1317
    %1788 = vmatmul.mubr.bf16.gmra.mrb[0].mxu0 %v1316
    %v1789 = vpop.f32.mrb[0].mxu0
    %v1790 = vadd.f32 %v1749, %v1789
    %v1791 = vpop.f32.mrb[0].mxu0
    %v1792 = vadd.f32 %v1751, %v1791
    %v1793 = vpop.f32.mrb[0].mxu0
    %v1794 = vpop.f32.mrb[0].mxu0
    %1795 = vdwg.mxu0
    %v1796 = vmax.f32 %v1790, 0.0
    %v1797 = vmax.f32 %v1792, 0.0
    %v1798 = vpack.c.bf16 %v1796, %v1796
    %v1799 = vpack.c.bf16 %v1797, %v1797
    %v1800 = vld [vmem:[%s9] sm:$0xf]
    %v1801 = vld [vmem:[%s9 + $0x4] sm:$0xf]
    %v1802 = vld [vmem:[%s9 + $0x8] sm:$0xf]
    %v1803 = vld [vmem:[%s9 + $0xc] sm:$0xf]
    %v1804 = vld [vmem:[%s9 + $0x10] sm:$0xf]
    %v1805 = vld [vmem:[%s9 + $0x14] sm:$0xf]
    %v1806 = vld [vmem:[%s9 + $0x18] sm:$0xf]
    %v1807 = vld [vmem:[%s9 + $0x1c] sm:$0xf]
    %v1808 = vld [vmem:[%s9 + $0x20] sm:$0xf]
    %v1809 = vld [vmem:[%s9 + $0x24] sm:$0xf]
    %v1810 = vld [vmem:[%s9 + $0x28] sm:$0xf]
    %v1811 = vld [vmem:[%s9 + $0x2c] sm:$0xf]
    %v1812 = vld [vmem:[%s9 + $0x30] sm:$0xf]
    %v1813 = vld [vmem:[%s9 + $0x34] sm:$0xf]
    %v1814 = vld [vmem:[%s9 + $0x38] sm:$0xf]
    %v1815 = vld [vmem:[%s9 + $0x3c] sm:$0xf]
    %v1816 = vld [vmem:[%s9 + $0x40] sm:$0xf]
    %v1817 = vld [vmem:[%s9 + $0x44] sm:$0xf]
    %v1818 = vld [vmem:[%s9 + $0x48] sm:$0xf]
    %v1819 = vld [vmem:[%s9 + $0x4c] sm:$0xf]
    %v1820 = vld [vmem:[%s9 + $0x50] sm:$0xf]
    %v1821 = vld [vmem:[%s9 + $0x54] sm:$0xf]
    %v1822 = vld [vmem:[%s9 + $0x58] sm:$0xf]
    %v1823 = vld [vmem:[%s9 + $0x5c] sm:$0xf]
    %v1824 = vld [vmem:[%s9 + $0x60] sm:$0xf]
    %v1825 = vld [vmem:[%s9 + $0x64] sm:$0xf]
    %v1826 = vld [vmem:[%s9 + $0x68] sm:$0xf]
    %v1827 = vld [vmem:[%s9 + $0x6c] sm:$0xf]
    %v1828 = vld [vmem:[%s9 + $0x70] sm:$0xf]
    %v1829 = vld [vmem:[%s9 + $0x74] sm:$0xf]
    %v1830 = vld [vmem:[%s9 + $0x78] sm:$0xf]
    %v1831 = vld [vmem:[%s9 + $0x7c] sm:$0xf]
    %v1832 = vld [vmem:[%s10] sm:$0x1]
    %v1834 = vlaneseq
    %v1835 = vshrl.u32 %v1834, 7
    %v1836 = vsub.s32 0, %v1835
    %v1837 = vrot.slane %v1832, %v1836
    %v1871 = vunpack.c.l.b16 %v1800
    %v1872 = vunpack.c.l.b16 %v1801
    %v1873 = vunpack.c.l.b16 %v1802
    %v1874 = vunpack.c.l.b16 %v1803
    %v1875 = vunpack.c.l.b16 %v1804
    %v1876 = vunpack.c.l.b16 %v1805
    %v1877 = vunpack.c.l.b16 %v1806
    %v1878 = vunpack.c.l.b16 %v1807
    %v1879 = vunpack.c.l.b16 %v1808
    %v1880 = vunpack.c.l.b16 %v1809
    %v1881 = vunpack.c.l.b16 %v1810
    %v1882 = vunpack.c.l.b16 %v1811
    %v1883 = vunpack.c.l.b16 %v1812
    %v1884 = vunpack.c.l.b16 %v1813
    %v1885 = vunpack.c.l.b16 %v1814
    %v1886 = vunpack.c.l.b16 %v1815
    %v1887 = vunpack.c.l.b16 %v1816
    %v1888 = vunpack.c.l.b16 %v1817
    %v1889 = vunpack.c.l.b16 %v1818
    %v1890 = vunpack.c.l.b16 %v1819
    %v1891 = vunpack.c.l.b16 %v1820
    %v1892 = vunpack.c.l.b16 %v1821
    %v1893 = vunpack.c.l.b16 %v1822
    %v1894 = vunpack.c.l.b16 %v1823
    %v1895 = vunpack.c.l.b16 %v1824
    %v1896 = vunpack.c.l.b16 %v1825
    %v1897 = vunpack.c.l.b16 %v1826
    %v1898 = vunpack.c.l.b16 %v1827
    %v1899 = vunpack.c.l.b16 %v1828
    %v1900 = vunpack.c.l.b16 %v1829
    %v1901 = vunpack.c.l.b16 %v1830
    %v1902 = vunpack.c.l.b16 %v1831
    %v1903 = vpack.c.b16 %v1872, %v1871
    %v1904 = vpack.c.b16 %v1874, %v1873
    %v1905 = vpack.c.b16 %v1876, %v1875
    %v1906 = vpack.c.b16 %v1878, %v1877
    %v1907 = vpack.c.b16 %v1880, %v1879
    %v1908 = vpack.c.b16 %v1882, %v1881
    %v1909 = vpack.c.b16 %v1884, %v1883
    %v1910 = vpack.c.b16 %v1886, %v1885
    %v1911 = vpack.c.b16 %v1888, %v1887
    %v1912 = vpack.c.b16 %v1890, %v1889
    %v1913 = vpack.c.b16 %v1892, %v1891
    %v1914 = vpack.c.b16 %v1894, %v1893
    %v1915 = vpack.c.b16 %v1896, %v1895
    %v1916 = vpack.c.b16 %v1898, %v1897
    %v1917 = vpack.c.b16 %v1900, %v1899
    %v1918 = vpack.c.b16 %v1902, %v1901
    %1935 = vmatprep.subr.bf16.mxu0 0
    %1936 = vmatpush1.bf16.msra.mxu0 %v1903
    %1937 = vmatprep.subr.bf16.mxu0 0
    %1938 = vmatpush1.bf16.msra.mxu0 %v1904
    %1939 = vmatprep.subr.bf16.mxu0 0
    %1940 = vmatpush1.bf16.msra.mxu0 %v1905
    %1941 = vmatprep.subr.bf16.mxu0 0
    %1942 = vmatpush1.bf16.msra.mxu0 %v1906
    %1943 = vmatprep.subr.bf16.mxu0 0
    %1944 = vmatpush1.bf16.msra.mxu0 %v1907
    %1945 = vmatprep.subr.bf16.mxu0 0
    %1946 = vmatpush1.bf16.msra.mxu0 %v1908
    %1947 = vmatprep.subr.bf16.mxu0 0
    %1948 = vmatpush1.bf16.msra.mxu0 %v1909
    %1949 = vmatprep.subr.bf16.mxu0 0
    %1950 = vmatpush1.bf16.msra.mxu0 %v1910
    %1951 = vmatprep.subr.bf16.mxu0 0
    %1952 = vmatpush1.bf16.msra.mxu0 %v1911
    %1953 = vmatprep.subr.bf16.mxu0 0
    %1954 = vmatpush1.bf16.msra.mxu0 %v1912
    %1955 = vmatprep.subr.bf16.mxu0 0
    %1956 = vmatpush1.bf16.msra.mxu0 %v1913
    %1957 = vmatprep.subr.bf16.mxu0 0
    %1958 = vmatpush1.bf16.msra.mxu0 %v1914
    %1959 = vmatprep.subr.bf16.mxu0 0
    %1960 = vmatpush1.bf16.msra.mxu0 %v1915
    %1961 = vmatprep.subr.bf16.mxu0 0
    %1962 = vmatpush1.bf16.msra.mxu0 %v1916
    %1963 = vmatprep.subr.bf16.mxu0 0
    %1964 = vmatpush1.bf16.msra.mxu0 %v1917
    %1965 = vmatprep.subr.bf16.mxu0 0
    %1966 = vmatpush1.bf16.msra.mxu0 %v1918
    %1967 = vmatprep.mubr.bf16.mxu0 %v1799
    %1968 = vmatmul.mubr.bf16.gmra.mrb[0].mxu0 %v1798
    %v1969 = vpop.f32.mrb[0].mxu0
    %v1970 = vadd.f32 %v1837, %v1969
    %v1971 = vpop.f32.mrb[0].mxu0
    %v1972 = vpop.f32.mrb[0].mxu0
    %v1973 = vpop.f32.mrb[0].mxu0
    %1974 = vdwg.mxu0
    %1975 = vst [vmem:[#allocation2] sm:$0x3] %v1970
    // Predicated region
    $region46: #{_lambda_.5} parent=1 // pred_check
      _
    $region47: #{_lambda_.5} parent=1 // pred_check_branch
      %1977 = sbr.rel (0) target = $region49
    $region48: #{_lambda_.5} parent=1 // pred_region
      %s1979 = ssub.s32 32, 32
      %1980 = vsyncadd [#allocation3], %s1979
      %s1982 = sshll.u32 [#allocation2], 4
      %s1983 = int_to_ptr.vmem [resolvable:$true] %s1982
      %1985 = dma.vmem_to_hbm [thread:$0]  %s1983, 32, %s11, [#allocation3]
    $region49: #{_lambda_.5} parent=1 // pred_fallthru
      _
    // Predicated region
    $region50: #{_lambda_.5} parent=1 // pred_check
      _
    $region51: #{_lambda_.5} parent=1 // pred_check_branch
      %1987 = sbr.rel (0) target = $region53
    $region52: #{_lambda_.5} parent=1 // pred_region
      %1988 = dma.done [#allocation3], 32
    $region53: #{_lambda_.5} parent=1 // pred_fallthru
      _
    %1989 = vsyncpa [#allocation3], 1

</llo_original>
